<compile_context>
chip_gen: v7x
topology: tpu7x:2x2x1
jax: 0.10.0
libtpu: 0.0.40
codegen_flags: <defaults>
</compile_context>

<pallas_src>
import functools
import math

import jax
import jax.numpy as jnp
from jax.experimental import pallas as pl
from jax.experimental.pallas import tpu as pltpu

_BF16 = jnp.bfloat16


def _round_up(x, m):
    return (x + m - 1) // m * m


def _dot(a, b):
    return jnp.dot(a, b, preferred_element_type=jnp.float32)


def _sigmoid(x):
    # 1 / (1 + exp(-x)); exp and approx-reciprocal both use the EUP slot.
    return pl.reciprocal(1.0 + jnp.exp(-x), approx=True)


# ---------------------------------------------------------------------------
# In-kernel building blocks (the set always has exactly 2 items).
# ---------------------------------------------------------------------------
def _mab_stacked(xs_bf, tb, wq, bq, wk, bk, wv, bv, wo, bo, mask, maskT, scale):
    """Set-Transformer MAB(Q=K=[x0,x1]) on a sublane-stacked pair.

    xs_bf: (2*tb, d_in) bf16, rows [item0; item1].  Returns (2*tb, d_V) f32 in
    the same stacked layout.  Single stacked matmul per weight; 2-key softmax
    done with one sigmoid per query item.
    """
    q = _dot(xs_bf, wq) + bq            # (2tb, dV) f32
    k = _dot(xs_bf, wk) + bk
    v = _dot(xs_bf, wv) + bv
    q0, q1 = q[:tb], q[tb:]
    k0, k1 = k[:tb], k[tb:]
    v0, v1 = v[:tb], v[tb:]

    dk = k0 - k1                        # f32 elementwise (no bf16 VALU on v5e)
    dv = v0 - v1

    # per-head logit difference -> softmax weight on key 0 = sigmoid(diff)
    d0 = _dot((q0 * dk).astype(_BF16), mask) * scale      # (tb, H)
    d1 = _dot((q1 * dk).astype(_BF16), mask) * scale
    a0 = _sigmoid(d0)
    a1 = _sigmoid(d1)
    A0 = _dot(a0.astype(_BF16), maskT)                     # (tb, dV), per-head bcast
    A1 = _dot(a1.astype(_BF16), maskT)

    o0 = q0 + v1 + A0 * dv              # == q0 + A0*v0 + (1-A0)*v1
    o1 = q1 + v1 + A1 * dv
    os = jnp.concatenate([o0, o1], axis=0)                 # (2tb, dV)

    # O = O + relu(fc_o(O)), one stacked matmul
    os = os + jnp.maximum(_dot(os.astype(_BF16), wo) + bo, 0.0)
    return os


def _pma_stacked(qs, xs_bf, tb, wk, bk, wv, bv, wo, bo, mask, maskT, scale):
    """PMA with one seed: MAB(Q=S, K=[x0,x1]).  qs = S @ Wq + bq, shape (1, dV)."""
    k = _dot(xs_bf, wk) + bk
    v = _dot(xs_bf, wv) + bv
    k0, k1 = k[:tb], k[tb:]
    v0, v1 = v[:tb], v[tb:]

    d = _dot((qs * (k0 - k1)).astype(_BF16), mask) * scale   # (tb, H)
    a = _sigmoid(d)
    A = _dot(a.astype(_BF16), maskT)                          # (tb, dV)

    o = qs + v1 + A * (v0 - v1)
    o = o + jnp.maximum(_dot(o.astype(_BF16), wo) + bo, 0.0)
    return o


# ---------------------------------------------------------------------------
# Fused forward kernel: one grid step = one batch tile of TB examples.
# ---------------------------------------------------------------------------
def _fused_forward_kernel(
    x0_ref, x1_ref,
    # SAB1: 300 -> 150, 5 heads
    s1wq, s1bq, s1wk, s1bk, s1wv, s1bv, s1wo, s1bo, s1m, s1mt,
    # SAB2: 150 -> 50, 5 heads
    s2wq, s2bq, s2wk, s2bk, s2wv, s2bv, s2wo, s2bo, s2m, s2mt,
    # PMA: dim 50, 2 heads (seed query already projected to (1, 50))
    pqs, pwk, pbk, pwv, pbv, pwo, pbo, pm_, pmt,
    # decoder: Linear(50,300) -> LeakyReLU(0.01) -> Linear(300,600)
    dw1, db1, dw2, db2,
    o_ref,
):
    tb = x0_ref.shape[0]
    # rows [0:tb] = set item 0, rows [tb:2tb] = set item 1 (sublane-aligned)
    xs = jnp.concatenate([x0_ref[...], x1_ref[...]], axis=0)   # (2tb, 300) bf16

    # SAB1
    hs = _mab_stacked(
        xs, tb,
        s1wq[...], s1bq[...], s1wk[...], s1bk[...],
        s1wv[...], s1bv[...], s1wo[...], s1bo[...],
        s1m[...], s1mt[...], 1.0 / math.sqrt(150.0))
    # TODO(synk): nn.Dropout(p=0.1) after SAB1 is identity in eval mode; omitted.

    # SAB2
    hs = _mab_stacked(
        hs.astype(_BF16), tb,
        s2wq[...], s2bq[...], s2wk[...], s2bk[...],
        s2wv[...], s2bv[...], s2wo[...], s2bo[...],
        s2m[...], s2mt[...], 1.0 / math.sqrt(50.0))

    # PMA -> latent z (tb, 50)
    z = _pma_stacked(
        pqs[...], hs.astype(_BF16), tb,
        pwk[...], pbk[...], pwv[...], pbv[...], pwo[...], pbo[...],
        pm_[...], pmt[...], 1.0 / math.sqrt(50.0))

    # decoder
    h = _dot(z.astype(_BF16), dw1[...]) + db1[...]
    h = jnp.maximum(h, 0.01 * h)                     # LeakyReLU default slope
    out = _dot(h.astype(_BF16), dw2[...]) + db2[...]
    o_ref[...] = out.astype(o_ref.dtype)


# ---------------------------------------------------------------------------
# Parameters (deterministic xavier-uniform weights, zero biases) + head masks
# ---------------------------------------------------------------------------
def _linear(key, fan_in, fan_out):
    limit = math.sqrt(6.0 / (fan_in + fan_out))
    w = jax.random.uniform(key, (fan_in, fan_out), jnp.float32, -limit, limit)
    b = jnp.zeros((1, fan_out), jnp.float32)
    return w, b


def _head_masks(dim_V, num_heads):
    dh = dim_V // num_heads
    d = jnp.arange(dim_V)[:, None] // dh          # (dim_V, 1)
    h = jnp.arange(num_heads)[None, :]            # (1, H)
    m = (d == h).astype(jnp.float32)              # (dim_V, H) block-diag 0/1
    return m, m.T


def _mab_params(key, dim_Q, dim_K, dim_V, num_heads):
    k = jax.random.split(key, 4)
    wq, bq = _linear(k[0], dim_Q, dim_V)
    wk, bk = _linear(k[1], dim_K, dim_V)
    wv, bv = _linear(k[2], dim_K, dim_V)
    wo, bo = _linear(k[3], dim_V, dim_V)
    mask, maskT = _head_masks(dim_V, num_heads)
    return dict(wq=wq, bq=bq, wk=wk, bk=bk, wv=wv, bv=bv, wo=wo, bo=bo,
                mask=mask, maskT=maskT)


def init_params(key):
    k = jax.random.split(key, 6)
    params = {
        "sab1": _mab_params(k[0], 300, 300, 150, 5),   # SAB(300 -> 150, heads=5)
        "sab2": _mab_params(k[1], 150, 150, 50, 5),    # SAB(150 ->  50, heads=5)
        "pma":  _mab_params(k[2], 50, 50, 50, 2),      # PMA(dim=50, heads=2)
    }
    limit = math.sqrt(6.0 / (1 + 50))
    params["pma_S"] = jax.random.uniform(k[3], (1, 1, 50), jnp.float32, -limit, limit)
    params["dec1"] = _linear(k[4], 50, 300)
    params["dec2"] = _linear(k[5], 300, 600)
    return params


# ---------------------------------------------------------------------------
# Full forward:  PairsAutoEncoder(x) = decoder(encoder(x))  — one pallas_call,
# with the split/pad/cast prep fused into the same jit.
# ---------------------------------------------------------------------------
@functools.partial(jax.jit, static_argnames=("block_b",))
def pairs_autoencoder_forward(x, params, block_b=512):
    B, feat = x.shape
    assert feat == 600, "PairsAutoEncoder expects pairs of 300-dim vectors"
    # torch.split(x, 300, dim=1) -> stack -> transpose(0,1) == two (B,300) slabs
    x0 = x[:, :300].astype(_BF16)
    x1 = x[:, 300:600].astype(_BF16)

    # Batch tile: multiple of 16 sublanes (bf16 packing).  Cap so large batches
    # get >= 4 grid steps (v7x: 2 TCs shard the "parallel" axis) while keeping
    # tiles big enough to amortize per-step overhead on v5e/v6e.
    TB = min(block_b, max(16, _round_up(-(-B // 4), 16)))
    Bp = _round_up(B, TB)
    if Bp != B:
        x0 = jnp.pad(x0, ((0, Bp - B), (0, 0)))
        x1 = jnp.pad(x1, ((0, Bp - B), (0, 0)))

    s1, s2, pm = params["sab1"], params["sab2"], params["pma"]

    def w16(w):
        return w.astype(_BF16)

    # PMA seed query is batch-independent: fold it outside the kernel, at full
    # f32 precision (matches the PyTorch f32 reference).
    qs = jnp.dot(params["pma_S"].reshape(1, 50), pm["wq"],
                 precision=jax.lax.Precision.HIGHEST) + pm["bq"]   # (1, 50) f32
    dw1, db1 = params["dec1"]
    dw2, db2 = params["dec2"]

    # Matmul operands in bf16; biases (post-accumulation adds) stay f32.
    weights = (
        w16(s1["wq"]), s1["bq"], w16(s1["wk"]), s1["bk"], w16(s1["wv"]), s1["bv"],
        w16(s1["wo"]), s1["bo"], w16(s1["mask"]), w16(s1["maskT"]),
        w16(s2["wq"]), s2["bq"], w16(s2["wk"]), s2["bk"], w16(s2["wv"]), s2["bv"],
        w16(s2["wo"]), s2["bo"], w16(s2["mask"]), w16(s2["maskT"]),
        qs, w16(pm["wk"]), pm["bk"], w16(pm["wv"]), pm["bv"],
        w16(pm["wo"]), pm["bo"], w16(pm["mask"]), w16(pm["maskT"]),
        w16(dw1), db1, w16(dw2), db2,
    )

    out = pl.pallas_call(
        _fused_forward_kernel,
        out_shape=jax.ShapeDtypeStruct((Bp, 600), jnp.float32),
        grid=(Bp // TB,),
        in_specs=[
            pl.BlockSpec((TB, 300), lambda i: (i, 0)),
            pl.BlockSpec((TB, 300), lambda i: (i, 0)),
        ] + [pl.BlockSpec(w.shape, lambda i: (0, 0)) for w in weights],
        out_specs=pl.BlockSpec((TB, 600), lambda i: (i, 0)),
        compiler_params=pltpu.CompilerParams(
            dimension_semantics=("parallel",),      # shard tiles over v7x's 2 TCs
            vmem_limit_bytes=32 * 1024 * 1024,      # right-sized for v7x's 64 MiB
        ),
    )(x0, x1, *weights)

    # TODO(synk): PyTorch's trailing .squeeze() would give (600,) for B == 1;
    # this always returns (B, 600).
    return out[:B]


if __name__ == "__main__":
    key = jax.random.PRNGKey(0)
    k_param, k_x = jax.random.split(key)
    params = init_params(k_param)

    # Input: batch of 2 "pairs" of 300-dim vectors concatenated -> (2, 600)
    x = jax.random.normal(k_x, (2, 600), dtype=jnp.float32)

    out = pairs_autoencoder_forward(x, params)
    out = jax.block_until_ready(out)
    assert out.shape == (2, 600), out.shape
    assert bool(jnp.all(jnp.isfinite(out)))
    print("KERNEL_OK")
</pallas_src>

<mosaic_0001>
module attributes {stable_mosaic.version = 11 : i64} {
  func.func @_fused_forward_kernel(%arg0: i32, %arg1: memref<16x300xbf16, #tpu.memory_space<vmem>>, %arg2: memref<16x300xbf16, #tpu.memory_space<vmem>>, %arg3: memref<300x150xbf16, #tpu.memory_space<vmem>>, %arg4: memref<1x150xf32, #tpu.memory_space<vmem>>, %arg5: memref<300x150xbf16, #tpu.memory_space<vmem>>, %arg6: memref<1x150xf32, #tpu.memory_space<vmem>>, %arg7: memref<300x150xbf16, #tpu.memory_space<vmem>>, %arg8: memref<1x150xf32, #tpu.memory_space<vmem>>, %arg9: memref<150x150xbf16, #tpu.memory_space<vmem>>, %arg10: memref<1x150xf32, #tpu.memory_space<vmem>>, %arg11: memref<150x5xbf16, #tpu.memory_space<vmem>>, %arg12: memref<5x150xbf16, #tpu.memory_space<vmem>>, %arg13: memref<150x50xbf16, #tpu.memory_space<vmem>>, %arg14: memref<1x50xf32, #tpu.memory_space<vmem>>, %arg15: memref<150x50xbf16, #tpu.memory_space<vmem>>, %arg16: memref<1x50xf32, #tpu.memory_space<vmem>>, %arg17: memref<150x50xbf16, #tpu.memory_space<vmem>>, %arg18: memref<1x50xf32, #tpu.memory_space<vmem>>, %arg19: memref<50x50xbf16, #tpu.memory_space<vmem>>, %arg20: memref<1x50xf32, #tpu.memory_space<vmem>>, %arg21: memref<50x5xbf16, #tpu.memory_space<vmem>>, %arg22: memref<5x50xbf16, #tpu.memory_space<vmem>>, %arg23: memref<1x50xf32, #tpu.memory_space<vmem>>, %arg24: memref<50x50xbf16, #tpu.memory_space<vmem>>, %arg25: memref<1x50xf32, #tpu.memory_space<vmem>>, %arg26: memref<50x50xbf16, #tpu.memory_space<vmem>>, %arg27: memref<1x50xf32, #tpu.memory_space<vmem>>, %arg28: memref<50x50xbf16, #tpu.memory_space<vmem>>, %arg29: memref<1x50xf32, #tpu.memory_space<vmem>>, %arg30: memref<50x2xbf16, #tpu.memory_space<vmem>>, %arg31: memref<2x50xbf16, #tpu.memory_space<vmem>>, %arg32: memref<50x300xbf16, #tpu.memory_space<vmem>>, %arg33: memref<1x300xf32, #tpu.memory_space<vmem>>, %arg34: memref<300x600xbf16, #tpu.memory_space<vmem>>, %arg35: memref<1x600xf32, #tpu.memory_space<vmem>>, %arg36: memref<16x600xf32, #tpu.memory_space<vmem>>) attributes {dimension_semantics = [#tpu.dimension_semantics<parallel>], iteration_bounds = array<i64: 1>, scalar_prefetch = 0 : i64, scratch_operands = 0 : i64, tpu.core_type = #tpu.core_type<tc>, window_params = [{transform_indices = @transform_0, window_bounds = array<i64: 16, 300>}, {transform_indices = @transform_1, window_bounds = array<i64: 16, 300>}, {pipeline_mode = #tpu.pipeline_mode<synchronous>, transform_indices = @transform_2, window_bounds = array<i64: 300, 150>}, {pipeline_mode = #tpu.pipeline_mode<synchronous>, transform_indices = @transform_3, window_bounds = array<i64: 1, 150>}, {pipeline_mode = #tpu.pipeline_mode<synchronous>, transform_indices = @transform_4, window_bounds = array<i64: 300, 150>}, {pipeline_mode = #tpu.pipeline_mode<synchronous>, transform_indices = @transform_5, window_bounds = array<i64: 1, 150>}, {pipeline_mode = #tpu.pipeline_mode<synchronous>, transform_indices = @transform_6, window_bounds = array<i64: 300, 150>}, {pipeline_mode = #tpu.pipeline_mode<synchronous>, transform_indices = @transform_7, window_bounds = array<i64: 1, 150>}, {pipeline_mode = #tpu.pipeline_mode<synchronous>, transform_indices = @transform_8, window_bounds = array<i64: 150, 150>}, {pipeline_mode = #tpu.pipeline_mode<synchronous>, transform_indices = @transform_9, window_bounds = array<i64: 1, 150>}, {pipeline_mode = #tpu.pipeline_mode<synchronous>, transform_indices = @transform_10, window_bounds = array<i64: 150, 5>}, {pipeline_mode = #tpu.pipeline_mode<synchronous>, transform_indices = @transform_11, window_bounds = array<i64: 5, 150>}, {pipeline_mode = #tpu.pipeline_mode<synchronous>, transform_indices = @transform_12, window_bounds = array<i64: 150, 50>}, {pipeline_mode = #tpu.pipeline_mode<synchronous>, transform_indices = @transform_13, window_bounds = array<i64: 1, 50>}, {pipeline_mode = #tpu.pipeline_mode<synchronous>, transform_indices = @transform_14, window_bounds = array<i64: 150, 50>}, {pipeline_mode = #tpu.pipeline_mode<synchronous>, transform_indices = @transform_15, window_bounds = array<i64: 1, 50>}, {pipeline_mode = #tpu.pipeline_mode<synchronous>, transform_indices = @transform_16, window_bounds = array<i64: 150, 50>}, {pipeline_mode = #tpu.pipeline_mode<synchronous>, transform_indices = @transform_17, window_bounds = array<i64: 1, 50>}, {pipeline_mode = #tpu.pipeline_mode<synchronous>, transform_indices = @transform_18, window_bounds = array<i64: 50, 50>}, {pipeline_mode = #tpu.pipeline_mode<synchronous>, transform_indices = @transform_19, window_bounds = array<i64: 1, 50>}, {pipeline_mode = #tpu.pipeline_mode<synchronous>, transform_indices = @transform_20, window_bounds = array<i64: 50, 5>}, {pipeline_mode = #tpu.pipeline_mode<synchronous>, transform_indices = @transform_21, window_bounds = array<i64: 5, 50>}, {pipeline_mode = #tpu.pipeline_mode<synchronous>, transform_indices = @transform_22, window_bounds = array<i64: 1, 50>}, {pipeline_mode = #tpu.pipeline_mode<synchronous>, transform_indices = @transform_23, window_bounds = array<i64: 50, 50>}, {pipeline_mode = #tpu.pipeline_mode<synchronous>, transform_indices = @transform_24, window_bounds = array<i64: 1, 50>}, {pipeline_mode = #tpu.pipeline_mode<synchronous>, transform_indices = @transform_25, window_bounds = array<i64: 50, 50>}, {pipeline_mode = #tpu.pipeline_mode<synchronous>, transform_indices = @transform_26, window_bounds = array<i64: 1, 50>}, {pipeline_mode = #tpu.pipeline_mode<synchronous>, transform_indices = @transform_27, window_bounds = array<i64: 50, 50>}, {pipeline_mode = #tpu.pipeline_mode<synchronous>, transform_indices = @transform_28, window_bounds = array<i64: 1, 50>}, {pipeline_mode = #tpu.pipeline_mode<synchronous>, transform_indices = @transform_29, window_bounds = array<i64: 50, 2>}, {pipeline_mode = #tpu.pipeline_mode<synchronous>, transform_indices = @transform_30, window_bounds = array<i64: 2, 50>}, {pipeline_mode = #tpu.pipeline_mode<synchronous>, transform_indices = @transform_31, window_bounds = array<i64: 50, 300>}, {pipeline_mode = #tpu.pipeline_mode<synchronous>, transform_indices = @transform_32, window_bounds = array<i64: 1, 300>}, {pipeline_mode = #tpu.pipeline_mode<synchronous>, transform_indices = @transform_33, window_bounds = array<i64: 300, 600>}, {pipeline_mode = #tpu.pipeline_mode<synchronous>, transform_indices = @transform_34, window_bounds = array<i64: 1, 600>}, {transform_indices = @transform_35, window_bounds = array<i64: 16, 600>}]} {
    %c0 = arith.constant 0 : index
    %c0_0 = arith.constant 0 : index
    %0 = vector.load %arg1[%c0, %c0_0] : memref<16x300xbf16, #tpu.memory_space<vmem>>, vector<16x300xbf16>
    %c0_1 = arith.constant 0 : index
    %c0_2 = arith.constant 0 : index
    %1 = vector.load %arg2[%c0_1, %c0_2] : memref<16x300xbf16, #tpu.memory_space<vmem>>, vector<16x300xbf16>
    %2 = tpu.concatenate %0, %1 in 0 : vector<16x300xbf16>, vector<16x300xbf16> -> vector<32x300xbf16>
    %c0_3 = arith.constant 0 : index
    %c0_4 = arith.constant 0 : index
    %3 = vector.load %arg3[%c0_3, %c0_4] : memref<300x150xbf16, #tpu.memory_space<vmem>>, vector<300x150xbf16>
    %c0_5 = arith.constant 0 : index
    %c0_6 = arith.constant 0 : index
    %4 = vector.load %arg4[%c0_5, %c0_6] : memref<1x150xf32, #tpu.memory_space<vmem>>, vector<1x150xf32>
    %c0_7 = arith.constant 0 : index
    %c0_8 = arith.constant 0 : index
    %5 = vector.load %arg5[%c0_7, %c0_8] : memref<300x150xbf16, #tpu.memory_space<vmem>>, vector<300x150xbf16>
    %c0_9 = arith.constant 0 : index
    %c0_10 = arith.constant 0 : index
    %6 = vector.load %arg6[%c0_9, %c0_10] : memref<1x150xf32, #tpu.memory_space<vmem>>, vector<1x150xf32>
    %c0_11 = arith.constant 0 : index
    %c0_12 = arith.constant 0 : index
    %7 = vector.load %arg7[%c0_11, %c0_12] : memref<300x150xbf16, #tpu.memory_space<vmem>>, vector<300x150xbf16>
    %c0_13 = arith.constant 0 : index
    %c0_14 = arith.constant 0 : index
    %8 = vector.load %arg8[%c0_13, %c0_14] : memref<1x150xf32, #tpu.memory_space<vmem>>, vector<1x150xf32>
    %c0_15 = arith.constant 0 : index
    %c0_16 = arith.constant 0 : index
    %9 = vector.load %arg9[%c0_15, %c0_16] : memref<150x150xbf16, #tpu.memory_space<vmem>>, vector<150x150xbf16>
    %c0_17 = arith.constant 0 : index
    %c0_18 = arith.constant 0 : index
    %10 = vector.load %arg10[%c0_17, %c0_18] : memref<1x150xf32, #tpu.memory_space<vmem>>, vector<1x150xf32>
    %c0_19 = arith.constant 0 : index
    %c0_20 = arith.constant 0 : index
    %11 = vector.load %arg11[%c0_19, %c0_20] : memref<150x5xbf16, #tpu.memory_space<vmem>>, vector<150x5xbf16>
    %c0_21 = arith.constant 0 : index
    %c0_22 = arith.constant 0 : index
    %12 = vector.load %arg12[%c0_21, %c0_22] : memref<5x150xbf16, #tpu.memory_space<vmem>>, vector<5x150xbf16>
    %cst = arith.constant dense<0.000000e+00> : vector<32x150xf32>
    %13 = tpu.matmul %2, %3, %cst {dimension_numbers = #tpu.dot_dimension_numbers<[1], [0], [0], [1], [0, 0, 1, 1], [], []>} : vector<32x300xbf16>, vector<300x150xbf16>, vector<32x150xf32> -> vector<32x150xf32>
    %14 = vector.broadcast %4 : vector<1x150xf32> to vector<32x150xf32>
    %15 = arith.addf %13, %14 : vector<32x150xf32>
    %cst_23 = arith.constant dense<0.000000e+00> : vector<32x150xf32>
    %16 = tpu.matmul %2, %5, %cst_23 {dimension_numbers = #tpu.dot_dimension_numbers<[1], [0], [0], [1], [0, 0, 1, 1], [], []>} : vector<32x300xbf16>, vector<300x150xbf16>, vector<32x150xf32> -> vector<32x150xf32>
    %17 = vector.broadcast %6 : vector<1x150xf32> to vector<32x150xf32>
    %18 = arith.addf %16, %17 : vector<32x150xf32>
    %cst_24 = arith.constant dense<0.000000e+00> : vector<32x150xf32>
    %19 = tpu.matmul %2, %7, %cst_24 {dimension_numbers = #tpu.dot_dimension_numbers<[1], [0], [0], [1], [0, 0, 1, 1], [], []>} : vector<32x300xbf16>, vector<300x150xbf16>, vector<32x150xf32> -> vector<32x150xf32>
    %20 = vector.broadcast %8 : vector<1x150xf32> to vector<32x150xf32>
    %21 = arith.addf %19, %20 : vector<32x150xf32>
    %22 = vector.extract_strided_slice %15 {offsets = [0, 0], sizes = [16, 150], strides = [1, 1]} : vector<32x150xf32> to vector<16x150xf32>
    %23 = vector.extract_strided_slice %15 {offsets = [16, 0], sizes = [16, 150], strides = [1, 1]} : vector<32x150xf32> to vector<16x150xf32>
    %24 = vector.extract_strided_slice %18 {offsets = [0, 0], sizes = [16, 150], strides = [1, 1]} : vector<32x150xf32> to vector<16x150xf32>
    %25 = vector.extract_strided_slice %18 {offsets = [16, 0], sizes = [16, 150], strides = [1, 1]} : vector<32x150xf32> to vector<16x150xf32>
    %26 = vector.extract_strided_slice %21 {offsets = [0, 0], sizes = [16, 150], strides = [1, 1]} : vector<32x150xf32> to vector<16x150xf32>
    %27 = vector.extract_strided_slice %21 {offsets = [16, 0], sizes = [16, 150], strides = [1, 1]} : vector<32x150xf32> to vector<16x150xf32>
    %28 = arith.subf %24, %25 : vector<16x150xf32>
    %29 = arith.subf %26, %27 : vector<16x150xf32>
    %30 = arith.mulf %22, %28 : vector<16x150xf32>
    %31 = arith.truncf %30 : vector<16x150xf32> to vector<16x150xbf16>
    %cst_25 = arith.constant dense<0.000000e+00> : vector<16x5xf32>
    %32 = tpu.matmul %31, %11, %cst_25 {dimension_numbers = #tpu.dot_dimension_numbers<[1], [0], [0], [1], [0, 0, 1, 1], [], []>} : vector<16x150xbf16>, vector<150x5xbf16>, vector<16x5xf32> -> vector<16x5xf32>
    %cst_26 = arith.constant 0.0816496611 : f32
    %33 = vector.broadcast %cst_26 : f32 to vector<16x5xf32>
    %34 = arith.mulf %32, %33 : vector<16x5xf32>
    %35 = arith.mulf %23, %28 : vector<16x150xf32>
    %36 = arith.truncf %35 : vector<16x150xf32> to vector<16x150xbf16>
    %cst_27 = arith.constant dense<0.000000e+00> : vector<16x5xf32>
    %37 = tpu.matmul %36, %11, %cst_27 {dimension_numbers = #tpu.dot_dimension_numbers<[1], [0], [0], [1], [0, 0, 1, 1], [], []>} : vector<16x150xbf16>, vector<150x5xbf16>, vector<16x5xf32> -> vector<16x5xf32>
    %cst_28 = arith.constant 0.0816496611 : f32
    %38 = vector.broadcast %cst_28 : f32 to vector<16x5xf32>
    %39 = arith.mulf %37, %38 : vector<16x5xf32>
    %cst_29 = arith.constant 0.000000e+00 : f32
    %40 = vector.broadcast %cst_29 : f32 to vector<16x5xf32>
    %41 = arith.subf %40, %34 : vector<16x5xf32>
    %42 = math.exp %41 : vector<16x5xf32>
    %cst_30 = arith.constant 1.000000e+00 : f32
    %43 = vector.broadcast %cst_30 : f32 to vector<16x5xf32>
    %44 = arith.addf %43, %42 : vector<16x5xf32>
    %45 = tpu.reciprocal %44 {approx = true} : vector<16x5xf32> -> vector<16x5xf32>
    %cst_31 = arith.constant 0.000000e+00 : f32
    %46 = vector.broadcast %cst_31 : f32 to vector<16x5xf32>
    %47 = arith.subf %46, %39 : vector<16x5xf32>
    %48 = math.exp %47 : vector<16x5xf32>
    %cst_32 = arith.constant 1.000000e+00 : f32
    %49 = vector.broadcast %cst_32 : f32 to vector<16x5xf32>
    %50 = arith.addf %49, %48 : vector<16x5xf32>
    %51 = tpu.reciprocal %50 {approx = true} : vector<16x5xf32> -> vector<16x5xf32>
    %52 = arith.truncf %45 : vector<16x5xf32> to vector<16x5xbf16>
    %cst_33 = arith.constant dense<0.000000e+00> : vector<16x150xf32>
    %53 = tpu.matmul %52, %12, %cst_33 {dimension_numbers = #tpu.dot_dimension_numbers<[1], [0], [0], [1], [0, 0, 1, 1], [], []>} : vector<16x5xbf16>, vector<5x150xbf16>, vector<16x150xf32> -> vector<16x150xf32>
    %54 = arith.truncf %51 : vector<16x5xf32> to vector<16x5xbf16>
    %cst_34 = arith.constant dense<0.000000e+00> : vector<16x150xf32>
    %55 = tpu.matmul %54, %12, %cst_34 {dimension_numbers = #tpu.dot_dimension_numbers<[1], [0], [0], [1], [0, 0, 1, 1], [], []>} : vector<16x5xbf16>, vector<5x150xbf16>, vector<16x150xf32> -> vector<16x150xf32>
    %56 = arith.addf %22, %27 : vector<16x150xf32>
    %57 = arith.mulf %53, %29 : vector<16x150xf32>
    %58 = arith.addf %56, %57 : vector<16x150xf32>
    %59 = arith.addf %23, %27 : vector<16x150xf32>
    %60 = arith.mulf %55, %29 : vector<16x150xf32>
    %61 = arith.addf %59, %60 : vector<16x150xf32>
    %62 = tpu.concatenate %58, %61 in 0 : vector<16x150xf32>, vector<16x150xf32> -> vector<32x150xf32>
    %63 = arith.truncf %62 : vector<32x150xf32> to vector<32x150xbf16>
    %cst_35 = arith.constant dense<0.000000e+00> : vector<32x150xf32>
    %64 = tpu.matmul %63, %9, %cst_35 {dimension_numbers = #tpu.dot_dimension_numbers<[1], [0], [0], [1], [0, 0, 1, 1], [], []>} : vector<32x150xbf16>, vector<150x150xbf16>, vector<32x150xf32> -> vector<32x150xf32>
    %65 = vector.broadcast %10 : vector<1x150xf32> to vector<32x150xf32>
    %66 = arith.addf %64, %65 : vector<32x150xf32>
    %cst_36 = arith.constant 0.000000e+00 : f32
    %67 = vector.broadcast %cst_36 : f32 to vector<32x150xf32>
    %68 = arith.maximumf %66, %67 : vector<32x150xf32>
    %69 = arith.addf %62, %68 : vector<32x150xf32>
    %70 = arith.truncf %69 : vector<32x150xf32> to vector<32x150xbf16>
    %c0_37 = arith.constant 0 : index
    %c0_38 = arith.constant 0 : index
    %71 = vector.load %arg13[%c0_37, %c0_38] : memref<150x50xbf16, #tpu.memory_space<vmem>>, vector<150x50xbf16>
    %c0_39 = arith.constant 0 : index
    %c0_40 = arith.constant 0 : index
    %72 = vector.load %arg14[%c0_39, %c0_40] : memref<1x50xf32, #tpu.memory_space<vmem>>, vector<1x50xf32>
    %c0_41 = arith.constant 0 : index
    %c0_42 = arith.constant 0 : index
    %73 = vector.load %arg15[%c0_41, %c0_42] : memref<150x50xbf16, #tpu.memory_space<vmem>>, vector<150x50xbf16>
    %c0_43 = arith.constant 0 : index
    %c0_44 = arith.constant 0 : index
    %74 = vector.load %arg16[%c0_43, %c0_44] : memref<1x50xf32, #tpu.memory_space<vmem>>, vector<1x50xf32>
    %c0_45 = arith.constant 0 : index
    %c0_46 = arith.constant 0 : index
    %75 = vector.load %arg17[%c0_45, %c0_46] : memref<150x50xbf16, #tpu.memory_space<vmem>>, vector<150x50xbf16>
    %c0_47 = arith.constant 0 : index
    %c0_48 = arith.constant 0 : index
    %76 = vector.load %arg18[%c0_47, %c0_48] : memref<1x50xf32, #tpu.memory_space<vmem>>, vector<1x50xf32>
    %c0_49 = arith.constant 0 : index
    %c0_50 = arith.constant 0 : index
    %77 = vector.load %arg19[%c0_49, %c0_50] : memref<50x50xbf16, #tpu.memory_space<vmem>>, vector<50x50xbf16>
    %c0_51 = arith.constant 0 : index
    %c0_52 = arith.constant 0 : index
    %78 = vector.load %arg20[%c0_51, %c0_52] : memref<1x50xf32, #tpu.memory_space<vmem>>, vector<1x50xf32>
    %c0_53 = arith.constant 0 : index
    %c0_54 = arith.constant 0 : index
    %79 = vector.load %arg21[%c0_53, %c0_54] : memref<50x5xbf16, #tpu.memory_space<vmem>>, vector<50x5xbf16>
    %c0_55 = arith.constant 0 : index
    %c0_56 = arith.constant 0 : index
    %80 = vector.load %arg22[%c0_55, %c0_56] : memref<5x50xbf16, #tpu.memory_space<vmem>>, vector<5x50xbf16>
    %cst_57 = arith.constant dense<0.000000e+00> : vector<32x50xf32>
    %81 = tpu.matmul %70, %71, %cst_57 {dimension_numbers = #tpu.dot_dimension_numbers<[1], [0], [0], [1], [0, 0, 1, 1], [], []>} : vector<32x150xbf16>, vector<150x50xbf16>, vector<32x50xf32> -> vector<32x50xf32>
    %82 = vector.broadcast %72 : vector<1x50xf32> to vector<32x50xf32>
    %83 = arith.addf %81, %82 : vector<32x50xf32>
    %cst_58 = arith.constant dense<0.000000e+00> : vector<32x50xf32>
    %84 = tpu.matmul %70, %73, %cst_58 {dimension_numbers = #tpu.dot_dimension_numbers<[1], [0], [0], [1], [0, 0, 1, 1], [], []>} : vector<32x150xbf16>, vector<150x50xbf16>, vector<32x50xf32> -> vector<32x50xf32>
    %85 = vector.broadcast %74 : vector<1x50xf32> to vector<32x50xf32>
    %86 = arith.addf %84, %85 : vector<32x50xf32>
    %cst_59 = arith.constant dense<0.000000e+00> : vector<32x50xf32>
    %87 = tpu.matmul %70, %75, %cst_59 {dimension_numbers = #tpu.dot_dimension_numbers<[1], [0], [0], [1], [0, 0, 1, 1], [], []>} : vector<32x150xbf16>, vector<150x50xbf16>, vector<32x50xf32> -> vector<32x50xf32>
    %88 = vector.broadcast %76 : vector<1x50xf32> to vector<32x50xf32>
    %89 = arith.addf %87, %88 : vector<32x50xf32>
    %90 = vector.extract_strided_slice %83 {offsets = [0, 0], sizes = [16, 50], strides = [1, 1]} : vector<32x50xf32> to vector<16x50xf32>
    %91 = vector.extract_strided_slice %83 {offsets = [16, 0], sizes = [16, 50], strides = [1, 1]} : vector<32x50xf32> to vector<16x50xf32>
    %92 = vector.extract_strided_slice %86 {offsets = [0, 0], sizes = [16, 50], strides = [1, 1]} : vector<32x50xf32> to vector<16x50xf32>
    %93 = vector.extract_strided_slice %86 {offsets = [16, 0], sizes = [16, 50], strides = [1, 1]} : vector<32x50xf32> to vector<16x50xf32>
    %94 = vector.extract_strided_slice %89 {offsets = [0, 0], sizes = [16, 50], strides = [1, 1]} : vector<32x50xf32> to vector<16x50xf32>
    %95 = vector.extract_strided_slice %89 {offsets = [16, 0], sizes = [16, 50], strides = [1, 1]} : vector<32x50xf32> to vector<16x50xf32>
    %96 = arith.subf %92, %93 : vector<16x50xf32>
    %97 = arith.subf %94, %95 : vector<16x50xf32>
    %98 = arith.mulf %90, %96 : vector<16x50xf32>
    %99 = arith.truncf %98 : vector<16x50xf32> to vector<16x50xbf16>
    %cst_60 = arith.constant dense<0.000000e+00> : vector<16x5xf32>
    %100 = tpu.matmul %99, %79, %cst_60 {dimension_numbers = #tpu.dot_dimension_numbers<[1], [0], [0], [1], [0, 0, 1, 1], [], []>} : vector<16x50xbf16>, vector<50x5xbf16>, vector<16x5xf32> -> vector<16x5xf32>
    %cst_61 = arith.constant 0.141421363 : f32
    %101 = vector.broadcast %cst_61 : f32 to vector<16x5xf32>
    %102 = arith.mulf %100, %101 : vector<16x5xf32>
    %103 = arith.mulf %91, %96 : vector<16x50xf32>
    %104 = arith.truncf %103 : vector<16x50xf32> to vector<16x50xbf16>
    %cst_62 = arith.constant dense<0.000000e+00> : vector<16x5xf32>
    %105 = tpu.matmul %104, %79, %cst_62 {dimension_numbers = #tpu.dot_dimension_numbers<[1], [0], [0], [1], [0, 0, 1, 1], [], []>} : vector<16x50xbf16>, vector<50x5xbf16>, vector<16x5xf32> -> vector<16x5xf32>
    %cst_63 = arith.constant 0.141421363 : f32
    %106 = vector.broadcast %cst_63 : f32 to vector<16x5xf32>
    %107 = arith.mulf %105, %106 : vector<16x5xf32>
    %cst_64 = arith.constant 0.000000e+00 : f32
    %108 = vector.broadcast %cst_64 : f32 to vector<16x5xf32>
    %109 = arith.subf %108, %102 : vector<16x5xf32>
    %110 = math.exp %109 : vector<16x5xf32>
    %cst_65 = arith.constant 1.000000e+00 : f32
    %111 = vector.broadcast %cst_65 : f32 to vector<16x5xf32>
    %112 = arith.addf %111, %110 : vector<16x5xf32>
    %113 = tpu.reciprocal %112 {approx = true} : vector<16x5xf32> -> vector<16x5xf32>
    %cst_66 = arith.constant 0.000000e+00 : f32
    %114 = vector.broadcast %cst_66 : f32 to vector<16x5xf32>
    %115 = arith.subf %114, %107 : vector<16x5xf32>
    %116 = math.exp %115 : vector<16x5xf32>
    %cst_67 = arith.constant 1.000000e+00 : f32
    %117 = vector.broadcast %cst_67 : f32 to vector<16x5xf32>
    %118 = arith.addf %117, %116 : vector<16x5xf32>
    %119 = tpu.reciprocal %118 {approx = true} : vector<16x5xf32> -> vector<16x5xf32>
    %120 = arith.truncf %113 : vector<16x5xf32> to vector<16x5xbf16>
    %cst_68 = arith.constant dense<0.000000e+00> : vector<16x50xf32>
    %121 = tpu.matmul %120, %80, %cst_68 {dimension_numbers = #tpu.dot_dimension_numbers<[1], [0], [0], [1], [0, 0, 1, 1], [], []>} : vector<16x5xbf16>, vector<5x50xbf16>, vector<16x50xf32> -> vector<16x50xf32>
    %122 = arith.truncf %119 : vector<16x5xf32> to vector<16x5xbf16>
    %cst_69 = arith.constant dense<0.000000e+00> : vector<16x50xf32>
    %123 = tpu.matmul %122, %80, %cst_69 {dimension_numbers = #tpu.dot_dimension_numbers<[1], [0], [0], [1], [0, 0, 1, 1], [], []>} : vector<16x5xbf16>, vector<5x50xbf16>, vector<16x50xf32> -> vector<16x50xf32>
    %124 = arith.addf %90, %95 : vector<16x50xf32>
    %125 = arith.mulf %121, %97 : vector<16x50xf32>
    %126 = arith.addf %124, %125 : vector<16x50xf32>
    %127 = arith.addf %91, %95 : vector<16x50xf32>
    %128 = arith.mulf %123, %97 : vector<16x50xf32>
    %129 = arith.addf %127, %128 : vector<16x50xf32>
    %130 = tpu.concatenate %126, %129 in 0 : vector<16x50xf32>, vector<16x50xf32> -> vector<32x50xf32>
    %131 = arith.truncf %130 : vector<32x50xf32> to vector<32x50xbf16>
    %cst_70 = arith.constant dense<0.000000e+00> : vector<32x50xf32>
    %132 = tpu.matmul %131, %77, %cst_70 {dimension_numbers = #tpu.dot_dimension_numbers<[1], [0], [0], [1], [0, 0, 1, 1], [], []>} : vector<32x50xbf16>, vector<50x50xbf16>, vector<32x50xf32> -> vector<32x50xf32>
    %133 = vector.broadcast %78 : vector<1x50xf32> to vector<32x50xf32>
    %134 = arith.addf %132, %133 : vector<32x50xf32>
    %cst_71 = arith.constant 0.000000e+00 : f32
    %135 = vector.broadcast %cst_71 : f32 to vector<32x50xf32>
    %136 = arith.maximumf %134, %135 : vector<32x50xf32>
    %137 = arith.addf %130, %136 : vector<32x50xf32>
    %c0_72 = arith.constant 0 : index
    %c0_73 = arith.constant 0 : index
    %138 = vector.load %arg23[%c0_72, %c0_73] : memref<1x50xf32, #tpu.memory_space<vmem>>, vector<1x50xf32>
    %139 = arith.truncf %137 : vector<32x50xf32> to vector<32x50xbf16>
    %c0_74 = arith.constant 0 : index
    %c0_75 = arith.constant 0 : index
    %140 = vector.load %arg24[%c0_74, %c0_75] : memref<50x50xbf16, #tpu.memory_space<vmem>>, vector<50x50xbf16>
    %c0_76 = arith.constant 0 : index
    %c0_77 = arith.constant 0 : index
    %141 = vector.load %arg25[%c0_76, %c0_77] : memref<1x50xf32, #tpu.memory_space<vmem>>, vector<1x50xf32>
    %c0_78 = arith.constant 0 : index
    %c0_79 = arith.constant 0 : index
    %142 = vector.load %arg26[%c0_78, %c0_79] : memref<50x50xbf16, #tpu.memory_space<vmem>>, vector<50x50xbf16>
    %c0_80 = arith.constant 0 : index
    %c0_81 = arith.constant 0 : index
    %143 = vector.load %arg27[%c0_80, %c0_81] : memref<1x50xf32, #tpu.memory_space<vmem>>, vector<1x50xf32>
    %c0_82 = arith.constant 0 : index
    %c0_83 = arith.constant 0 : index
    %144 = vector.load %arg28[%c0_82, %c0_83] : memref<50x50xbf16, #tpu.memory_space<vmem>>, vector<50x50xbf16>
    %c0_84 = arith.constant 0 : index
    %c0_85 = arith.constant 0 : index
    %145 = vector.load %arg29[%c0_84, %c0_85] : memref<1x50xf32, #tpu.memory_space<vmem>>, vector<1x50xf32>
    %c0_86 = arith.constant 0 : index
    %c0_87 = arith.constant 0 : index
    %146 = vector.load %arg30[%c0_86, %c0_87] : memref<50x2xbf16, #tpu.memory_space<vmem>>, vector<50x2xbf16>
    %c0_88 = arith.constant 0 : index
    %c0_89 = arith.constant 0 : index
    %147 = vector.load %arg31[%c0_88, %c0_89] : memref<2x50xbf16, #tpu.memory_space<vmem>>, vector<2x50xbf16>
    %cst_90 = arith.constant dense<0.000000e+00> : vector<32x50xf32>
    %148 = tpu.matmul %139, %140, %cst_90 {dimension_numbers = #tpu.dot_dimension_numbers<[1], [0], [0], [1], [0, 0, 1, 1], [], []>} : vector<32x50xbf16>, vector<50x50xbf16>, vector<32x50xf32> -> vector<32x50xf32>
    %149 = vector.broadcast %141 : vector<1x50xf32> to vector<32x50xf32>
    %150 = arith.addf %148, %149 : vector<32x50xf32>
    %cst_91 = arith.constant dense<0.000000e+00> : vector<32x50xf32>
    %151 = tpu.matmul %139, %142, %cst_91 {dimension_numbers = #tpu.dot_dimension_numbers<[1], [0], [0], [1], [0, 0, 1, 1], [], []>} : vector<32x50xbf16>, vector<50x50xbf16>, vector<32x50xf32> -> vector<32x50xf32>
    %152 = vector.broadcast %143 : vector<1x50xf32> to vector<32x50xf32>
    %153 = arith.addf %151, %152 : vector<32x50xf32>
    %154 = vector.extract_strided_slice %150 {offsets = [0, 0], sizes = [16, 50], strides = [1, 1]} : vector<32x50xf32> to vector<16x50xf32>
    %155 = vector.extract_strided_slice %150 {offsets = [16, 0], sizes = [16, 50], strides = [1, 1]} : vector<32x50xf32> to vector<16x50xf32>
    %156 = vector.extract_strided_slice %153 {offsets = [0, 0], sizes = [16, 50], strides = [1, 1]} : vector<32x50xf32> to vector<16x50xf32>
    %157 = vector.extract_strided_slice %153 {offsets = [16, 0], sizes = [16, 50], strides = [1, 1]} : vector<32x50xf32> to vector<16x50xf32>
    %158 = arith.subf %154, %155 : vector<16x50xf32>
    %159 = vector.broadcast %138 : vector<1x50xf32> to vector<16x50xf32>
    %160 = arith.mulf %159, %158 : vector<16x50xf32>
    %161 = arith.truncf %160 : vector<16x50xf32> to vector<16x50xbf16>
    %cst_92 = arith.constant dense<0.000000e+00> : vector<16x2xf32>
    %162 = tpu.matmul %161, %146, %cst_92 {dimension_numbers = #tpu.dot_dimension_numbers<[1], [0], [0], [1], [0, 0, 1, 1], [], []>} : vector<16x50xbf16>, vector<50x2xbf16>, vector<16x2xf32> -> vector<16x2xf32>
    %cst_93 = arith.constant 0.141421363 : f32
    %163 = vector.broadcast %cst_93 : f32 to vector<16x2xf32>
    %164 = arith.mulf %162, %163 : vector<16x2xf32>
    %cst_94 = arith.constant 0.000000e+00 : f32
    %165 = vector.broadcast %cst_94 : f32 to vector<16x2xf32>
    %166 = arith.subf %165, %164 : vector<16x2xf32>
    %167 = math.exp %166 : vector<16x2xf32>
    %cst_95 = arith.constant 1.000000e+00 : f32
    %168 = vector.broadcast %cst_95 : f32 to vector<16x2xf32>
    %169 = arith.addf %168, %167 : vector<16x2xf32>
    %170 = tpu.reciprocal %169 {approx = true} : vector<16x2xf32> -> vector<16x2xf32>
    %171 = arith.truncf %170 : vector<16x2xf32> to vector<16x2xbf16>
    %cst_96 = arith.constant dense<0.000000e+00> : vector<16x50xf32>
    %172 = tpu.matmul %171, %147, %cst_96 {dimension_numbers = #tpu.dot_dimension_numbers<[1], [0], [0], [1], [0, 0, 1, 1], [], []>} : vector<16x2xbf16>, vector<2x50xbf16>, vector<16x50xf32> -> vector<16x50xf32>
    %173 = vector.broadcast %138 : vector<1x50xf32> to vector<16x50xf32>
    %174 = arith.addf %173, %157 : vector<16x50xf32>
    %175 = arith.subf %156, %157 : vector<16x50xf32>
    %176 = arith.mulf %172, %175 : vector<16x50xf32>
    %177 = arith.addf %174, %176 : vector<16x50xf32>
    %178 = arith.truncf %177 : vector<16x50xf32> to vector<16x50xbf16>
    %cst_97 = arith.constant dense<0.000000e+00> : vector<16x50xf32>
    %179 = tpu.matmul %178, %144, %cst_97 {dimension_numbers = #tpu.dot_dimension_numbers<[1], [0], [0], [1], [0, 0, 1, 1], [], []>} : vector<16x50xbf16>, vector<50x50xbf16>, vector<16x50xf32> -> vector<16x50xf32>
    %180 = vector.broadcast %145 : vector<1x50xf32> to vector<16x50xf32>
    %181 = arith.addf %179, %180 : vector<16x50xf32>
    %cst_98 = arith.constant 0.000000e+00 : f32
    %182 = vector.broadcast %cst_98 : f32 to vector<16x50xf32>
    %183 = arith.maximumf %181, %182 : vector<16x50xf32>
    %184 = arith.addf %177, %183 : vector<16x50xf32>
    %185 = arith.truncf %184 : vector<16x50xf32> to vector<16x50xbf16>
    %c0_99 = arith.constant 0 : index
    %c0_100 = arith.constant 0 : index
    %186 = vector.load %arg32[%c0_99, %c0_100] : memref<50x300xbf16, #tpu.memory_space<vmem>>, vector<50x300xbf16>
    %cst_101 = arith.constant dense<0.000000e+00> : vector<16x300xf32>
    %187 = tpu.matmul %185, %186, %cst_101 {dimension_numbers = #tpu.dot_dimension_numbers<[1], [0], [0], [1], [0, 0, 1, 1], [], []>} : vector<16x50xbf16>, vector<50x300xbf16>, vector<16x300xf32> -> vector<16x300xf32>
    %c0_102 = arith.constant 0 : index
    %c0_103 = arith.constant 0 : index
    %188 = vector.load %arg33[%c0_102, %c0_103] : memref<1x300xf32, #tpu.memory_space<vmem>>, vector<1x300xf32>
    %189 = vector.broadcast %188 : vector<1x300xf32> to vector<16x300xf32>
    %190 = arith.addf %187, %189 : vector<16x300xf32>
    %cst_104 = arith.constant 0.00999999977 : f32
    %191 = vector.broadcast %cst_104 : f32 to vector<16x300xf32>
    %192 = arith.mulf %191, %190 : vector<16x300xf32>
    %193 = arith.maximumf %190, %192 : vector<16x300xf32>
    %194 = arith.truncf %193 : vector<16x300xf32> to vector<16x300xbf16>
    %c0_105 = arith.constant 0 : index
    %c0_106 = arith.constant 0 : index
    %195 = vector.load %arg34[%c0_105, %c0_106] : memref<300x600xbf16, #tpu.memory_space<vmem>>, vector<300x600xbf16>
    %cst_107 = arith.constant dense<0.000000e+00> : vector<16x600xf32>
    %196 = tpu.matmul %194, %195, %cst_107 {dimension_numbers = #tpu.dot_dimension_numbers<[1], [0], [0], [1], [0, 0, 1, 1], [], []>} : vector<16x300xbf16>, vector<300x600xbf16>, vector<16x600xf32> -> vector<16x600xf32>
    %c0_108 = arith.constant 0 : index
    %c0_109 = arith.constant 0 : index
    %197 = vector.load %arg35[%c0_108, %c0_109] : memref<1x600xf32, #tpu.memory_space<vmem>>, vector<1x600xf32>
    %198 = vector.broadcast %197 : vector<1x600xf32> to vector<16x600xf32>
    %199 = arith.addf %196, %198 : vector<16x600xf32>
    %c0_110 = arith.constant 0 : index
    %c0_111 = arith.constant 0 : index
    %200 = vector.load %arg36[%c0_110, %c0_111] : memref<16x600xf32, #tpu.memory_space<vmem>>, vector<16x600xf32>
    tpu.vector_store %arg36[%c0_110, %c0_111], %199 {strides = array<i32>} : memref<16x600xf32, #tpu.memory_space<vmem>>, vector<16x600xf32>,
    return
  }
  func.func @transform_0(%arg0: i32) -> (i32, i32) {
    %c0_i32 = arith.constant 0 : i32
    %c0_i32_0 = arith.constant 0 : i32
    return %arg0, %c0_i32 : i32, i32
  }
  func.func @transform_1(%arg0: i32) -> (i32, i32) {
    %c0_i32 = arith.constant 0 : i32
    %c0_i32_0 = arith.constant 0 : i32
    return %arg0, %c0_i32 : i32, i32
  }
  func.func @transform_2(%arg0: i32) -> (i32, i32) {
    %c0_i32 = arith.constant 0 : i32
    %c0_i32_0 = arith.constant 0 : i32
    %c0_i32_1 = arith.constant 0 : i32
    return %c0_i32, %c0_i32_0 : i32, i32
  }
  func.func @transform_3(%arg0: i32) -> (i32, i32) {
    %c0_i32 = arith.constant 0 : i32
    %c0_i32_0 = arith.constant 0 : i32
    %c0_i32_1 = arith.constant 0 : i32
    return %c0_i32, %c0_i32_0 : i32, i32
  }
  func.func @transform_4(%arg0: i32) -> (i32, i32) {
    %c0_i32 = arith.constant 0 : i32
    %c0_i32_0 = arith.constant 0 : i32
    %c0_i32_1 = arith.constant 0 : i32
    return %c0_i32, %c0_i32_0 : i32, i32
  }
  func.func @transform_5(%arg0: i32) -> (i32, i32) {
    %c0_i32 = arith.constant 0 : i32
    %c0_i32_0 = arith.constant 0 : i32
    %c0_i32_1 = arith.constant 0 : i32
    return %c0_i32, %c0_i32_0 : i32, i32
  }
  func.func @transform_6(%arg0: i32) -> (i32, i32) {
    %c0_i32 = arith.constant 0 : i32
    %c0_i32_0 = arith.constant 0 : i32
    %c0_i32_1 = arith.constant 0 : i32
    return %c0_i32, %c0_i32_0 : i32, i32
  }
  func.func @transform_7(%arg0: i32) -> (i32, i32) {
    %c0_i32 = arith.constant 0 : i32
    %c0_i32_0 = arith.constant 0 : i32
    %c0_i32_1 = arith.constant 0 : i32
    return %c0_i32, %c0_i32_0 : i32, i32
  }
  func.func @transform_8(%arg0: i32) -> (i32, i32) {
    %c0_i32 = arith.constant 0 : i32
    %c0_i32_0 = arith.constant 0 : i32
    %c0_i32_1 = arith.constant 0 : i32
    return %c0_i32, %c0_i32_0 : i32, i32
  }
  func.func @transform_9(%arg0: i32) -> (i32, i32) {
    %c0_i32 = arith.constant 0 : i32
    %c0_i32_0 = arith.constant 0 : i32
    %c0_i32_1 = arith.constant 0 : i32
    return %c0_i32, %c0_i32_0 : i32, i32
  }
  func.func @transform_10(%arg0: i32) -> (i32, i32) {
    %c0_i32 = arith.constant 0 : i32
    %c0_i32_0 = arith.constant 0 : i32
    %c0_i32_1 = arith.constant 0 : i32
    return %c0_i32, %c0_i32_0 : i32, i32
  }
  func.func @transform_11(%arg0: i32) -> (i32, i32) {
    %c0_i32 = arith.constant 0 : i32
    %c0_i32_0 = arith.constant 0 : i32
    %c0_i32_1 = arith.constant 0 : i32
    return %c0_i32, %c0_i32_0 : i32, i32
  }
  func.func @transform_12(%arg0: i32) -> (i32, i32) {
    %c0_i32 = arith.constant 0 : i32
    %c0_i32_0 = arith.constant 0 : i32
    %c0_i32_1 = arith.constant 0 : i32
    return %c0_i32, %c0_i32_0 : i32, i32
  }
  func.func @transform_13(%arg0: i32) -> (i32, i32) {
    %c0_i32 = arith.constant 0 : i32
    %c0_i32_0 = arith.constant 0 : i32
    %c0_i32_1 = arith.constant 0 : i32
    return %c0_i32, %c0_i32_0 : i32, i32
  }
  func.func @transform_14(%arg0: i32) -> (i32, i32) {
    %c0_i32 = arith.constant 0 : i32
    %c0_i32_0 = arith.constant 0 : i32
    %c0_i32_1 = arith.constant 0 : i32
    return %c0_i32, %c0_i32_0 : i32, i32
  }
  func.func @transform_15(%arg0: i32) -> (i32, i32) {
    %c0_i32 = arith.constant 0 : i32
    %c0_i32_0 = arith.constant 0 : i32
    %c0_i32_1 = arith.constant 0 : i32
    return %c0_i32, %c0_i32_0 : i32, i32
  }
  func.func @transform_16(%arg0: i32) -> (i32, i32) {
    %c0_i32 = arith.constant 0 : i32
    %c0_i32_0 = arith.constant 0 : i32
    %c0_i32_1 = arith.constant 0 : i32
    return %c0_i32, %c0_i32_0 : i32, i32
  }
  func.func @transform_17(%arg0: i32) -> (i32, i32) {
    %c0_i32 = arith.constant 0 : i32
    %c0_i32_0 = arith.constant 0 : i32
    %c0_i32_1 = arith.constant 0 : i32
    return %c0_i32, %c0_i32_0 : i32, i32
  }
  func.func @transform_18(%arg0: i32) -> (i32, i32) {
    %c0_i32 = arith.constant 0 : i32
    %c0_i32_0 = arith.constant 0 : i32
    %c0_i32_1 = arith.constant 0 : i32
    return %c0_i32, %c0_i32_0 : i32, i32
  }
  func.func @transform_19(%arg0: i32) -> (i32, i32) {
    %c0_i32 = arith.constant 0 : i32
    %c0_i32_0 = arith.constant 0 : i32
    %c0_i32_1 = arith.constant 0 : i32
    return %c0_i32, %c0_i32_0 : i32, i32
  }
  func.func @transform_20(%arg0: i32) -> (i32, i32) {
    %c0_i32 = arith.constant 0 : i32
    %c0_i32_0 = arith.constant 0 : i32
    %c0_i32_1 = arith.constant 0 : i32
    return %c0_i32, %c0_i32_0 : i32, i32
  }
  func.func @transform_21(%arg0: i32) -> (i32, i32) {
    %c0_i32 = arith.constant 0 : i32
    %c0_i32_0 = arith.constant 0 : i32
    %c0_i32_1 = arith.constant 0 : i32
    return %c0_i32, %c0_i32_0 : i32, i32
  }
  func.func @transform_22(%arg0: i32) -> (i32, i32) {
    %c0_i32 = arith.constant 0 : i32
    %c0_i32_0 = arith.constant 0 : i32
    %c0_i32_1 = arith.constant 0 : i32
    return %c0_i32, %c0_i32_0 : i32, i32
  }
  func.func @transform_23(%arg0: i32) -> (i32, i32) {
    %c0_i32 = arith.constant 0 : i32
    %c0_i32_0 = arith.constant 0 : i32
    %c0_i32_1 = arith.constant 0 : i32
    return %c0_i32, %c0_i32_0 : i32, i32
  }
  func.func @transform_24(%arg0: i32) -> (i32, i32) {
    %c0_i32 = arith.constant 0 : i32
    %c0_i32_0 = arith.constant 0 : i32
    %c0_i32_1 = arith.constant 0 : i32
    return %c0_i32, %c0_i32_0 : i32, i32
  }
  func.func @transform_25(%arg0: i32) -> (i32, i32) {
    %c0_i32 = arith.constant 0 : i32
    %c0_i32_0 = arith.constant 0 : i32
    %c0_i32_1 = arith.constant 0 : i32
    return %c0_i32, %c0_i32_0 : i32, i32
  }
  func.func @transform_26(%arg0: i32) -> (i32, i32) {
    %c0_i32 = arith.constant 0 : i32
    %c0_i32_0 = arith.constant 0 : i32
    %c0_i32_1 = arith.constant 0 : i32
    return %c0_i32, %c0_i32_0 : i32, i32
  }
  func.func @transform_27(%arg0: i32) -> (i32, i32) {
    %c0_i32 = arith.constant 0 : i32
    %c0_i32_0 = arith.constant 0 : i32
    %c0_i32_1 = arith.constant 0 : i32
    return %c0_i32, %c0_i32_0 : i32, i32
  }
  func.func @transform_28(%arg0: i32) -> (i32, i32) {
    %c0_i32 = arith.constant 0 : i32
    %c0_i32_0 = arith.constant 0 : i32
    %c0_i32_1 = arith.constant 0 : i32
    return %c0_i32, %c0_i32_0 : i32, i32
  }
  func.func @transform_29(%arg0: i32) -> (i32, i32) {
    %c0_i32 = arith.constant 0 : i32
    %c0_i32_0 = arith.constant 0 : i32
    %c0_i32_1 = arith.constant 0 : i32
    return %c0_i32, %c0_i32_0 : i32, i32
  }
  func.func @transform_30(%arg0: i32) -> (i32, i32) {
    %c0_i32 = arith.constant 0 : i32
    %c0_i32_0 = arith.constant 0 : i32
    %c0_i32_1 = arith.constant 0 : i32
    return %c0_i32, %c0_i32_0 : i32, i32
  }
  func.func @transform_31(%arg0: i32) -> (i32, i32) {
    %c0_i32 = arith.constant 0 : i32
    %c0_i32_0 = arith.constant 0 : i32
    %c0_i32_1 = arith.constant 0 : i32
    return %c0_i32, %c0_i32_0 : i32, i32
  }
  func.func @transform_32(%arg0: i32) -> (i32, i32) {
    %c0_i32 = arith.constant 0 : i32
    %c0_i32_0 = arith.constant 0 : i32
    %c0_i32_1 = arith.constant 0 : i32
    return %c0_i32, %c0_i32_0 : i32, i32
  }
  func.func @transform_33(%arg0: i32) -> (i32, i32) {
    %c0_i32 = arith.constant 0 : i32
    %c0_i32_0 = arith.constant 0 : i32
    %c0_i32_1 = arith.constant 0 : i32
    return %c0_i32, %c0_i32_0 : i32, i32
  }
  func.func @transform_34(%arg0: i32) -> (i32, i32) {
    %c0_i32 = arith.constant 0 : i32
    %c0_i32_0 = arith.constant 0 : i32
    %c0_i32_1 = arith.constant 0 : i32
    return %c0_i32, %c0_i32_0 : i32, i32
  }
  func.func @transform_35(%arg0: i32) -> (i32, i32) {
    %c0_i32 = arith.constant 0 : i32
    %c0_i32_0 = arith.constant 0 : i32
    return %arg0, %c0_i32 : i32, i32
  }
}

</mosaic_0001>

<llo_original>
// kernel: pairs_autoencoder_forward.1
$region0: #{pairs_autoencoder_forward.1}
  #allocation0 [shape = 'u32[]', space=smem, size = 0x4, offset = 0x4, fixed_abs, tag = 'smem constant byte address 0x4 - core index']
  #allocation1 [shape = 'u32[144,128]{1,0:T(1,128)}', space=vmem, size = 0x12000, scoped, tag = 'internal scratch']
  %s0 = inlined_call_operand.smem [shape: u32[36], index: -1, kind: input, shape index: {}]
  %s1 = sld [smem:[%s0]]
  %s2 = scalar_lea.smem %s0, 1
  %s3 = sld [smem:[%s2]]
  %s4 = scalar_lea.smem %s0, 2
  %s5 = sld [smem:[%s4]]
  %s6 = scalar_lea.smem %s0, 3
  %s7 = sld [smem:[%s6]]
  %s8 = scalar_lea.smem %s0, 4
  %s9 = sld [smem:[%s8]]
  %s10 = scalar_lea.smem %s0, 5
  %s11 = sld [smem:[%s10]]
  %s12 = scalar_lea.smem %s0, 6
  %s13 = sld [smem:[%s12]]
  %s14 = scalar_lea.smem %s0, 7
  %s15 = sld [smem:[%s14]]
  %s16 = scalar_lea.smem %s0, 8
  %s17 = sld [smem:[%s16]]
  %s18 = scalar_lea.smem %s0, 9
  %s19 = sld [smem:[%s18]]
  %s20 = scalar_lea.smem %s0, 10
  %s21 = sld [smem:[%s20]]
  %s22 = scalar_lea.smem %s0, 11
  %s23 = sld [smem:[%s22]]
  %s24 = scalar_lea.smem %s0, 12
  %s25 = sld [smem:[%s24]]
  %s26 = scalar_lea.smem %s0, 13
  %s27 = sld [smem:[%s26]]
  %s28 = scalar_lea.smem %s0, 14
  %s29 = sld [smem:[%s28]]
  %s30 = scalar_lea.smem %s0, 15
  %s31 = sld [smem:[%s30]]
  %s32 = scalar_lea.smem %s0, 16
  %s33 = sld [smem:[%s32]]
  %s34 = scalar_lea.smem %s0, 17
  %s35 = sld [smem:[%s34]]
  %s36 = scalar_lea.smem %s0, 18
  %s37 = sld [smem:[%s36]]
  %s38 = scalar_lea.smem %s0, 19
  %s39 = sld [smem:[%s38]]
  %s40 = scalar_lea.smem %s0, 20
  %s41 = sld [smem:[%s40]]
  %s42 = scalar_lea.smem %s0, 21
  %s43 = sld [smem:[%s42]]
  %s44 = scalar_lea.smem %s0, 22
  %s45 = sld [smem:[%s44]]
  %s46 = scalar_lea.smem %s0, 23
  %s47 = sld [smem:[%s46]]
  %s48 = scalar_lea.smem %s0, 24
  %s49 = sld [smem:[%s48]]
  %s50 = scalar_lea.smem %s0, 25
  %s51 = sld [smem:[%s50]]
  %s52 = scalar_lea.smem %s0, 26
  %s53 = sld [smem:[%s52]]
  %s54 = scalar_lea.smem %s0, 27
  %s55 = sld [smem:[%s54]]
  %s56 = scalar_lea.smem %s0, 28
  %s57 = sld [smem:[%s56]]
  %s58 = scalar_lea.smem %s0, 29
  %s59 = sld [smem:[%s58]]
  %s60 = scalar_lea.smem %s0, 30
  %s61 = sld [smem:[%s60]]
  %s62 = scalar_lea.smem %s0, 31
  %s63 = sld [smem:[%s62]]
  %s64 = scalar_lea.smem %s0, 32
  %s65 = sld [smem:[%s64]]
  %s66 = scalar_lea.smem %s0, 33
  %s67 = sld [smem:[%s66]]
  %s68 = scalar_lea.smem %s0, 34
  %s69 = sld [smem:[%s68]]
  %s70 = scalar_lea.smem %s0, 35
  %s71 = sld [smem:[%s70]]
  %s72 = sld [smem:[#allocation0]]
  $region150: #{pairs_autoencoder_forward.1} parent=0
    _
  %s74 = ssub.s32 1, %s72
  %s75 = scalar_select 0, %s74, %s72
  // Predicated region
  $region2: #{pairs_autoencoder_forward.1} parent=0 // pred_check
    _
  $region3: #{pairs_autoencoder_forward.1} parent=0 // pred_check_branch
    %77 = sbr.rel (0) target = $region5
  $region4: #{pairs_autoencoder_forward.1} parent=0 // pred_region
    _
  $region5: #{pairs_autoencoder_forward.1} parent=0 // pred_fallthru
    _
  // Predicated region
  $region6: #{pairs_autoencoder_forward.1} parent=0 // pred_check
    _
  $region7: #{pairs_autoencoder_forward.1} parent=0 // pred_check_branch
    %79 = sbr.rel (0) target = $region9
  $region8: #{pairs_autoencoder_forward.1} parent=0 // pred_region
    _
  $region9: #{pairs_autoencoder_forward.1} parent=0 // pred_fallthru
    _
  // Predicated region
  $region10: #{pairs_autoencoder_forward.1} parent=0 // pred_check
    _
  $region11: #{pairs_autoencoder_forward.1} parent=0 // pred_check_branch
    %81 = sbr.rel (0) target = $region13
  $region12: #{pairs_autoencoder_forward.1} parent=0 // pred_region
    _
  $region13: #{pairs_autoencoder_forward.1} parent=0 // pred_fallthru
    _
  // Predicated region
  $region14: #{pairs_autoencoder_forward.1} parent=0 // pred_check
    _
  $region15: #{pairs_autoencoder_forward.1} parent=0 // pred_check_branch
    %83 = sbr.rel (0) target = $region17
  $region16: #{pairs_autoencoder_forward.1} parent=0 // pred_region
    _
  $region17: #{pairs_autoencoder_forward.1} parent=0 // pred_fallthru
    _
  // Predicated region
  $region18: #{pairs_autoencoder_forward.1} parent=0 // pred_check
    _
  $region19: #{pairs_autoencoder_forward.1} parent=0 // pred_check_branch
    %85 = sbr.rel (0) target = $region21
  $region20: #{pairs_autoencoder_forward.1} parent=0 // pred_region
    _
  $region21: #{pairs_autoencoder_forward.1} parent=0 // pred_fallthru
    _
  // Predicated region
  $region22: #{pairs_autoencoder_forward.1} parent=0 // pred_check
    _
  $region23: #{pairs_autoencoder_forward.1} parent=0 // pred_check_branch
    %87 = sbr.rel (0) target = $region25
  $region24: #{pairs_autoencoder_forward.1} parent=0 // pred_region
    _
  $region25: #{pairs_autoencoder_forward.1} parent=0 // pred_fallthru
    _
  // Predicated region
  $region26: #{pairs_autoencoder_forward.1} parent=0 // pred_check
    _
  $region27: #{pairs_autoencoder_forward.1} parent=0 // pred_check_branch
    %89 = sbr.rel (0) target = $region29
  $region28: #{pairs_autoencoder_forward.1} parent=0 // pred_region
    _
  $region29: #{pairs_autoencoder_forward.1} parent=0 // pred_fallthru
    _
  // Predicated region
  $region30: #{pairs_autoencoder_forward.1} parent=0 // pred_check
    _
  $region31: #{pairs_autoencoder_forward.1} parent=0 // pred_check_branch
    %91 = sbr.rel (0) target = $region33
  $region32: #{pairs_autoencoder_forward.1} parent=0 // pred_region
    _
  $region33: #{pairs_autoencoder_forward.1} parent=0 // pred_fallthru
    _
  // Predicated region
  $region34: #{pairs_autoencoder_forward.1} parent=0 // pred_check
    _
  $region35: #{pairs_autoencoder_forward.1} parent=0 // pred_check_branch
    %93 = sbr.rel (0) target = $region37
  $region36: #{pairs_autoencoder_forward.1} parent=0 // pred_region
    _
  $region37: #{pairs_autoencoder_forward.1} parent=0 // pred_fallthru
    _
  // Predicated region
  $region38: #{pairs_autoencoder_forward.1} parent=0 // pred_check
    _
  $region39: #{pairs_autoencoder_forward.1} parent=0 // pred_check_branch
    %95 = sbr.rel (0) target = $region41
  $region40: #{pairs_autoencoder_forward.1} parent=0 // pred_region
    _
  $region41: #{pairs_autoencoder_forward.1} parent=0 // pred_fallthru
    _
  // Predicated region
  $region42: #{pairs_autoencoder_forward.1} parent=0 // pred_check
    _
  $region43: #{pairs_autoencoder_forward.1} parent=0 // pred_check_branch
    %97 = sbr.rel (0) target = $region45
  $region44: #{pairs_autoencoder_forward.1} parent=0 // pred_region
    _
  $region45: #{pairs_autoencoder_forward.1} parent=0 // pred_fallthru
    _
  // Predicated region
  $region46: #{pairs_autoencoder_forward.1} parent=0 // pred_check
    _
  $region47: #{pairs_autoencoder_forward.1} parent=0 // pred_check_branch
    %99 = sbr.rel (0) target = $region49
  $region48: #{pairs_autoencoder_forward.1} parent=0 // pred_region
    _
  $region49: #{pairs_autoencoder_forward.1} parent=0 // pred_fallthru
    _
  // Predicated region
  $region50: #{pairs_autoencoder_forward.1} parent=0 // pred_check
    _
  $region51: #{pairs_autoencoder_forward.1} parent=0 // pred_check_branch
    %101 = sbr.rel (0) target = $region53
  $region52: #{pairs_autoencoder_forward.1} parent=0 // pred_region
    _
  $region53: #{pairs_autoencoder_forward.1} parent=0 // pred_fallthru
    _
  // Predicated region
  $region54: #{pairs_autoencoder_forward.1} parent=0 // pred_check
    _
  $region55: #{pairs_autoencoder_forward.1} parent=0 // pred_check_branch
    %103 = sbr.rel (0) target = $region57
  $region56: #{pairs_autoencoder_forward.1} parent=0 // pred_region
    _
  $region57: #{pairs_autoencoder_forward.1} parent=0 // pred_fallthru
    _
  // Predicated region
  $region58: #{pairs_autoencoder_forward.1} parent=0 // pred_check
    _
  $region59: #{pairs_autoencoder_forward.1} parent=0 // pred_check_branch
    %105 = sbr.rel (0) target = $region61
  $region60: #{pairs_autoencoder_forward.1} parent=0 // pred_region
    _
  $region61: #{pairs_autoencoder_forward.1} parent=0 // pred_fallthru
    _
  // Predicated region
  $region62: #{pairs_autoencoder_forward.1} parent=0 // pred_check
    _
  $region63: #{pairs_autoencoder_forward.1} parent=0 // pred_check_branch
    %107 = sbr.rel (0) target = $region65
  $region64: #{pairs_autoencoder_forward.1} parent=0 // pred_region
    _
  $region65: #{pairs_autoencoder_forward.1} parent=0 // pred_fallthru
    _
  // Predicated region
  $region66: #{pairs_autoencoder_forward.1} parent=0 // pred_check
    _
  $region67: #{pairs_autoencoder_forward.1} parent=0 // pred_check_branch
    %109 = sbr.rel (0) target = $region69
  $region68: #{pairs_autoencoder_forward.1} parent=0 // pred_region
    _
  $region69: #{pairs_autoencoder_forward.1} parent=0 // pred_fallthru
    _
  // Predicated region
  $region70: #{pairs_autoencoder_forward.1} parent=0 // pred_check
    _
  $region71: #{pairs_autoencoder_forward.1} parent=0 // pred_check_branch
    %111 = sbr.rel (0) target = $region73
  $region72: #{pairs_autoencoder_forward.1} parent=0 // pred_region
    _
  $region73: #{pairs_autoencoder_forward.1} parent=0 // pred_fallthru
    _
  // Predicated region
  $region74: #{pairs_autoencoder_forward.1} parent=0 // pred_check
    _
  $region75: #{pairs_autoencoder_forward.1} parent=0 // pred_check_branch
    %113 = sbr.rel (0) target = $region77
  $region76: #{pairs_autoencoder_forward.1} parent=0 // pred_region
    _
  $region77: #{pairs_autoencoder_forward.1} parent=0 // pred_fallthru
    _
  // Predicated region
  $region78: #{pairs_autoencoder_forward.1} parent=0 // pred_check
    _
  $region79: #{pairs_autoencoder_forward.1} parent=0 // pred_check_branch
    %115 = sbr.rel (0) target = $region81
  $region80: #{pairs_autoencoder_forward.1} parent=0 // pred_region
    _
  $region81: #{pairs_autoencoder_forward.1} parent=0 // pred_fallthru
    _
  // Predicated region
  $region82: #{pairs_autoencoder_forward.1} parent=0 // pred_check
    _
  $region83: #{pairs_autoencoder_forward.1} parent=0 // pred_check_branch
    %117 = sbr.rel (0) target = $region85
  $region84: #{pairs_autoencoder_forward.1} parent=0 // pred_region
    _
  $region85: #{pairs_autoencoder_forward.1} parent=0 // pred_fallthru
    _
  // Predicated region
  $region86: #{pairs_autoencoder_forward.1} parent=0 // pred_check
    _
  $region87: #{pairs_autoencoder_forward.1} parent=0 // pred_check_branch
    %119 = sbr.rel (0) target = $region89
  $region88: #{pairs_autoencoder_forward.1} parent=0 // pred_region
    _
  $region89: #{pairs_autoencoder_forward.1} parent=0 // pred_fallthru
    _
  // Predicated region
  $region90: #{pairs_autoencoder_forward.1} parent=0 // pred_check
    _
  $region91: #{pairs_autoencoder_forward.1} parent=0 // pred_check_branch
    %121 = sbr.rel (0) target = $region93
  $region92: #{pairs_autoencoder_forward.1} parent=0 // pred_region
    _
  $region93: #{pairs_autoencoder_forward.1} parent=0 // pred_fallthru
    _
  // Predicated region
  $region94: #{pairs_autoencoder_forward.1} parent=0 // pred_check
    _
  $region95: #{pairs_autoencoder_forward.1} parent=0 // pred_check_branch
    %123 = sbr.rel (0) target = $region97
  $region96: #{pairs_autoencoder_forward.1} parent=0 // pred_region
    _
  $region97: #{pairs_autoencoder_forward.1} parent=0 // pred_fallthru
    _
  // Predicated region
  $region98: #{pairs_autoencoder_forward.1} parent=0 // pred_check
    _
  $region99: #{pairs_autoencoder_forward.1} parent=0 // pred_check_branch
    %125 = sbr.rel (0) target = $region101
  $region100: #{pairs_autoencoder_forward.1} parent=0 // pred_region
    _
  $region101: #{pairs_autoencoder_forward.1} parent=0 // pred_fallthru
    _
  // Predicated region
  $region102: #{pairs_autoencoder_forward.1} parent=0 // pred_check
    _
  $region103: #{pairs_autoencoder_forward.1} parent=0 // pred_check_branch
    %127 = sbr.rel (0) target = $region105
  $region104: #{pairs_autoencoder_forward.1} parent=0 // pred_region
    _
  $region105: #{pairs_autoencoder_forward.1} parent=0 // pred_fallthru
    _
  // Predicated region
  $region106: #{pairs_autoencoder_forward.1} parent=0 // pred_check
    _
  $region107: #{pairs_autoencoder_forward.1} parent=0 // pred_check_branch
    %129 = sbr.rel (0) target = $region109
  $region108: #{pairs_autoencoder_forward.1} parent=0 // pred_region
    _
  $region109: #{pairs_autoencoder_forward.1} parent=0 // pred_fallthru
    _
  // Predicated region
  $region110: #{pairs_autoencoder_forward.1} parent=0 // pred_check
    _
  $region111: #{pairs_autoencoder_forward.1} parent=0 // pred_check_branch
    %131 = sbr.rel (0) target = $region113
  $region112: #{pairs_autoencoder_forward.1} parent=0 // pred_region
    _
  $region113: #{pairs_autoencoder_forward.1} parent=0 // pred_fallthru
    _
  // Predicated region
  $region114: #{pairs_autoencoder_forward.1} parent=0 // pred_check
    _
  $region115: #{pairs_autoencoder_forward.1} parent=0 // pred_check_branch
    %133 = sbr.rel (0) target = $region117
  $region116: #{pairs_autoencoder_forward.1} parent=0 // pred_region
    _
  $region117: #{pairs_autoencoder_forward.1} parent=0 // pred_fallthru
    _
  // Predicated region
  $region118: #{pairs_autoencoder_forward.1} parent=0 // pred_check
    _
  $region119: #{pairs_autoencoder_forward.1} parent=0 // pred_check_branch
    %135 = sbr.rel (0) target = $region121
  $region120: #{pairs_autoencoder_forward.1} parent=0 // pred_region
    _
  $region121: #{pairs_autoencoder_forward.1} parent=0 // pred_fallthru
    _
  // Predicated region
  $region122: #{pairs_autoencoder_forward.1} parent=0 // pred_check
    _
  $region123: #{pairs_autoencoder_forward.1} parent=0 // pred_check_branch
    %137 = sbr.rel (0) target = $region125
  $region124: #{pairs_autoencoder_forward.1} parent=0 // pred_region
    _
  $region125: #{pairs_autoencoder_forward.1} parent=0 // pred_fallthru
    _
  // Predicated region
  $region126: #{pairs_autoencoder_forward.1} parent=0 // pred_check
    _
  $region127: #{pairs_autoencoder_forward.1} parent=0 // pred_check_branch
    %139 = sbr.rel (0) target = $region129
  $region128: #{pairs_autoencoder_forward.1} parent=0 // pred_region
    _
  $region129: #{pairs_autoencoder_forward.1} parent=0 // pred_fallthru
    _
  // Predicated region
  $region130: #{pairs_autoencoder_forward.1} parent=0 // pred_check
    _
  $region131: #{pairs_autoencoder_forward.1} parent=0 // pred_check_branch
    %141 = sbr.rel (0) target = $region133
  $region132: #{pairs_autoencoder_forward.1} parent=0 // pred_region
    _
  $region133: #{pairs_autoencoder_forward.1} parent=0 // pred_fallthru
    _
  // Predicated region
  $region134: #{pairs_autoencoder_forward.1} parent=0 // pred_check
    _
  $region135: #{pairs_autoencoder_forward.1} parent=0 // pred_check_branch
    %143 = sbr.rel (0) target = $region137
  $region136: #{pairs_autoencoder_forward.1} parent=0 // pred_region
    _
  $region137: #{pairs_autoencoder_forward.1} parent=0 // pred_fallthru
    _
  // Predicated region
  $region138: #{pairs_autoencoder_forward.1} parent=0 // pred_check
    _
  $region139: #{pairs_autoencoder_forward.1} parent=0 // pred_check_branch
    %145 = sbr.rel (0) target = $region141
  $region140: #{pairs_autoencoder_forward.1} parent=0 // pred_region
    _
  $region141: #{pairs_autoencoder_forward.1} parent=0 // pred_fallthru
    _
  %v147 = vld [vmem:[%s1] sm:$0xff]
  %v148 = vld [vmem:[%s1 + $0x8] sm:$0xf]
  %v149 = vld [vmem:[%s1 + $0xc] sm:$0xff]
  %v150 = vld [vmem:[%s1 + $0x14] sm:$0xf]
  %v151 = vld [vmem:[%s3] sm:$0xff]
  %v152 = vld [vmem:[%s3 + $0x8] sm:$0xf]
  %v153 = vld [vmem:[%s3 + $0xc] sm:$0xff]
  %v154 = vld [vmem:[%s3 + $0x14] sm:$0xf]
  %v159 = vunpack.c.l.b16 %v147
  %v160 = vunpack.c.h.b16 %v147
  %v161 = vunpack.c.l.b16 %v148
  %v162 = vunpack.c.l.b16 %v149
  %v163 = vunpack.c.h.b16 %v149
  %v164 = vunpack.c.l.b16 %v150
  %v165 = vpack.c.b16 %v162, %v159
  %v166 = vpack.c.b16 %v163, %v160
  %v167 = vpack.c.b16 %v164, %v161
  %v174 = vunpack.c.l.b16 %v151
  %v175 = vunpack.c.h.b16 %v151
  %v176 = vunpack.c.l.b16 %v152
  %v177 = vunpack.c.l.b16 %v153
  %v178 = vunpack.c.h.b16 %v153
  %v179 = vunpack.c.l.b16 %v154
  %v180 = vpack.c.b16 %v177, %v174
  %v181 = vpack.c.b16 %v178, %v175
  %v182 = vpack.c.b16 %v179, %v176
  %v185 = vld [vmem:[%s5] sm:$0xff]
  %v186 = vld [vmem:[%s5 + $0x8] sm:$0xff]
  %v187 = vld [vmem:[%s5 + $0x10] sm:$0xff]
  %v188 = vld [vmem:[%s5 + $0x18] sm:$0xff]
  %v189 = vld [vmem:[%s5 + $0x20] sm:$0xff]
  %v190 = vld [vmem:[%s5 + $0x28] sm:$0xff]
  %v191 = vld [vmem:[%s5 + $0x30] sm:$0xff]
  %v192 = vld [vmem:[%s5 + $0x38] sm:$0xff]
  %v193 = vld [vmem:[%s5 + $0x40] sm:$0xff]
  %v194 = vld [vmem:[%s5 + $0x48] sm:$0xff]
  %v195 = vld [vmem:[%s5 + $0x50] sm:$0xff]
  %v196 = vld [vmem:[%s5 + $0x58] sm:$0xff]
  %v197 = vld [vmem:[%s5 + $0x60] sm:$0xff]
  %v198 = vld [vmem:[%s5 + $0x68] sm:$0xff]
  %v199 = vld [vmem:[%s5 + $0x70] sm:$0xff]
  %v200 = vld [vmem:[%s5 + $0x78] sm:$0xff]
  %v201 = vld [vmem:[%s5 + $0x80] sm:$0xff]
  %v202 = vld [vmem:[%s5 + $0x88] sm:$0xff]
  %v203 = vld [vmem:[%s5 + $0x90] sm:$0xff]
  %v204 = vld [vmem:[%s5 + $0x98] sm:$0xff]
  %v205 = vld [vmem:[%s5 + $0xa0] sm:$0xff]
  %v206 = vld [vmem:[%s5 + $0xa8] sm:$0xff]
  %v207 = vld [vmem:[%s5 + $0xb0] sm:$0xff]
  %v208 = vld [vmem:[%s5 + $0xb8] sm:$0xff]
  %v209 = vld [vmem:[%s5 + $0xc0] sm:$0xff]
  %v210 = vld [vmem:[%s5 + $0xc8] sm:$0xff]
  %v211 = vld [vmem:[%s5 + $0xd0] sm:$0xff]
  %v212 = vld [vmem:[%s5 + $0xd8] sm:$0xff]
  %v213 = vld [vmem:[%s5 + $0xe0] sm:$0xff]
  %v214 = vld [vmem:[%s5 + $0xe8] sm:$0xff]
  %v215 = vld [vmem:[%s5 + $0xf0] sm:$0xff]
  %v216 = vld [vmem:[%s5 + $0xf8] sm:$0xff]
  %v217 = vld [vmem:[%s5 + $0x100] sm:$0xff]
  %v218 = vld [vmem:[%s5 + $0x108] sm:$0xff]
  %v219 = vld [vmem:[%s5 + $0x110] sm:$0xff]
  %v220 = vld [vmem:[%s5 + $0x118] sm:$0xff]
  %v221 = vld [vmem:[%s5 + $0x120] sm:$0xff]
  %v222 = vld [vmem:[%s5 + $0x128] sm:$0x33]
  %v223 = vld [vmem:[%s7] sm:$0x3]
  %v224 = vld [vmem:[%s9] sm:$0xff]
  %v225 = vld [vmem:[%s9 + $0x8] sm:$0xff]
  %v226 = vld [vmem:[%s9 + $0x10] sm:$0xff]
  %v227 = vld [vmem:[%s9 + $0x18] sm:$0xff]
  %v228 = vld [vmem:[%s9 + $0x20] sm:$0xff]
  %v229 = vld [vmem:[%s9 + $0x28] sm:$0xff]
  %v230 = vld [vmem:[%s9 + $0x30] sm:$0xff]
  %v231 = vld [vmem:[%s9 + $0x38] sm:$0xff]
  %v232 = vld [vmem:[%s9 + $0x40] sm:$0xff]
  %v233 = vld [vmem:[%s9 + $0x48] sm:$0xff]
  %v234 = vld [vmem:[%s9 + $0x50] sm:$0xff]
  %v235 = vld [vmem:[%s9 + $0x58] sm:$0xff]
  %v236 = vld [vmem:[%s9 + $0x60] sm:$0xff]
  %v237 = vld [vmem:[%s9 + $0x68] sm:$0xff]
  %v238 = vld [vmem:[%s9 + $0x70] sm:$0xff]
  %v239 = vld [vmem:[%s9 + $0x78] sm:$0xff]
  %v240 = vld [vmem:[%s9 + $0x80] sm:$0xff]
  %v241 = vld [vmem:[%s9 + $0x88] sm:$0xff]
  %v242 = vld [vmem:[%s9 + $0x90] sm:$0xff]
  %v243 = vld [vmem:[%s9 + $0x98] sm:$0xff]
  %v244 = vld [vmem:[%s9 + $0xa0] sm:$0xff]
  %v245 = vld [vmem:[%s9 + $0xa8] sm:$0xff]
  %v246 = vld [vmem:[%s9 + $0xb0] sm:$0xff]
  %v247 = vld [vmem:[%s9 + $0xb8] sm:$0xff]
  %v248 = vld [vmem:[%s9 + $0xc0] sm:$0xff]
  %v249 = vld [vmem:[%s9 + $0xc8] sm:$0xff]
  %v250 = vld [vmem:[%s9 + $0xd0] sm:$0xff]
  %v251 = vld [vmem:[%s9 + $0xd8] sm:$0xff]
  %v252 = vld [vmem:[%s9 + $0xe0] sm:$0xff]
  %v253 = vld [vmem:[%s9 + $0xe8] sm:$0xff]
  %v254 = vld [vmem:[%s9 + $0xf0] sm:$0xff]
  %v255 = vld [vmem:[%s9 + $0xf8] sm:$0xff]
  %v256 = vld [vmem:[%s9 + $0x100] sm:$0xff]
  %v257 = vld [vmem:[%s9 + $0x108] sm:$0xff]
  %v258 = vld [vmem:[%s9 + $0x110] sm:$0xff]
  %v259 = vld [vmem:[%s9 + $0x118] sm:$0xff]
  %v260 = vld [vmem:[%s9 + $0x120] sm:$0xff]
  %v261 = vld [vmem:[%s9 + $0x128] sm:$0x33]
  %v262 = vld [vmem:[%s11] sm:$0x3]
  %v263 = vld [vmem:[%s13] sm:$0xff]
  %v264 = vld [vmem:[%s13 + $0x8] sm:$0xff]
  %v265 = vld [vmem:[%s13 + $0x10] sm:$0xff]
  %v266 = vld [vmem:[%s13 + $0x18] sm:$0xff]
  %v267 = vld [vmem:[%s13 + $0x20] sm:$0xff]
  %v268 = vld [vmem:[%s13 + $0x28] sm:$0xff]
  %v269 = vld [vmem:[%s13 + $0x30] sm:$0xff]
  %v270 = vld [vmem:[%s13 + $0x38] sm:$0xff]
  %v271 = vld [vmem:[%s13 + $0x40] sm:$0xff]
  %v272 = vld [vmem:[%s13 + $0x48] sm:$0xff]
  %v273 = vld [vmem:[%s13 + $0x50] sm:$0xff]
  %v274 = vld [vmem:[%s13 + $0x58] sm:$0xff]
  %v275 = vld [vmem:[%s13 + $0x60] sm:$0xff]
  %v276 = vld [vmem:[%s13 + $0x68] sm:$0xff]
  %v277 = vld [vmem:[%s13 + $0x70] sm:$0xff]
  %v278 = vld [vmem:[%s13 + $0x78] sm:$0xff]
  %v279 = vld [vmem:[%s13 + $0x80] sm:$0xff]
  %v280 = vld [vmem:[%s13 + $0x88] sm:$0xff]
  %v281 = vld [vmem:[%s13 + $0x90] sm:$0xff]
  %v282 = vld [vmem:[%s13 + $0x98] sm:$0xff]
  %v283 = vld [vmem:[%s13 + $0xa0] sm:$0xff]
  %v284 = vld [vmem:[%s13 + $0xa8] sm:$0xff]
  %v285 = vld [vmem:[%s13 + $0xb0] sm:$0xff]
  %v286 = vld [vmem:[%s13 + $0xb8] sm:$0xff]
  %v287 = vld [vmem:[%s13 + $0xc0] sm:$0xff]
  %v288 = vld [vmem:[%s13 + $0xc8] sm:$0xff]
  %v289 = vld [vmem:[%s13 + $0xd0] sm:$0xff]
  %v290 = vld [vmem:[%s13 + $0xd8] sm:$0xff]
  %v291 = vld [vmem:[%s13 + $0xe0] sm:$0xff]
  %v292 = vld [vmem:[%s13 + $0xe8] sm:$0xff]
  %v293 = vld [vmem:[%s13 + $0xf0] sm:$0xff]
  %v294 = vld [vmem:[%s13 + $0xf8] sm:$0xff]
  %v295 = vld [vmem:[%s13 + $0x100] sm:$0xff]
  %v296 = vld [vmem:[%s13 + $0x108] sm:$0xff]
  %v297 = vld [vmem:[%s13 + $0x110] sm:$0xff]
  %v298 = vld [vmem:[%s13 + $0x118] sm:$0xff]
  %v299 = vld [vmem:[%s13 + $0x120] sm:$0xff]
  %v300 = vld [vmem:[%s13 + $0x128] sm:$0x33]
  %v301 = vld [vmem:[%s15] sm:$0x3]
  %v302 = vld [vmem:[%s17] sm:$0xff]
  %v303 = vld [vmem:[%s17 + $0x8] sm:$0xff]
  %v304 = vld [vmem:[%s17 + $0x10] sm:$0xff]
  %v305 = vld [vmem:[%s17 + $0x18] sm:$0xff]
  %v306 = vld [vmem:[%s17 + $0x20] sm:$0xff]
  %v307 = vld [vmem:[%s17 + $0x28] sm:$0xff]
  %v308 = vld [vmem:[%s17 + $0x30] sm:$0xff]
  %v309 = vld [vmem:[%s17 + $0x38] sm:$0xff]
  %v310 = vld [vmem:[%s17 + $0x40] sm:$0xff]
  %v311 = vld [vmem:[%s17 + $0x48] sm:$0xff]
  %v312 = vld [vmem:[%s17 + $0x50] sm:$0xff]
  %v313 = vld [vmem:[%s17 + $0x58] sm:$0xff]
  %v314 = vld [vmem:[%s17 + $0x60] sm:$0xff]
  %v315 = vld [vmem:[%s17 + $0x68] sm:$0xff]
  %v316 = vld [vmem:[%s17 + $0x70] sm:$0xff]
  %v317 = vld [vmem:[%s17 + $0x78] sm:$0xff]
  %v318 = vld [vmem:[%s17 + $0x80] sm:$0xff]
  %v319 = vld [vmem:[%s17 + $0x88] sm:$0xff]
  %v320 = vld [vmem:[%s17 + $0x90] sm:$0x77]
  %v321 = vld [vmem:[%s19] sm:$0x3]
  %v322 = vld [vmem:[%s21] sm:$0xf]
  %v323 = vld [vmem:[%s21 + $0x4] sm:$0xf]
  %v324 = vld [vmem:[%s21 + $0x8] sm:$0xf]
  %v325 = vld [vmem:[%s21 + $0xc] sm:$0xf]
  %v326 = vld [vmem:[%s21 + $0x10] sm:$0xf]
  %v327 = vld [vmem:[%s21 + $0x14] sm:$0xf]
  %v328 = vld [vmem:[%s21 + $0x18] sm:$0xf]
  %v329 = vld [vmem:[%s21 + $0x1c] sm:$0xf]
  %v330 = vld [vmem:[%s21 + $0x20] sm:$0xf]
  %v331 = vld [vmem:[%s21 + $0x24] sm:$0xf]
  %v332 = vld [vmem:[%s21 + $0x28] sm:$0xf]
  %v333 = vld [vmem:[%s21 + $0x2c] sm:$0xf]
  %v334 = vld [vmem:[%s21 + $0x30] sm:$0xf]
  %v335 = vld [vmem:[%s21 + $0x34] sm:$0xf]
  %v336 = vld [vmem:[%s21 + $0x38] sm:$0xf]
  %v337 = vld [vmem:[%s21 + $0x3c] sm:$0xf]
  %v338 = vld [vmem:[%s21 + $0x40] sm:$0xf]
  %v339 = vld [vmem:[%s21 + $0x44] sm:$0xf]
  %v340 = vld [vmem:[%s21 + $0x48] sm:$0x7]
  %v341 = vld [vmem:[%s23] sm:$0x77]
  %v343 = vlaneseq
  %v344 = vshrl.u32 %v343, 7
  %v345 = vsub.s32 0, %v344
  %v346 = vrot.slane %v223, %v345
  %v347 = vlaneseq
  %v348 = vshrl.u32 %v347, 7
  %v349 = vsub.s32 1, %v348
  %v350 = vrot.slane %v223, %v349
  %v391 = vunpack.c.l.b16 %v185
  %v392 = vunpack.c.h.b16 %v185
  %v393 = vunpack.c.l.b16 %v186
  %v394 = vunpack.c.h.b16 %v186
  %v395 = vunpack.c.l.b16 %v187
  %v396 = vunpack.c.h.b16 %v187
  %v397 = vunpack.c.l.b16 %v188
  %v398 = vunpack.c.h.b16 %v188
  %v399 = vunpack.c.l.b16 %v189
  %v400 = vunpack.c.h.b16 %v189
  %v401 = vunpack.c.l.b16 %v190
  %v402 = vunpack.c.h.b16 %v190
  %v403 = vunpack.c.l.b16 %v191
  %v404 = vunpack.c.h.b16 %v191
  %v405 = vunpack.c.l.b16 %v192
  %v406 = vunpack.c.h.b16 %v192
  %v407 = vunpack.c.l.b16 %v193
  %v408 = vunpack.c.h.b16 %v193
  %v409 = vunpack.c.l.b16 %v194
  %v410 = vunpack.c.h.b16 %v194
  %v411 = vunpack.c.l.b16 %v195
  %v412 = vunpack.c.h.b16 %v195
  %v413 = vunpack.c.l.b16 %v196
  %v414 = vunpack.c.h.b16 %v196
  %v415 = vunpack.c.l.b16 %v197
  %v416 = vunpack.c.h.b16 %v197
  %v417 = vunpack.c.l.b16 %v198
  %v418 = vunpack.c.h.b16 %v198
  %v419 = vunpack.c.l.b16 %v199
  %v420 = vunpack.c.h.b16 %v199
  %v421 = vunpack.c.l.b16 %v200
  %v422 = vunpack.c.h.b16 %v200
  %v423 = vunpack.c.l.b16 %v201
  %v424 = vunpack.c.h.b16 %v201
  %v425 = vunpack.c.l.b16 %v202
  %v426 = vunpack.c.h.b16 %v202
  %v427 = vunpack.c.l.b16 %v203
  %v428 = vunpack.c.h.b16 %v203
  %v429 = vunpack.c.l.b16 %v204
  %v430 = vunpack.c.h.b16 %v204
  %v431 = vunpack.c.l.b16 %v205
  %v432 = vunpack.c.h.b16 %v205
  %v433 = vunpack.c.l.b16 %v206
  %v434 = vunpack.c.h.b16 %v206
  %v435 = vunpack.c.l.b16 %v207
  %v436 = vunpack.c.h.b16 %v207
  %v437 = vunpack.c.l.b16 %v208
  %v438 = vunpack.c.h.b16 %v208
  %v439 = vunpack.c.l.b16 %v209
  %v440 = vunpack.c.h.b16 %v209
  %v441 = vunpack.c.l.b16 %v210
  %v442 = vunpack.c.h.b16 %v210
  %v443 = vunpack.c.l.b16 %v211
  %v444 = vunpack.c.h.b16 %v211
  %v445 = vunpack.c.l.b16 %v212
  %v446 = vunpack.c.h.b16 %v212
  %v447 = vunpack.c.l.b16 %v213
  %v448 = vunpack.c.h.b16 %v213
  %v449 = vunpack.c.l.b16 %v214
  %v450 = vunpack.c.h.b16 %v214
  %v451 = vunpack.c.l.b16 %v215
  %v452 = vunpack.c.h.b16 %v215
  %v453 = vunpack.c.l.b16 %v216
  %v454 = vunpack.c.h.b16 %v216
  %v455 = vunpack.c.l.b16 %v217
  %v456 = vunpack.c.h.b16 %v217
  %v457 = vunpack.c.l.b16 %v218
  %v458 = vunpack.c.h.b16 %v218
  %v459 = vunpack.c.l.b16 %v219
  %v460 = vunpack.c.h.b16 %v219
  %v461 = vunpack.c.l.b16 %v220
  %v462 = vunpack.c.h.b16 %v220
  %v463 = vunpack.c.l.b16 %v221
  %v464 = vunpack.c.h.b16 %v221
  %v465 = vunpack.c.l.b16 %v222
  %v466 = vunpack.c.h.b16 %v222
  %v467 = vpack.c.b16 %v393, %v391
  %v468 = vpack.c.b16 %v394, %v392
  %v469 = vpack.c.b16 %v397, %v395
  %v470 = vpack.c.b16 %v398, %v396
  %v471 = vpack.c.b16 %v401, %v399
  %v472 = vpack.c.b16 %v402, %v400
  %v473 = vpack.c.b16 %v405, %v403
  %v474 = vpack.c.b16 %v406, %v404
  %v475 = vpack.c.b16 %v409, %v407
  %v476 = vpack.c.b16 %v410, %v408
  %v477 = vpack.c.b16 %v413, %v411
  %v478 = vpack.c.b16 %v414, %v412
  %v479 = vpack.c.b16 %v417, %v415
  %v480 = vpack.c.b16 %v418, %v416
  %v481 = vpack.c.b16 %v421, %v419
  %v482 = vpack.c.b16 %v422, %v420
  %v483 = vpack.c.b16 %v425, %v423
  %v484 = vpack.c.b16 %v426, %v424
  %v485 = vpack.c.b16 %v429, %v427
  %v486 = vpack.c.b16 %v430, %v428
  %v487 = vpack.c.b16 %v433, %v431
  %v488 = vpack.c.b16 %v434, %v432
  %v489 = vpack.c.b16 %v437, %v435
  %v490 = vpack.c.b16 %v438, %v436
  %v491 = vpack.c.b16 %v441, %v439
  %v492 = vpack.c.b16 %v442, %v440
  %v493 = vpack.c.b16 %v445, %v443
  %v494 = vpack.c.b16 %v446, %v444
  %v495 = vpack.c.b16 %v449, %v447
  %v496 = vpack.c.b16 %v450, %v448
  %v497 = vpack.c.b16 %v453, %v451
  %v498 = vpack.c.b16 %v454, %v452
  %v499 = vpack.c.b16 %v457, %v455
  %v500 = vpack.c.b16 %v458, %v456
  %v501 = vpack.c.b16 %v461, %v459
  %v502 = vpack.c.b16 %v462, %v460
  %v503 = vpack.c.b16 %v465, %v463
  %v504 = vpack.c.b16 %v466, %v464
  %vm541 = vcmask 359424
  %v543 = vsel %vm541, %v167, 0
  %v546 = vsel %vm541, %v182, 0
  %vm548 = vcmask 1045504
  %v550 = vsel %vm548, %v503, 0
  %v553 = vsel %vm548, %v504, 0
  %555 = vmatprep.subr.bf16.mxu0 %v468
  %556 = vmatpush1.bf16.msra.mxu0 %v467
  %557 = vmatprep.subr.bf16.mxu0 %v470
  %558 = vmatpush1.bf16.msra.mxu0 %v469
  %559 = vmatprep.subr.bf16.mxu0 %v472
  %560 = vmatpush1.bf16.msra.mxu0 %v471
  %561 = vmatprep.subr.bf16.mxu0 %v474
  %562 = vmatpush1.bf16.msra.mxu0 %v473
  %563 = vmatprep.subr.bf16.mxu0 %v476
  %564 = vmatpush1.bf16.msra.mxu0 %v475
  %565 = vmatprep.subr.bf16.mxu0 %v478
  %566 = vmatpush1.bf16.msra.mxu0 %v477
  %567 = vmatprep.subr.bf16.mxu0 %v480
  %568 = vmatpush1.bf16.msra.mxu0 %v479
  %569 = vmatprep.subr.bf16.mxu0 %v482
  %570 = vmatpush1.bf16.msra.mxu0 %v481
  %571 = vmatprep.subr.bf16.mxu0 %v484
  %572 = vmatpush1.bf16.msra.mxu0 %v483
  %573 = vmatprep.subr.bf16.mxu0 %v486
  %574 = vmatpush1.bf16.msra.mxu0 %v485
  %575 = vmatprep.subr.bf16.mxu0 %v488
  %576 = vmatpush1.bf16.msra.mxu0 %v487
  %577 = vmatprep.subr.bf16.mxu0 %v490
  %578 = vmatpush1.bf16.msra.mxu0 %v489
  %579 = vmatprep.subr.bf16.mxu0 %v492
  %580 = vmatpush1.bf16.msra.mxu0 %v491
  %581 = vmatprep.subr.bf16.mxu0 %v494
  %582 = vmatpush1.bf16.msra.mxu0 %v493
  %583 = vmatprep.subr.bf16.mxu0 %v496
  %584 = vmatpush1.bf16.msra.mxu0 %v495
  %585 = vmatprep.subr.bf16.mxu0 %v498
  %586 = vmatpush1.bf16.msra.mxu0 %v497
  %587 = vmatprep.mubr.bf16.mxu0 %v166
  %588 = vmatmul.mubr.bf16.gmra.mrb[0].mxu0 %v165
  %v589 = vpop.f32.mrb[0].mxu0
  %v590 = vadd.f32 %v346, %v589
  %v591 = vpop.f32.mrb[0].mxu0
  %v592 = vadd.f32 %v350, %v591
  %v593 = vpop.f32.mrb[0].mxu0
  %v594 = vadd.f32 %v346, %v593
  %v595 = vpop.f32.mrb[0].mxu0
  %v596 = vadd.f32 %v350, %v595
  %597 = vmatprep.mubr.bf16.mxu0 %v181
  %598 = vmatmul.mubr.bf16.gmra.mrb[0].mxu0 %v180
  %v599 = vpop.f32.mrb[0].mxu0
  %v600 = vadd.f32 %v346, %v599
  %v601 = vpop.f32.mrb[0].mxu0
  %v602 = vadd.f32 %v350, %v601
  %v603 = vpop.f32.mrb[0].mxu0
  %v604 = vadd.f32 %v346, %v603
  %v605 = vpop.f32.mrb[0].mxu0
  %v606 = vadd.f32 %v350, %v605
  %607 = vdwg.mxu0
  %608 = vmatprep.subr.bf16.mxu0 %v500
  %609 = vmatpush1.bf16.msra.mxu0 %v499
  %610 = vmatprep.subr.bf16.mxu0 %v502
  %611 = vmatpush1.bf16.msra.mxu0 %v501
  %612 = vmatprep.subr.bf16.mxu0 %v553
  %613 = vmatpush1.bf16.msra.mxu0 %v550
  %614 = vmatprep.subr.bf16.mxu0 0
  %615 = vmatpush1.bf16.msra.mxu0 0
  %616 = vmatprep.subr.bf16.mxu0 0
  %617 = vmatpush1.bf16.msra.mxu0 0
  %618 = vmatprep.subr.bf16.mxu0 0
  %619 = vmatpush1.bf16.msra.mxu0 0
  %620 = vmatprep.subr.bf16.mxu0 0
  %621 = vmatpush1.bf16.msra.mxu0 0
  %622 = vmatprep.subr.bf16.mxu0 0
  %623 = vmatpush1.bf16.msra.mxu0 0
  %624 = vmatprep.subr.bf16.mxu0 0
  %625 = vmatpush1.bf16.msra.mxu0 0
  %626 = vmatprep.subr.bf16.mxu0 0
  %627 = vmatpush1.bf16.msra.mxu0 0
  %628 = vmatprep.subr.bf16.mxu0 0
  %629 = vmatpush1.bf16.msra.mxu0 0
  %630 = vmatprep.subr.bf16.mxu0 0
  %631 = vmatpush1.bf16.msra.mxu0 0
  %632 = vmatprep.subr.bf16.mxu0 0
  %633 = vmatpush1.bf16.msra.mxu0 0
  %634 = vmatprep.subr.bf16.mxu0 0
  %635 = vmatpush1.bf16.msra.mxu0 0
  %636 = vmatprep.subr.bf16.mxu0 0
  %637 = vmatpush1.bf16.msra.mxu0 0
  %638 = vmatprep.subr.bf16.mxu0 0
  %639 = vmatpush1.bf16.msra.mxu0 0
  %640 = vmatprep.mubr.bf16.mxu0 0
  %641 = vmatmul.mubr.bf16.gmra.mrb[0].mxu0 %v543
  %v642 = vpop.f32.mrb[0].mxu0
  %v643 = vadd.f32 %v590, %v642
  %v644 = vpop.f32.mrb[0].mxu0
  %v645 = vadd.f32 %v592, %v644
  %v646 = vpop.f32.mrb[0].mxu0
  %v647 = vadd.f32 %v594, %v646
  %v648 = vpop.f32.mrb[0].mxu0
  %v649 = vadd.f32 %v596, %v648
  %650 = vmatprep.mubr.bf16.mxu0 0
  %651 = vmatmul.mubr.bf16.gmra.mrb[0].mxu0 %v546
  %v652 = vpop.f32.mrb[0].mxu0
  %v653 = vadd.f32 %v600, %v652
  %v654 = vpop.f32.mrb[0].mxu0
  %v655 = vadd.f32 %v602, %v654
  %v656 = vpop.f32.mrb[0].mxu0
  %v657 = vadd.f32 %v604, %v656
  %v658 = vpop.f32.mrb[0].mxu0
  %v659 = vadd.f32 %v606, %v658
  %660 = vdwg.mxu0
  %v662 = vlaneseq
  %v663 = vshrl.u32 %v662, 7
  %v664 = vsub.s32 0, %v663
  %v665 = vrot.slane %v262, %v664
  %v666 = vlaneseq
  %v667 = vshrl.u32 %v666, 7
  %v668 = vsub.s32 1, %v667
  %v669 = vrot.slane %v262, %v668
  %v710 = vunpack.c.l.b16 %v224
  %v711 = vunpack.c.h.b16 %v224
  %v712 = vunpack.c.l.b16 %v225
  %v713 = vunpack.c.h.b16 %v225
  %v714 = vunpack.c.l.b16 %v226
  %v715 = vunpack.c.h.b16 %v226
  %v716 = vunpack.c.l.b16 %v227
  %v717 = vunpack.c.h.b16 %v227
  %v718 = vunpack.c.l.b16 %v228
  %v719 = vunpack.c.h.b16 %v228
  %v720 = vunpack.c.l.b16 %v229
  %v721 = vunpack.c.h.b16 %v229
  %v722 = vunpack.c.l.b16 %v230
  %v723 = vunpack.c.h.b16 %v230
  %v724 = vunpack.c.l.b16 %v231
  %v725 = vunpack.c.h.b16 %v231
  %v726 = vunpack.c.l.b16 %v232
  %v727 = vunpack.c.h.b16 %v232
  %v728 = vunpack.c.l.b16 %v233
  %v729 = vunpack.c.h.b16 %v233
  %v730 = vunpack.c.l.b16 %v234
  %v731 = vunpack.c.h.b16 %v234
  %v732 = vunpack.c.l.b16 %v235
  %v733 = vunpack.c.h.b16 %v235
  %v734 = vunpack.c.l.b16 %v236
  %v735 = vunpack.c.h.b16 %v236
  %v736 = vunpack.c.l.b16 %v237
  %v737 = vunpack.c.h.b16 %v237
  %v738 = vunpack.c.l.b16 %v238
  %v739 = vunpack.c.h.b16 %v238
  %v740 = vunpack.c.l.b16 %v239
  %v741 = vunpack.c.h.b16 %v239
  %v742 = vunpack.c.l.b16 %v240
  %v743 = vunpack.c.h.b16 %v240
  %v744 = vunpack.c.l.b16 %v241
  %v745 = vunpack.c.h.b16 %v241
  %v746 = vunpack.c.l.b16 %v242
  %v747 = vunpack.c.h.b16 %v242
  %v748 = vunpack.c.l.b16 %v243
  %v749 = vunpack.c.h.b16 %v243
  %v750 = vunpack.c.l.b16 %v244
  %v751 = vunpack.c.h.b16 %v244
  %v752 = vunpack.c.l.b16 %v245
  %v753 = vunpack.c.h.b16 %v245
  %v754 = vunpack.c.l.b16 %v246
  %v755 = vunpack.c.h.b16 %v246
  %v756 = vunpack.c.l.b16 %v247
  %v757 = vunpack.c.h.b16 %v247
  %v758 = vunpack.c.l.b16 %v248
  %v759 = vunpack.c.h.b16 %v248
  %v760 = vunpack.c.l.b16 %v249
  %v761 = vunpack.c.h.b16 %v249
  %v762 = vunpack.c.l.b16 %v250
  %v763 = vunpack.c.h.b16 %v250
  %v764 = vunpack.c.l.b16 %v251
  %v765 = vunpack.c.h.b16 %v251
  %v766 = vunpack.c.l.b16 %v252
  %v767 = vunpack.c.h.b16 %v252
  %v768 = vunpack.c.l.b16 %v253
  %v769 = vunpack.c.h.b16 %v253
  %v770 = vunpack.c.l.b16 %v254
  %v771 = vunpack.c.h.b16 %v254
  %v772 = vunpack.c.l.b16 %v255
  %v773 = vunpack.c.h.b16 %v255
  %v774 = vunpack.c.l.b16 %v256
  %v775 = vunpack.c.h.b16 %v256
  %v776 = vunpack.c.l.b16 %v257
  %v777 = vunpack.c.h.b16 %v257
  %v778 = vunpack.c.l.b16 %v258
  %v779 = vunpack.c.h.b16 %v258
  %v780 = vunpack.c.l.b16 %v259
  %v781 = vunpack.c.h.b16 %v259
  %v782 = vunpack.c.l.b16 %v260
  %v783 = vunpack.c.h.b16 %v260
  %v784 = vunpack.c.l.b16 %v261
  %v785 = vunpack.c.h.b16 %v261
  %v786 = vpack.c.b16 %v712, %v710
  %v787 = vpack.c.b16 %v713, %v711
  %v788 = vpack.c.b16 %v716, %v714
  %v789 = vpack.c.b16 %v717, %v715
  %v790 = vpack.c.b16 %v720, %v718
  %v791 = vpack.c.b16 %v721, %v719
  %v792 = vpack.c.b16 %v724, %v722
  %v793 = vpack.c.b16 %v725, %v723
  %v794 = vpack.c.b16 %v728, %v726
  %v795 = vpack.c.b16 %v729, %v727
  %v796 = vpack.c.b16 %v732, %v730
  %v797 = vpack.c.b16 %v733, %v731
  %v798 = vpack.c.b16 %v736, %v734
  %v799 = vpack.c.b16 %v737, %v735
  %v800 = vpack.c.b16 %v740, %v738
  %v801 = vpack.c.b16 %v741, %v739
  %v802 = vpack.c.b16 %v744, %v742
  %v803 = vpack.c.b16 %v745, %v743
  %v804 = vpack.c.b16 %v748, %v746
  %v805 = vpack.c.b16 %v749, %v747
  %v806 = vpack.c.b16 %v752, %v750
  %v807 = vpack.c.b16 %v753, %v751
  %v808 = vpack.c.b16 %v756, %v754
  %v809 = vpack.c.b16 %v757, %v755
  %v810 = vpack.c.b16 %v760, %v758
  %v811 = vpack.c.b16 %v761, %v759
  %v812 = vpack.c.b16 %v764, %v762
  %v813 = vpack.c.b16 %v765, %v763
  %v814 = vpack.c.b16 %v768, %v766
  %v815 = vpack.c.b16 %v769, %v767
  %v816 = vpack.c.b16 %v772, %v770
  %v817 = vpack.c.b16 %v773, %v771
  %v818 = vpack.c.b16 %v776, %v774
  %v819 = vpack.c.b16 %v777, %v775
  %v820 = vpack.c.b16 %v780, %v778
  %v821 = vpack.c.b16 %v781, %v779
  %v822 = vpack.c.b16 %v784, %v782
  %v823 = vpack.c.b16 %v785, %v783
  %v861 = vsel %vm548, %v822, 0
  %v864 = vsel %vm548, %v823, 0
  %866 = vmatprep.subr.bf16.mxu0 %v787
  %867 = vmatpush1.bf16.msra.mxu0 %v786
  %868 = vmatprep.subr.bf16.mxu0 %v789
  %869 = vmatpush1.bf16.msra.mxu0 %v788
  %870 = vmatprep.subr.bf16.mxu0 %v791
  %871 = vmatpush1.bf16.msra.mxu0 %v790
  %872 = vmatprep.subr.bf16.mxu0 %v793
  %873 = vmatpush1.bf16.msra.mxu0 %v792
  %874 = vmatprep.subr.bf16.mxu0 %v795
  %875 = vmatpush1.bf16.msra.mxu0 %v794
  %876 = vmatprep.subr.bf16.mxu0 %v797
  %877 = vmatpush1.bf16.msra.mxu0 %v796
  %878 = vmatprep.subr.bf16.mxu0 %v799
  %879 = vmatpush1.bf16.msra.mxu0 %v798
  %880 = vmatprep.subr.bf16.mxu0 %v801
  %881 = vmatpush1.bf16.msra.mxu0 %v800
  %882 = vmatprep.subr.bf16.mxu0 %v803
  %883 = vmatpush1.bf16.msra.mxu0 %v802
  %884 = vmatprep.subr.bf16.mxu0 %v805
  %885 = vmatpush1.bf16.msra.mxu0 %v804
  %886 = vmatprep.subr.bf16.mxu0 %v807
  %887 = vmatpush1.bf16.msra.mxu0 %v806
  %888 = vmatprep.subr.bf16.mxu0 %v809
  %889 = vmatpush1.bf16.msra.mxu0 %v808
  %890 = vmatprep.subr.bf16.mxu0 %v811
  %891 = vmatpush1.bf16.msra.mxu0 %v810
  %892 = vmatprep.subr.bf16.mxu0 %v813
  %893 = vmatpush1.bf16.msra.mxu0 %v812
  %894 = vmatprep.subr.bf16.mxu0 %v815
  %895 = vmatpush1.bf16.msra.mxu0 %v814
  %896 = vmatprep.subr.bf16.mxu0 %v817
  %897 = vmatpush1.bf16.msra.mxu0 %v816
  %898 = vmatprep.mubr.bf16.mxu0 %v166
  %899 = vmatmul.mubr.bf16.gmra.mrb[0].mxu0 %v165
  %v900 = vpop.f32.mrb[0].mxu0
  %v901 = vadd.f32 %v665, %v900
  %v902 = vpop.f32.mrb[0].mxu0
  %v903 = vadd.f32 %v669, %v902
  %v904 = vpop.f32.mrb[0].mxu0
  %v905 = vadd.f32 %v665, %v904
  %v906 = vpop.f32.mrb[0].mxu0
  %v907 = vadd.f32 %v669, %v906
  %908 = vmatprep.mubr.bf16.mxu0 %v181
  %909 = vmatmul.mubr.bf16.gmra.mrb[0].mxu0 %v180
  %v910 = vpop.f32.mrb[0].mxu0
  %v911 = vadd.f32 %v665, %v910
  %v912 = vpop.f32.mrb[0].mxu0
  %v913 = vadd.f32 %v669, %v912
  %v914 = vpop.f32.mrb[0].mxu0
  %v915 = vadd.f32 %v665, %v914
  %v916 = vpop.f32.mrb[0].mxu0
  %v917 = vadd.f32 %v669, %v916
  %918 = vdwg.mxu0
  %919 = vmatprep.subr.bf16.mxu0 %v819
  %920 = vmatpush1.bf16.msra.mxu0 %v818
  %921 = vmatprep.subr.bf16.mxu0 %v821
  %922 = vmatpush1.bf16.msra.mxu0 %v820
  %923 = vmatprep.subr.bf16.mxu0 %v864
  %924 = vmatpush1.bf16.msra.mxu0 %v861
  %925 = vmatprep.subr.bf16.mxu0 0
  %926 = vmatpush1.bf16.msra.mxu0 0
  %927 = vmatprep.subr.bf16.mxu0 0
  %928 = vmatpush1.bf16.msra.mxu0 0
  %929 = vmatprep.subr.bf16.mxu0 0
  %930 = vmatpush1.bf16.msra.mxu0 0
  %931 = vmatprep.subr.bf16.mxu0 0
  %932 = vmatpush1.bf16.msra.mxu0 0
  %933 = vmatprep.subr.bf16.mxu0 0
  %934 = vmatpush1.bf16.msra.mxu0 0
  %935 = vmatprep.subr.bf16.mxu0 0
  %936 = vmatpush1.bf16.msra.mxu0 0
  %937 = vmatprep.subr.bf16.mxu0 0
  %938 = vmatpush1.bf16.msra.mxu0 0
  %939 = vmatprep.subr.bf16.mxu0 0
  %940 = vmatpush1.bf16.msra.mxu0 0
  %941 = vmatprep.subr.bf16.mxu0 0
  %942 = vmatpush1.bf16.msra.mxu0 0
  %943 = vmatprep.subr.bf16.mxu0 0
  %944 = vmatpush1.bf16.msra.mxu0 0
  %945 = vmatprep.subr.bf16.mxu0 0
  %946 = vmatpush1.bf16.msra.mxu0 0
  %947 = vmatprep.subr.bf16.mxu0 0
  %948 = vmatpush1.bf16.msra.mxu0 0
  %949 = vmatprep.subr.bf16.mxu0 0
  %950 = vmatpush1.bf16.msra.mxu0 0
  %951 = vmatprep.mubr.bf16.mxu0 0
  %952 = vmatmul.mubr.bf16.gmra.mrb[0].mxu0 %v543
  %v953 = vpop.f32.mrb[0].mxu0
  %v954 = vadd.f32 %v901, %v953
  %v955 = vpop.f32.mrb[0].mxu0
  %v956 = vadd.f32 %v903, %v955
  %v957 = vpop.f32.mrb[0].mxu0
  %v958 = vadd.f32 %v905, %v957
  %v959 = vpop.f32.mrb[0].mxu0
  %v960 = vadd.f32 %v907, %v959
  %961 = vmatprep.mubr.bf16.mxu0 0
  %962 = vmatmul.mubr.bf16.gmra.mrb[0].mxu0 %v546
  %v963 = vpop.f32.mrb[0].mxu0
  %v964 = vadd.f32 %v911, %v963
  %v965 = vpop.f32.mrb[0].mxu0
  %v966 = vadd.f32 %v913, %v965
  %v967 = vpop.f32.mrb[0].mxu0
  %v968 = vadd.f32 %v915, %v967
  %v969 = vpop.f32.mrb[0].mxu0
  %v970 = vadd.f32 %v917, %v969
  %971 = vdwg.mxu0
  %v973 = vlaneseq
  %v974 = vshrl.u32 %v973, 7
  %v975 = vsub.s32 0, %v974
  %v976 = vrot.slane %v301, %v975
  %v977 = vlaneseq
  %v978 = vshrl.u32 %v977, 7
  %v979 = vsub.s32 1, %v978
  %v980 = vrot.slane %v301, %v979
  %v1021 = vunpack.c.l.b16 %v263
  %v1022 = vunpack.c.h.b16 %v263
  %v1023 = vunpack.c.l.b16 %v264
  %v1024 = vunpack.c.h.b16 %v264
  %v1025 = vunpack.c.l.b16 %v265
  %v1026 = vunpack.c.h.b16 %v265
  %v1027 = vunpack.c.l.b16 %v266
  %v1028 = vunpack.c.h.b16 %v266
  %v1029 = vunpack.c.l.b16 %v267
  %v1030 = vunpack.c.h.b16 %v267
  %v1031 = vunpack.c.l.b16 %v268
  %v1032 = vunpack.c.h.b16 %v268
  %v1033 = vunpack.c.l.b16 %v269
  %v1034 = vunpack.c.h.b16 %v269
  %v1035 = vunpack.c.l.b16 %v270
  %v1036 = vunpack.c.h.b16 %v270
  %v1037 = vunpack.c.l.b16 %v271
  %v1038 = vunpack.c.h.b16 %v271
  %v1039 = vunpack.c.l.b16 %v272
  %v1040 = vunpack.c.h.b16 %v272
  %v1041 = vunpack.c.l.b16 %v273
  %v1042 = vunpack.c.h.b16 %v273
  %v1043 = vunpack.c.l.b16 %v274
  %v1044 = vunpack.c.h.b16 %v274
  %v1045 = vunpack.c.l.b16 %v275
  %v1046 = vunpack.c.h.b16 %v275
  %v1047 = vunpack.c.l.b16 %v276
  %v1048 = vunpack.c.h.b16 %v276
  %v1049 = vunpack.c.l.b16 %v277
  %v1050 = vunpack.c.h.b16 %v277
  %v1051 = vunpack.c.l.b16 %v278
  %v1052 = vunpack.c.h.b16 %v278
  %v1053 = vunpack.c.l.b16 %v279
  %v1054 = vunpack.c.h.b16 %v279
  %v1055 = vunpack.c.l.b16 %v280
  %v1056 = vunpack.c.h.b16 %v280
  %v1057 = vunpack.c.l.b16 %v281
  %v1058 = vunpack.c.h.b16 %v281
  %v1059 = vunpack.c.l.b16 %v282
  %v1060 = vunpack.c.h.b16 %v282
  %v1061 = vunpack.c.l.b16 %v283
  %v1062 = vunpack.c.h.b16 %v283
  %v1063 = vunpack.c.l.b16 %v284
  %v1064 = vunpack.c.h.b16 %v284
  %v1065 = vunpack.c.l.b16 %v285
  %v1066 = vunpack.c.h.b16 %v285
  %v1067 = vunpack.c.l.b16 %v286
  %v1068 = vunpack.c.h.b16 %v286
  %v1069 = vunpack.c.l.b16 %v287
  %v1070 = vunpack.c.h.b16 %v287
  %v1071 = vunpack.c.l.b16 %v288
  %v1072 = vunpack.c.h.b16 %v288
  %v1073 = vunpack.c.l.b16 %v289
  %v1074 = vunpack.c.h.b16 %v289
  %v1075 = vunpack.c.l.b16 %v290
  %v1076 = vunpack.c.h.b16 %v290
  %v1077 = vunpack.c.l.b16 %v291
  %v1078 = vunpack.c.h.b16 %v291
  %v1079 = vunpack.c.l.b16 %v292
  %v1080 = vunpack.c.h.b16 %v292
  %v1081 = vunpack.c.l.b16 %v293
  %v1082 = vunpack.c.h.b16 %v293
  %v1083 = vunpack.c.l.b16 %v294
  %v1084 = vunpack.c.h.b16 %v294
  %v1085 = vunpack.c.l.b16 %v295
  %v1086 = vunpack.c.h.b16 %v295
  %v1087 = vunpack.c.l.b16 %v296
  %v1088 = vunpack.c.h.b16 %v296
  %v1089 = vunpack.c.l.b16 %v297
  %v1090 = vunpack.c.h.b16 %v297
  %v1091 = vunpack.c.l.b16 %v298
  %v1092 = vunpack.c.h.b16 %v298
  %v1093 = vunpack.c.l.b16 %v299
  %v1094 = vunpack.c.h.b16 %v299
  %v1095 = vunpack.c.l.b16 %v300
  %v1096 = vunpack.c.h.b16 %v300
  %v1097 = vpack.c.b16 %v1023, %v1021
  %v1098 = vpack.c.b16 %v1024, %v1022
  %v1099 = vpack.c.b16 %v1027, %v1025
  %v1100 = vpack.c.b16 %v1028, %v1026
  %v1101 = vpack.c.b16 %v1031, %v1029
  %v1102 = vpack.c.b16 %v1032, %v1030
  %v1103 = vpack.c.b16 %v1035, %v1033
  %v1104 = vpack.c.b16 %v1036, %v1034
  %v1105 = vpack.c.b16 %v1039, %v1037
  %v1106 = vpack.c.b16 %v1040, %v1038
  %v1107 = vpack.c.b16 %v1043, %v1041
  %v1108 = vpack.c.b16 %v1044, %v1042
  %v1109 = vpack.c.b16 %v1047, %v1045
  %v1110 = vpack.c.b16 %v1048, %v1046
  %v1111 = vpack.c.b16 %v1051, %v1049
  %v1112 = vpack.c.b16 %v1052, %v1050
  %v1113 = vpack.c.b16 %v1055, %v1053
  %v1114 = vpack.c.b16 %v1056, %v1054
  %v1115 = vpack.c.b16 %v1059, %v1057
  %v1116 = vpack.c.b16 %v1060, %v1058
  %v1117 = vpack.c.b16 %v1063, %v1061
  %v1118 = vpack.c.b16 %v1064, %v1062
  %v1119 = vpack.c.b16 %v1067, %v1065
  %v1120 = vpack.c.b16 %v1068, %v1066
  %v1121 = vpack.c.b16 %v1071, %v1069
  %v1122 = vpack.c.b16 %v1072, %v1070
  %v1123 = vpack.c.b16 %v1075, %v1073
  %v1124 = vpack.c.b16 %v1076, %v1074
  %v1125 = vpack.c.b16 %v1079, %v1077
  %v1126 = vpack.c.b16 %v1080, %v1078
  %v1127 = vpack.c.b16 %v1083, %v1081
  %v1128 = vpack.c.b16 %v1084, %v1082
  %v1129 = vpack.c.b16 %v1087, %v1085
  %v1130 = vpack.c.b16 %v1088, %v1086
  %v1131 = vpack.c.b16 %v1091, %v1089
  %v1132 = vpack.c.b16 %v1092, %v1090
  %v1133 = vpack.c.b16 %v1095, %v1093
  %v1134 = vpack.c.b16 %v1096, %v1094
  %v1172 = vsel %vm548, %v1133, 0
  %v1175 = vsel %vm548, %v1134, 0
  %1177 = vmatprep.subr.bf16.mxu0 %v1098
  %1178 = vmatpush1.bf16.msra.mxu0 %v1097
  %1179 = vmatprep.subr.bf16.mxu0 %v1100
  %1180 = vmatpush1.bf16.msra.mxu0 %v1099
  %1181 = vmatprep.subr.bf16.mxu0 %v1102
  %1182 = vmatpush1.bf16.msra.mxu0 %v1101
  %1183 = vmatprep.subr.bf16.mxu0 %v1104
  %1184 = vmatpush1.bf16.msra.mxu0 %v1103
  %1185 = vmatprep.subr.bf16.mxu0 %v1106
  %1186 = vmatpush1.bf16.msra.mxu0 %v1105
  %1187 = vmatprep.subr.bf16.mxu0 %v1108
  %1188 = vmatpush1.bf16.msra.mxu0 %v1107
  %1189 = vmatprep.subr.bf16.mxu0 %v1110
  %1190 = vmatpush1.bf16.msra.mxu0 %v1109
  %1191 = vmatprep.subr.bf16.mxu0 %v1112
  %1192 = vmatpush1.bf16.msra.mxu0 %v1111
  %1193 = vmatprep.subr.bf16.mxu0 %v1114
  %1194 = vmatpush1.bf16.msra.mxu0 %v1113
  %1195 = vmatprep.subr.bf16.mxu0 %v1116
  %1196 = vmatpush1.bf16.msra.mxu0 %v1115
  %1197 = vmatprep.subr.bf16.mxu0 %v1118
  %1198 = vmatpush1.bf16.msra.mxu0 %v1117
  %1199 = vmatprep.subr.bf16.mxu0 %v1120
  %1200 = vmatpush1.bf16.msra.mxu0 %v1119
  %1201 = vmatprep.subr.bf16.mxu0 %v1122
  %1202 = vmatpush1.bf16.msra.mxu0 %v1121
  %1203 = vmatprep.subr.bf16.mxu0 %v1124
  %1204 = vmatpush1.bf16.msra.mxu0 %v1123
  %1205 = vmatprep.subr.bf16.mxu0 %v1126
  %1206 = vmatpush1.bf16.msra.mxu0 %v1125
  %1207 = vmatprep.subr.bf16.mxu0 %v1128
  %1208 = vmatpush1.bf16.msra.mxu0 %v1127
  %1209 = vmatprep.mubr.bf16.mxu0 %v166
  %1210 = vmatmul.mubr.bf16.gmra.mrb[0].mxu0 %v165
  %v1211 = vpop.f32.mrb[0].mxu0
  %v1212 = vadd.f32 %v976, %v1211
  %v1213 = vpop.f32.mrb[0].mxu0
  %v1214 = vadd.f32 %v980, %v1213
  %v1215 = vpop.f32.mrb[0].mxu0
  %v1216 = vadd.f32 %v976, %v1215
  %v1217 = vpop.f32.mrb[0].mxu0
  %v1218 = vadd.f32 %v980, %v1217
  %1219 = vmatprep.mubr.bf16.mxu0 %v181
  %1220 = vmatmul.mubr.bf16.gmra.mrb[0].mxu0 %v180
  %v1221 = vpop.f32.mrb[0].mxu0
  %v1222 = vadd.f32 %v976, %v1221
  %v1223 = vpop.f32.mrb[0].mxu0
  %v1224 = vadd.f32 %v980, %v1223
  %v1225 = vpop.f32.mrb[0].mxu0
  %v1226 = vadd.f32 %v976, %v1225
  %v1227 = vpop.f32.mrb[0].mxu0
  %v1228 = vadd.f32 %v980, %v1227
  %1229 = vdwg.mxu0
  %1230 = vmatprep.subr.bf16.mxu0 %v1130
  %1231 = vmatpush1.bf16.msra.mxu0 %v1129
  %1232 = vmatprep.subr.bf16.mxu0 %v1132
  %1233 = vmatpush1.bf16.msra.mxu0 %v1131
  %1234 = vmatprep.subr.bf16.mxu0 %v1175
  %1235 = vmatpush1.bf16.msra.mxu0 %v1172
  %1236 = vmatprep.subr.bf16.mxu0 0
  %1237 = vmatpush1.bf16.msra.mxu0 0
  %1238 = vmatprep.subr.bf16.mxu0 0
  %1239 = vmatpush1.bf16.msra.mxu0 0
  %1240 = vmatprep.subr.bf16.mxu0 0
  %1241 = vmatpush1.bf16.msra.mxu0 0
  %1242 = vmatprep.subr.bf16.mxu0 0
  %1243 = vmatpush1.bf16.msra.mxu0 0
  %1244 = vmatprep.subr.bf16.mxu0 0
  %1245 = vmatpush1.bf16.msra.mxu0 0
  %1246 = vmatprep.subr.bf16.mxu0 0
  %1247 = vmatpush1.bf16.msra.mxu0 0
  %1248 = vmatprep.subr.bf16.mxu0 0
  %1249 = vmatpush1.bf16.msra.mxu0 0
  %1250 = vmatprep.subr.bf16.mxu0 0
  %1251 = vmatpush1.bf16.msra.mxu0 0
  %1252 = vmatprep.subr.bf16.mxu0 0
  %1253 = vmatpush1.bf16.msra.mxu0 0
  %1254 = vmatprep.subr.bf16.mxu0 0
  %1255 = vmatpush1.bf16.msra.mxu0 0
  %1256 = vmatprep.subr.bf16.mxu0 0
  %1257 = vmatpush1.bf16.msra.mxu0 0
  %1258 = vmatprep.subr.bf16.mxu0 0
  %1259 = vmatpush1.bf16.msra.mxu0 0
  %1260 = vmatprep.subr.bf16.mxu0 0
  %1261 = vmatpush1.bf16.msra.mxu0 0
  %1262 = vmatprep.mubr.bf16.mxu0 0
  %1263 = vmatmul.mubr.bf16.gmra.mrb[0].mxu0 %v543
  %v1264 = vpop.f32.mrb[0].mxu0
  %v1265 = vadd.f32 %v1212, %v1264
  %v1266 = vpop.f32.mrb[0].mxu0
  %v1267 = vadd.f32 %v1214, %v1266
  %v1268 = vpop.f32.mrb[0].mxu0
  %v1269 = vadd.f32 %v1216, %v1268
  %v1270 = vpop.f32.mrb[0].mxu0
  %v1271 = vadd.f32 %v1218, %v1270
  %1272 = vmatprep.mubr.bf16.mxu0 0
  %1273 = vmatmul.mubr.bf16.gmra.mrb[0].mxu0 %v546
  %v1274 = vpop.f32.mrb[0].mxu0
  %v1275 = vadd.f32 %v1222, %v1274
  %v1276 = vpop.f32.mrb[0].mxu0
  %v1277 = vadd.f32 %v1224, %v1276
  %v1278 = vpop.f32.mrb[0].mxu0
  %v1279 = vadd.f32 %v1226, %v1278
  %v1280 = vpop.f32.mrb[0].mxu0
  %v1281 = vadd.f32 %v1228, %v1280
  %1282 = vdwg.mxu0
  %v1283 = vsub.f32 %v954, %v964
  %v1284 = vsub.f32 %v956, %v966
  %v1285 = vsub.f32 %v958, %v968
  %v1286 = vsub.f32 %v960, %v970
  %v1287 = vsub.f32 %v1265, %v1275
  %v1288 = vsub.f32 %v1267, %v1277
  %v1289 = vsub.f32 %v1269, %v1279
  %v1290 = vsub.f32 %v1271, %v1281
  %v1291 = vmul.f32 %v643, %v1283
  %v1292 = vmul.f32 %v645, %v1284
  %v1293 = vmul.f32 %v647, %v1285
  %v1294 = vmul.f32 %v649, %v1286
  %v1295 = vpack.c.bf16 %v1293, %v1291
  %v1296 = vpack.c.bf16 %v1294, %v1292
  %v1316 = vunpack.c.l.b16 %v322
  %v1317 = vunpack.c.l.b16 %v323
  %v1318 = vunpack.c.l.b16 %v324
  %v1319 = vunpack.c.l.b16 %v325
  %v1320 = vunpack.c.l.b16 %v326
  %v1321 = vunpack.c.l.b16 %v327
  %v1322 = vunpack.c.l.b16 %v328
  %v1323 = vunpack.c.l.b16 %v329
  %v1324 = vunpack.c.l.b16 %v330
  %v1325 = vunpack.c.l.b16 %v331
  %v1326 = vunpack.c.l.b16 %v332
  %v1327 = vunpack.c.l.b16 %v333
  %v1328 = vunpack.c.l.b16 %v334
  %v1329 = vunpack.c.l.b16 %v335
  %v1330 = vunpack.c.l.b16 %v336
  %v1331 = vunpack.c.l.b16 %v337
  %v1332 = vunpack.c.l.b16 %v338
  %v1333 = vunpack.c.l.b16 %v339
  %v1334 = vunpack.c.l.b16 %v340
  %v1335 = vpack.c.b16 %v1317, %v1316
  %v1336 = vpack.c.b16 %v1319, %v1318
  %v1337 = vpack.c.b16 %v1321, %v1320
  %v1338 = vpack.c.b16 %v1323, %v1322
  %v1339 = vpack.c.b16 %v1325, %v1324
  %v1340 = vpack.c.b16 %v1327, %v1326
  %v1341 = vpack.c.b16 %v1329, %v1328
  %v1342 = vpack.c.b16 %v1331, %v1330
  %v1343 = vpack.c.b16 %v1333, %v1332
  %v1344 = vpack.c.b16 %v1334, %v1334
  %vm1354 = vcmask 179200
  %v1356 = vsel %vm1354, %v1296, 0
  %vm1358 = vcmask 1042432
  %v1360 = vsel %vm1358, %v1344, 0
  %1362 = vmatprep.subr.bf16.mxu0 0
  %1363 = vmatpush1.bf16.msra.mxu0 %v1335
  %1364 = vmatprep.subr.bf16.mxu0 0
  %1365 = vmatpush1.bf16.msra.mxu0 %v1336
  %1366 = vmatprep.subr.bf16.mxu0 0
  %1367 = vmatpush1.bf16.msra.mxu0 %v1337
  %1368 = vmatprep.subr.bf16.mxu0 0
  %1369 = vmatpush1.bf16.msra.mxu0 %v1338
  %1370 = vmatprep.subr.bf16.mxu0 0
  %1371 = vmatpush1.bf16.msra.mxu0 %v1339
  %1372 = vmatprep.subr.bf16.mxu0 0
  %1373 = vmatpush1.bf16.msra.mxu0 %v1340
  %1374 = vmatprep.subr.bf16.mxu0 0
  %1375 = vmatpush1.bf16.msra.mxu0 %v1341
  %1376 = vmatprep.subr.bf16.mxu0 0
  %1377 = vmatpush1.bf16.msra.mxu0 %v1342
  %1378 = vmatprep.subr.bf16.mxu0 0
  %1379 = vmatpush1.bf16.msra.mxu0 %v1343
  %1380 = vmatprep.subr.bf16.mxu0 0
  %1381 = vmatpush1.bf16.msra.mxu0 %v1360
  %1382 = vmatprep.subr.bf16.mxu0 0
  %1383 = vmatpush1.bf16.msra.mxu0 0
  %1384 = vmatprep.subr.bf16.mxu0 0
  %1385 = vmatpush1.bf16.msra.mxu0 0
  %1386 = vmatprep.subr.bf16.mxu0 0
  %1387 = vmatpush1.bf16.msra.mxu0 0
  %1388 = vmatprep.subr.bf16.mxu0 0
  %1389 = vmatpush1.bf16.msra.mxu0 0
  %1390 = vmatprep.subr.bf16.mxu0 0
  %1391 = vmatpush1.bf16.msra.mxu0 0
  %1392 = vmatprep.subr.bf16.mxu0 0
  %1393 = vmatpush1.bf16.msra.mxu0 0
  %1394 = vmatprep.mubr.bf16.mxu0 %v1356
  %1395 = vmatmul.mubr.bf16.gmra.mrb[0].mxu0 %v1295
  %v1396 = vpop.f32.mrb[0].mxu0
  %v1397 = vadd.f32 0.0, %v1396
  %v1398 = vpop.f32.mrb[0].mxu0
  %v1399 = vpop.f32.mrb[0].mxu0
  %v1400 = vadd.f32 0.0, %v1399
  %v1401 = vpop.f32.mrb[0].mxu0
  %1402 = vdwg.mxu0
  %v1403 = vmul.f32 %v1397, 0.08164966
  %v1404 = vmul.f32 %v1400, 0.08164966
  %v1405 = vmul.f32 %v653, %v1283
  %v1406 = vmul.f32 %v655, %v1284
  %v1407 = vmul.f32 %v657, %v1285
  %v1408 = vmul.f32 %v659, %v1286
  %v1409 = vpack.c.bf16 %v1407, %v1405
  %v1410 = vpack.c.bf16 %v1408, %v1406
  %v1412 = vsel %vm1354, %v1410, 0
  %1414 = vmatprep.subr.bf16.mxu0 0
  %1415 = vmatpush1.bf16.msra.mxu0 %v1335
  %1416 = vmatprep.subr.bf16.mxu0 0
  %1417 = vmatpush1.bf16.msra.mxu0 %v1336
  %1418 = vmatprep.subr.bf16.mxu0 0
  %1419 = vmatpush1.bf16.msra.mxu0 %v1337
  %1420 = vmatprep.subr.bf16.mxu0 0
  %1421 = vmatpush1.bf16.msra.mxu0 %v1338
  %1422 = vmatprep.subr.bf16.mxu0 0
  %1423 = vmatpush1.bf16.msra.mxu0 %v1339
  %1424 = vmatprep.subr.bf16.mxu0 0
  %1425 = vmatpush1.bf16.msra.mxu0 %v1340
  %1426 = vmatprep.subr.bf16.mxu0 0
  %1427 = vmatpush1.bf16.msra.mxu0 %v1341
  %1428 = vmatprep.subr.bf16.mxu0 0
  %1429 = vmatpush1.bf16.msra.mxu0 %v1342
  %1430 = vmatprep.subr.bf16.mxu0 0
  %1431 = vmatpush1.bf16.msra.mxu0 %v1343
  %1432 = vmatprep.subr.bf16.mxu0 0
  %1433 = vmatpush1.bf16.msra.mxu0 %v1360
  %1434 = vmatprep.subr.bf16.mxu0 0
  %1435 = vmatpush1.bf16.msra.mxu0 0
  %1436 = vmatprep.subr.bf16.mxu0 0
  %1437 = vmatpush1.bf16.msra.mxu0 0
  %1438 = vmatprep.subr.bf16.mxu0 0
  %1439 = vmatpush1.bf16.msra.mxu0 0
  %1440 = vmatprep.subr.bf16.mxu0 0
  %1441 = vmatpush1.bf16.msra.mxu0 0
  %1442 = vmatprep.subr.bf16.mxu0 0
  %1443 = vmatpush1.bf16.msra.mxu0 0
  %1444 = vmatprep.subr.bf16.mxu0 0
  %1445 = vmatpush1.bf16.msra.mxu0 0
  %1446 = vmatprep.mubr.bf16.mxu0 %v1412
  %1447 = vmatmul.mubr.bf16.gmra.mrb[0].mxu0 %v1409
  %v1448 = vpop.f32.mrb[0].mxu0
  %v1449 = vadd.f32 0.0, %v1448
  %v1450 = vpop.f32.mrb[0].mxu0
  %v1451 = vpop.f32.mrb[0].mxu0
  %v1452 = vadd.f32 0.0, %v1451
  %v1453 = vpop.f32.mrb[0].mxu0
  %1454 = vdwg.mxu0
  %v1455 = vmul.f32 %v1449, 0.08164966
  %v1456 = vmul.f32 %v1452, 0.08164966
  %v1457 = vsub.f32 0.0, %v1403
  %v1458 = vsub.f32 0.0, %v1404
  %v1459 = vmul.f32 %v1457, 1.442695
  %v1460 = vpow.pop %v1459
  %v1461 = vmul.f32 %v1458, 1.442695
  %v1462 = vpow.pop %v1461
  %v1463 = vadd.f32 %v1460, 1.0
  %v1464 = vadd.f32 %v1462, 1.0
  %v1465 = vrcp.pop %v1463
  %v1466 = vrcp.pop %v1464
  %v1467 = vsub.f32 0.0, %v1455
  %v1468 = vsub.f32 0.0, %v1456
  %v1469 = vmul.f32 %v1467, 1.442695
  %v1470 = vpow.pop %v1469
  %v1471 = vmul.f32 %v1468, 1.442695
  %v1472 = vpow.pop %v1471
  %v1473 = vadd.f32 %v1470, 1.0
  %v1474 = vadd.f32 %v1472, 1.0
  %v1475 = vrcp.pop %v1473
  %v1476 = vrcp.pop %v1474
  %v1477 = vpack.c.bf16 %v1466, %v1465
  %v1479 = vunpack.c.l.b16 %v341
  %v1480 = vunpack.c.h.b16 %v341
  %v1481 = vpack.c.b16 %v1479, %v1479
  %v1482 = vpack.c.b16 %v1480, %v1480
  %vm1483 = vcmask 39936
  %v1485 = vsel %vm1483, %v1477, 0
  %vm1487 = vcmask 1041408
  %v1488 = vsel %vm1487, 4294967295, 65535
  %v1489 = vsel %vm1358, %v1488, 0
  %v1491 = vand.u32 %v1481, %v1489
  %v1494 = vand.u32 %v1482, %v1489
  %1496 = vmatprep.subr.bf16.mxu0 %v1494
  %1497 = vmatpush1.bf16.msra.mxu0 %v1491
  %1498 = vmatprep.subr.bf16.mxu0 0
  %1499 = vmatpush1.bf16.msra.mxu0 0
  %1500 = vmatprep.subr.bf16.mxu0 0
  %1501 = vmatpush1.bf16.msra.mxu0 0
  %1502 = vmatprep.subr.bf16.mxu0 0
  %1503 = vmatpush1.bf16.msra.mxu0 0
  %1504 = vmatprep.subr.bf16.mxu0 0
  %1505 = vmatpush1.bf16.msra.mxu0 0
  %1506 = vmatprep.subr.bf16.mxu0 0
  %1507 = vmatpush1.bf16.msra.mxu0 0
  %1508 = vmatprep.subr.bf16.mxu0 0
  %1509 = vmatpush1.bf16.msra.mxu0 0
  %1510 = vmatprep.subr.bf16.mxu0 0
  %1511 = vmatpush1.bf16.msra.mxu0 0
  %1512 = vmatprep.subr.bf16.mxu0 0
  %1513 = vmatpush1.bf16.msra.mxu0 0
  %1514 = vmatprep.subr.bf16.mxu0 0
  %1515 = vmatpush1.bf16.msra.mxu0 0
  %1516 = vmatprep.subr.bf16.mxu0 0
  %1517 = vmatpush1.bf16.msra.mxu0 0
  %1518 = vmatprep.subr.bf16.mxu0 0
  %1519 = vmatpush1.bf16.msra.mxu0 0
  %1520 = vmatprep.subr.bf16.mxu0 0
  %1521 = vmatpush1.bf16.msra.mxu0 0
  %1522 = vmatprep.subr.bf16.mxu0 0
  %1523 = vmatpush1.bf16.msra.mxu0 0
  %1524 = vmatprep.subr.bf16.mxu0 0
  %1525 = vmatpush1.bf16.msra.mxu0 0
  %1526 = vmatprep.subr.bf16.mxu0 0
  %1527 = vmatpush1.bf16.msra.mxu0 0
  %1528 = vmatprep.mubr.bf16.mxu0 0
  %1529 = vmatmul.mubr.bf16.gmra.mrb[0].mxu0 %v1485
  %v1530 = vpop.f32.mrb[0].mxu0
  %v1531 = vadd.f32 0.0, %v1530
  %v1532 = vpop.f32.mrb[0].mxu0
  %v1533 = vadd.f32 0.0, %v1532
  %v1534 = vpop.f32.mrb[0].mxu0
  %v1535 = vadd.f32 0.0, %v1534
  %v1536 = vpop.f32.mrb[0].mxu0
  %v1537 = vadd.f32 0.0, %v1536
  %1538 = vdwg.mxu0
  %v1539 = vpack.c.bf16 %v1476, %v1475
  %v1541 = vsel %vm1483, %v1539, 0
  %1543 = vmatprep.subr.bf16.mxu0 %v1494
  %1544 = vmatpush1.bf16.msra.mxu0 %v1491
  %1545 = vmatprep.subr.bf16.mxu0 0
  %1546 = vmatpush1.bf16.msra.mxu0 0
  %1547 = vmatprep.subr.bf16.mxu0 0
  %1548 = vmatpush1.bf16.msra.mxu0 0
  %1549 = vmatprep.subr.bf16.mxu0 0
  %1550 = vmatpush1.bf16.msra.mxu0 0
  %1551 = vmatprep.subr.bf16.mxu0 0
  %1552 = vmatpush1.bf16.msra.mxu0 0
  %1553 = vmatprep.subr.bf16.mxu0 0
  %1554 = vmatpush1.bf16.msra.mxu0 0
  %1555 = vmatprep.subr.bf16.mxu0 0
  %1556 = vmatpush1.bf16.msra.mxu0 0
  %1557 = vmatprep.subr.bf16.mxu0 0
  %1558 = vmatpush1.bf16.msra.mxu0 0
  %1559 = vmatprep.subr.bf16.mxu0 0
  %1560 = vmatpush1.bf16.msra.mxu0 0
  %1561 = vmatprep.subr.bf16.mxu0 0
  %1562 = vmatpush1.bf16.msra.mxu0 0
  %1563 = vmatprep.subr.bf16.mxu0 0
  %1564 = vmatpush1.bf16.msra.mxu0 0
  %1565 = vmatprep.subr.bf16.mxu0 0
  %1566 = vmatpush1.bf16.msra.mxu0 0
  %1567 = vmatprep.subr.bf16.mxu0 0
  %1568 = vmatpush1.bf16.msra.mxu0 0
  %1569 = vmatprep.subr.bf16.mxu0 0
  %1570 = vmatpush1.bf16.msra.mxu0 0
  %1571 = vmatprep.subr.bf16.mxu0 0
  %1572 = vmatpush1.bf16.msra.mxu0 0
  %1573 = vmatprep.subr.bf16.mxu0 0
  %1574 = vmatpush1.bf16.msra.mxu0 0
  %1575 = vmatprep.mubr.bf16.mxu0 0
  %1576 = vmatmul.mubr.bf16.gmra.mrb[0].mxu0 %v1541
  %v1577 = vpop.f32.mrb[0].mxu0
  %v1578 = vadd.f32 0.0, %v1577
  %v1579 = vpop.f32.mrb[0].mxu0
  %v1580 = vadd.f32 0.0, %v1579
  %v1581 = vpop.f32.mrb[0].mxu0
  %v1582 = vadd.f32 0.0, %v1581
  %v1583 = vpop.f32.mrb[0].mxu0
  %v1584 = vadd.f32 0.0, %v1583
  %1585 = vdwg.mxu0
  %v1586 = vadd.f32 %v643, %v1275
  %v1587 = vadd.f32 %v645, %v1277
  %v1588 = vadd.f32 %v647, %v1279
  %v1589 = vadd.f32 %v649, %v1281
  %v1590 = vmul.f32 %v1531, %v1287
  %v1591 = vmul.f32 %v1533, %v1288
  %v1592 = vmul.f32 %v1535, %v1289
  %v1593 = vmul.f32 %v1537, %v1290
  %v1594 = vadd.f32 %v1586, %v1590
  %v1595 = vadd.f32 %v1587, %v1591
  %v1596 = vadd.f32 %v1588, %v1592
  %v1597 = vadd.f32 %v1589, %v1593
  %v1598 = vadd.f32 %v653, %v1275
  %v1599 = vadd.f32 %v655, %v1277
  %v1600 = vadd.f32 %v657, %v1279
  %v1601 = vadd.f32 %v659, %v1281
  %v1602 = vmul.f32 %v1578, %v1287
  %v1603 = vmul.f32 %v1580, %v1288
  %v1604 = vmul.f32 %v1582, %v1289
  %v1605 = vmul.f32 %v1584, %v1290
  %v1606 = vadd.f32 %v1598, %v1602
  %v1607 = vadd.f32 %v1599, %v1603
  %v1608 = vadd.f32 %v1600, %v1604
  %v1609 = vadd.f32 %v1601, %v1605
  %v1610 = vpack.c.bf16 %v1596, %v1594
  %v1611 = vpack.c.bf16 %v1597, %v1595
  %v1612 = vpack.c.bf16 %v1608, %v1606
  %v1613 = vpack.c.bf16 %v1609, %v1607
  %v1615 = vlaneseq
  %v1616 = vshrl.u32 %v1615, 7
  %v1617 = vsub.s32 0, %v1616
  %v1618 = vrot.slane %v321, %v1617
  %v1619 = vlaneseq
  %v1620 = vshrl.u32 %v1619, 7
  %v1621 = vsub.s32 1, %v1620
  %v1622 = vrot.slane %v321, %v1621
  %v1644 = vunpack.c.l.b16 %v302
  %v1645 = vunpack.c.h.b16 %v302
  %v1646 = vunpack.c.l.b16 %v303
  %v1647 = vunpack.c.h.b16 %v303
  %v1648 = vunpack.c.l.b16 %v304
  %v1649 = vunpack.c.h.b16 %v304
  %v1650 = vunpack.c.l.b16 %v305
  %v1651 = vunpack.c.h.b16 %v305
  %v1652 = vunpack.c.l.b16 %v306
  %v1653 = vunpack.c.h.b16 %v306
  %v1654 = vunpack.c.l.b16 %v307
  %v1655 = vunpack.c.h.b16 %v307
  %v1656 = vunpack.c.l.b16 %v308
  %v1657 = vunpack.c.h.b16 %v308
  %v1658 = vunpack.c.l.b16 %v309
  %v1659 = vunpack.c.h.b16 %v309
  %v1660 = vunpack.c.l.b16 %v310
  %v1661 = vunpack.c.h.b16 %v310
  %v1662 = vunpack.c.l.b16 %v311
  %v1663 = vunpack.c.h.b16 %v311
  %v1664 = vunpack.c.l.b16 %v312
  %v1665 = vunpack.c.h.b16 %v312
  %v1666 = vunpack.c.l.b16 %v313
  %v1667 = vunpack.c.h.b16 %v313
  %v1668 = vunpack.c.l.b16 %v314
  %v1669 = vunpack.c.h.b16 %v314
  %v1670 = vunpack.c.l.b16 %v315
  %v1671 = vunpack.c.h.b16 %v315
  %v1672 = vunpack.c.l.b16 %v316
  %v1673 = vunpack.c.h.b16 %v316
  %v1674 = vunpack.c.l.b16 %v317
  %v1675 = vunpack.c.h.b16 %v317
  %v1676 = vunpack.c.l.b16 %v318
  %v1677 = vunpack.c.h.b16 %v318
  %v1678 = vunpack.c.l.b16 %v319
  %v1679 = vunpack.c.h.b16 %v319
  %v1680 = vunpack.c.l.b16 %v320
  %v1681 = vunpack.c.h.b16 %v320
  %v1682 = vpack.c.b16 %v1646, %v1644
  %v1683 = vpack.c.b16 %v1647, %v1645
  %v1684 = vpack.c.b16 %v1650, %v1648
  %v1685 = vpack.c.b16 %v1651, %v1649
  %v1686 = vpack.c.b16 %v1654, %v1652
  %v1687 = vpack.c.b16 %v1655, %v1653
  %v1688 = vpack.c.b16 %v1658, %v1656
  %v1689 = vpack.c.b16 %v1659, %v1657
  %v1690 = vpack.c.b16 %v1662, %v1660
  %v1691 = vpack.c.b16 %v1663, %v1661
  %v1692 = vpack.c.b16 %v1666, %v1664
  %v1693 = vpack.c.b16 %v1667, %v1665
  %v1694 = vpack.c.b16 %v1670, %v1668
  %v1695 = vpack.c.b16 %v1671, %v1669
  %v1696 = vpack.c.b16 %v1674, %v1672
  %v1697 = vpack.c.b16 %v1675, %v1673
  %v1698 = vpack.c.b16 %v1678, %v1676
  %v1699 = vpack.c.b16 %v1679, %v1677
  %v1700 = vpack.c.b16 %v1680, %v1680
  %v1701 = vpack.c.b16 %v1681, %v1681
  %v1721 = vsel %vm1354, %v1611, 0
  %v1724 = vsel %vm1354, %v1613, 0
  %v1727 = vsel %vm1358, %v1700, 0
  %v1730 = vsel %vm1358, %v1701, 0
  %1732 = vmatprep.subr.bf16.mxu0 %v1683
  %1733 = vmatpush1.bf16.msra.mxu0 %v1682
  %1734 = vmatprep.subr.bf16.mxu0 %v1685
  %1735 = vmatpush1.bf16.msra.mxu0 %v1684
  %1736 = vmatprep.subr.bf16.mxu0 %v1687
  %1737 = vmatpush1.bf16.msra.mxu0 %v1686
  %1738 = vmatprep.subr.bf16.mxu0 %v1689
  %1739 = vmatpush1.bf16.msra.mxu0 %v1688
  %1740 = vmatprep.subr.bf16.mxu0 %v1691
  %1741 = vmatpush1.bf16.msra.mxu0 %v1690
  %1742 = vmatprep.subr.bf16.mxu0 %v1693
  %1743 = vmatpush1.bf16.msra.mxu0 %v1692
  %1744 = vmatprep.subr.bf16.mxu0 %v1695
  %1745 = vmatpush1.bf16.msra.mxu0 %v1694
  %1746 = vmatprep.subr.bf16.mxu0 %v1697
  %1747 = vmatpush1.bf16.msra.mxu0 %v1696
  %1748 = vmatprep.subr.bf16.mxu0 %v1699
  %1749 = vmatpush1.bf16.msra.mxu0 %v1698
  %1750 = vmatprep.subr.bf16.mxu0 %v1730
  %1751 = vmatpush1.bf16.msra.mxu0 %v1727
  %1752 = vmatprep.subr.bf16.mxu0 0
  %1753 = vmatpush1.bf16.msra.mxu0 0
  %1754 = vmatprep.subr.bf16.mxu0 0
  %1755 = vmatpush1.bf16.msra.mxu0 0
  %1756 = vmatprep.subr.bf16.mxu0 0
  %1757 = vmatpush1.bf16.msra.mxu0 0
  %1758 = vmatprep.subr.bf16.mxu0 0
  %1759 = vmatpush1.bf16.msra.mxu0 0
  %1760 = vmatprep.subr.bf16.mxu0 0
  %1761 = vmatpush1.bf16.msra.mxu0 0
  %1762 = vmatprep.subr.bf16.mxu0 0
  %1763 = vmatpush1.bf16.msra.mxu0 0
  %1764 = vmatprep.mubr.bf16.mxu0 %v1721
  %1765 = vmatmul.mubr.bf16.gmra.mrb[0].mxu0 %v1610
  %v1766 = vpop.f32.mrb[0].mxu0
  %v1767 = vadd.f32 %v1618, %v1766
  %v1768 = vpop.f32.mrb[0].mxu0
  %v1769 = vadd.f32 %v1622, %v1768
  %v1770 = vpop.f32.mrb[0].mxu0
  %v1771 = vadd.f32 %v1618, %v1770
  %v1772 = vpop.f32.mrb[0].mxu0
  %v1773 = vadd.f32 %v1622, %v1772
  %1774 = vmatprep.mubr.bf16.mxu0 %v1724
  %1775 = vmatmul.mubr.bf16.gmra.mrb[0].mxu0 %v1612
  %v1776 = vpop.f32.mrb[0].mxu0
  %v1777 = vadd.f32 %v1618, %v1776
  %v1778 = vpop.f32.mrb[0].mxu0
  %v1779 = vadd.f32 %v1622, %v1778
  %v1780 = vpop.f32.mrb[0].mxu0
  %v1781 = vadd.f32 %v1618, %v1780
  %v1782 = vpop.f32.mrb[0].mxu0
  %v1783 = vadd.f32 %v1622, %v1782
  %1784 = vdwg.mxu0
  %v1785 = vmax.f32 %v1767, 0.0
  %v1786 = vmax.f32 %v1769, 0.0
  %v1787 = vmax.f32 %v1771, 0.0
  %v1788 = vmax.f32 %v1773, 0.0
  %v1789 = vmax.f32 %v1777, 0.0
  %v1790 = vmax.f32 %v1779, 0.0
  %v1791 = vmax.f32 %v1781, 0.0
  %v1792 = vmax.f32 %v1783, 0.0
  %v1793 = vadd.f32 %v1594, %v1785
  %v1794 = vadd.f32 %v1595, %v1786
  %v1795 = vadd.f32 %v1596, %v1787
  %v1796 = vadd.f32 %v1597, %v1788
  %v1797 = vadd.f32 %v1606, %v1789
  %v1798 = vadd.f32 %v1607, %v1790
  %v1799 = vadd.f32 %v1608, %v1791
  %v1800 = vadd.f32 %v1609, %v1792
  %v1801 = vpack.c.bf16 %v1795, %v1793
  %v1802 = vpack.c.bf16 %v1796, %v1794
  %v1803 = vpack.c.bf16 %v1799, %v1797
  %v1804 = vpack.c.bf16 %v1800, %v1798
  %v1805 = vld [vmem:[%s25] sm:$0xf]
  %v1806 = vld [vmem:[%s25 + $0x4] sm:$0xf]
  %v1807 = vld [vmem:[%s25 + $0x8] sm:$0xf]
  %v1808 = vld [vmem:[%s25 + $0xc] sm:$0xf]
  %v1809 = vld [vmem:[%s25 + $0x10] sm:$0xf]
  %v1810 = vld [vmem:[%s25 + $0x14] sm:$0xf]
  %v1811 = vld [vmem:[%s25 + $0x18] sm:$0xf]
  %v1812 = vld [vmem:[%s25 + $0x1c] sm:$0xf]
  %v1813 = vld [vmem:[%s25 + $0x20] sm:$0xf]
  %v1814 = vld [vmem:[%s25 + $0x24] sm:$0xf]
  %v1815 = vld [vmem:[%s25 + $0x28] sm:$0xf]
  %v1816 = vld [vmem:[%s25 + $0x2c] sm:$0xf]
  %v1817 = vld [vmem:[%s25 + $0x30] sm:$0xf]
  %v1818 = vld [vmem:[%s25 + $0x34] sm:$0xf]
  %v1819 = vld [vmem:[%s25 + $0x38] sm:$0xf]
  %v1820 = vld [vmem:[%s25 + $0x3c] sm:$0xf]
  %v1821 = vld [vmem:[%s25 + $0x40] sm:$0xf]
  %v1822 = vld [vmem:[%s25 + $0x44] sm:$0xf]
  %v1823 = vld [vmem:[%s25 + $0x48] sm:$0x7]
  %v1824 = vld [vmem:[%s27] sm:$0x1]
  %v1825 = vld [vmem:[%s29] sm:$0xf]
  %v1826 = vld [vmem:[%s29 + $0x4] sm:$0xf]
  %v1827 = vld [vmem:[%s29 + $0x8] sm:$0xf]
  %v1828 = vld [vmem:[%s29 + $0xc] sm:$0xf]
  %v1829 = vld [vmem:[%s29 + $0x10] sm:$0xf]
  %v1830 = vld [vmem:[%s29 + $0x14] sm:$0xf]
  %v1831 = vld [vmem:[%s29 + $0x18] sm:$0xf]
  %v1832 = vld [vmem:[%s29 + $0x1c] sm:$0xf]
  %v1833 = vld [vmem:[%s29 + $0x20] sm:$0xf]
  %v1834 = vld [vmem:[%s29 + $0x24] sm:$0xf]
  %v1835 = vld [vmem:[%s29 + $0x28] sm:$0xf]
  %v1836 = vld [vmem:[%s29 + $0x2c] sm:$0xf]
  %v1837 = vld [vmem:[%s29 + $0x30] sm:$0xf]
  %v1838 = vld [vmem:[%s29 + $0x34] sm:$0xf]
  %v1839 = vld [vmem:[%s29 + $0x38] sm:$0xf]
  %v1840 = vld [vmem:[%s29 + $0x3c] sm:$0xf]
  %v1841 = vld [vmem:[%s29 + $0x40] sm:$0xf]
  %v1842 = vld [vmem:[%s29 + $0x44] sm:$0xf]
  %v1843 = vld [vmem:[%s29 + $0x48] sm:$0x7]
  %v1844 = vld [vmem:[%s31] sm:$0x1]
  %v1845 = vld [vmem:[%s33] sm:$0xf]
  %v1846 = vld [vmem:[%s33 + $0x4] sm:$0xf]
  %v1847 = vld [vmem:[%s33 + $0x8] sm:$0xf]
  %v1848 = vld [vmem:[%s33 + $0xc] sm:$0xf]
  %v1849 = vld [vmem:[%s33 + $0x10] sm:$0xf]
  %v1850 = vld [vmem:[%s33 + $0x14] sm:$0xf]
  %v1851 = vld [vmem:[%s33 + $0x18] sm:$0xf]
  %v1852 = vld [vmem:[%s33 + $0x1c] sm:$0xf]
  %v1853 = vld [vmem:[%s33 + $0x20] sm:$0xf]
  %v1854 = vld [vmem:[%s33 + $0x24] sm:$0xf]
  %v1855 = vld [vmem:[%s33 + $0x28] sm:$0xf]
  %v1856 = vld [vmem:[%s33 + $0x2c] sm:$0xf]
  %v1857 = vld [vmem:[%s33 + $0x30] sm:$0xf]
  %v1858 = vld [vmem:[%s33 + $0x34] sm:$0xf]
  %v1859 = vld [vmem:[%s33 + $0x38] sm:$0xf]
  %v1860 = vld [vmem:[%s33 + $0x3c] sm:$0xf]
  %v1861 = vld [vmem:[%s33 + $0x40] sm:$0xf]
  %v1862 = vld [vmem:[%s33 + $0x44] sm:$0xf]
  %v1863 = vld [vmem:[%s33 + $0x48] sm:$0x7]
  %v1864 = vld [vmem:[%s35] sm:$0x1]
  %v1865 = vld [vmem:[%s37] sm:$0xf]
  %v1866 = vld [vmem:[%s37 + $0x4] sm:$0xf]
  %v1867 = vld [vmem:[%s37 + $0x8] sm:$0xf]
  %v1868 = vld [vmem:[%s37 + $0xc] sm:$0xf]
  %v1869 = vld [vmem:[%s37 + $0x10] sm:$0xf]
  %v1870 = vld [vmem:[%s37 + $0x14] sm:$0xf]
  %v1871 = vld [vmem:[%s37 + $0x18] sm:$0x1]
  %v1872 = vld [vmem:[%s39] sm:$0x1]
  %v1873 = vld [vmem:[%s41] sm:$0xf]
  %v1874 = vld [vmem:[%s41 + $0x4] sm:$0xf]
  %v1875 = vld [vmem:[%s41 + $0x8] sm:$0xf]
  %v1876 = vld [vmem:[%s41 + $0xc] sm:$0xf]
  %v1877 = vld [vmem:[%s41 + $0x10] sm:$0xf]
  %v1878 = vld [vmem:[%s41 + $0x14] sm:$0xf]
  %v1879 = vld [vmem:[%s41 + $0x18] sm:$0x1]
  %v1880 = vld [vmem:[%s43] sm:$0x7]
  %v1882 = vlaneseq
  %v1883 = vshrl.u32 %v1882, 7
  %v1884 = vsub.s32 0, %v1883
  %v1885 = vrot.slane %v1824, %v1884
  %v1906 = vunpack.c.l.b16 %v1805
  %v1907 = vunpack.c.l.b16 %v1806
  %v1908 = vunpack.c.l.b16 %v1807
  %v1909 = vunpack.c.l.b16 %v1808
  %v1910 = vunpack.c.l.b16 %v1809
  %v1911 = vunpack.c.l.b16 %v1810
  %v1912 = vunpack.c.l.b16 %v1811
  %v1913 = vunpack.c.l.b16 %v1812
  %v1914 = vunpack.c.l.b16 %v1813
  %v1915 = vunpack.c.l.b16 %v1814
  %v1916 = vunpack.c.l.b16 %v1815
  %v1917 = vunpack.c.l.b16 %v1816
  %v1918 = vunpack.c.l.b16 %v1817
  %v1919 = vunpack.c.l.b16 %v1818
  %v1920 = vunpack.c.l.b16 %v1819
  %v1921 = vunpack.c.l.b16 %v1820
  %v1922 = vunpack.c.l.b16 %v1821
  %v1923 = vunpack.c.l.b16 %v1822
  %v1924 = vunpack.c.l.b16 %v1823
  %v1925 = vpack.c.b16 %v1907, %v1906
  %v1926 = vpack.c.b16 %v1909, %v1908
  %v1927 = vpack.c.b16 %v1911, %v1910
  %v1928 = vpack.c.b16 %v1913, %v1912
  %v1929 = vpack.c.b16 %v1915, %v1914
  %v1930 = vpack.c.b16 %v1917, %v1916
  %v1931 = vpack.c.b16 %v1919, %v1918
  %v1932 = vpack.c.b16 %v1921, %v1920
  %v1933 = vpack.c.b16 %v1923, %v1922
  %v1934 = vpack.c.b16 %v1924, %v1924
  %v1945 = vsel %vm1354, %v1802, 0
  %v1948 = vsel %vm1354, %v1804, 0
  %v1951 = vsel %vm1358, %v1934, 0
  %1953 = vmatprep.subr.bf16.mxu0 0
  %1954 = vmatpush1.bf16.msra.mxu0 %v1925
  %1955 = vmatprep.subr.bf16.mxu0 0
  %1956 = vmatpush1.bf16.msra.mxu0 %v1926
  %1957 = vmatprep.subr.bf16.mxu0 0
  %1958 = vmatpush1.bf16.msra.mxu0 %v1927
  %1959 = vmatprep.subr.bf16.mxu0 0
  %1960 = vmatpush1.bf16.msra.mxu0 %v1928
  %1961 = vmatprep.subr.bf16.mxu0 0
  %1962 = vmatpush1.bf16.msra.mxu0 %v1929
  %1963 = vmatprep.subr.bf16.mxu0 0
  %1964 = vmatpush1.bf16.msra.mxu0 %v1930
  %1965 = vmatprep.subr.bf16.mxu0 0
  %1966 = vmatpush1.bf16.msra.mxu0 %v1931
  %1967 = vmatprep.subr.bf16.mxu0 0
  %1968 = vmatpush1.bf16.msra.mxu0 %v1932
  %1969 = vmatprep.subr.bf16.mxu0 0
  %1970 = vmatpush1.bf16.msra.mxu0 %v1933
  %1971 = vmatprep.subr.bf16.mxu0 0
  %1972 = vmatpush1.bf16.msra.mxu0 %v1951
  %1973 = vmatprep.subr.bf16.mxu0 0
  %1974 = vmatpush1.bf16.msra.mxu0 0
  %1975 = vmatprep.subr.bf16.mxu0 0
  %1976 = vmatpush1.bf16.msra.mxu0 0
  %1977 = vmatprep.subr.bf16.mxu0 0
  %1978 = vmatpush1.bf16.msra.mxu0 0
  %1979 = vmatprep.subr.bf16.mxu0 0
  %1980 = vmatpush1.bf16.msra.mxu0 0
  %1981 = vmatprep.subr.bf16.mxu0 0
  %1982 = vmatpush1.bf16.msra.mxu0 0
  %1983 = vmatprep.subr.bf16.mxu0 0
  %1984 = vmatpush1.bf16.msra.mxu0 0
  %1985 = vmatprep.mubr.bf16.mxu0 %v1945
  %1986 = vmatmul.mubr.bf16.gmra.mrb[0].mxu0 %v1801
  %v1987 = vpop.f32.mrb[0].mxu0
  %v1988 = vadd.f32 %v1885, %v1987
  %v1989 = vpop.f32.mrb[0].mxu0
  %v1990 = vpop.f32.mrb[0].mxu0
  %v1991 = vadd.f32 %v1885, %v1990
  %v1992 = vpop.f32.mrb[0].mxu0
  %1993 = vmatprep.mubr.bf16.mxu0 %v1948
  %1994 = vmatmul.mubr.bf16.gmra.mrb[0].mxu0 %v1803
  %v1995 = vpop.f32.mrb[0].mxu0
  %v1996 = vadd.f32 %v1885, %v1995
  %v1997 = vpop.f32.mrb[0].mxu0
  %v1998 = vpop.f32.mrb[0].mxu0
  %v1999 = vadd.f32 %v1885, %v1998
  %v2000 = vpop.f32.mrb[0].mxu0
  %2001 = vdwg.mxu0
  %v2003 = vlaneseq
  %v2004 = vshrl.u32 %v2003, 7
  %v2005 = vsub.s32 0, %v2004
  %v2006 = vrot.slane %v1844, %v2005
  %v2027 = vunpack.c.l.b16 %v1825
  %v2028 = vunpack.c.l.b16 %v1826
  %v2029 = vunpack.c.l.b16 %v1827
  %v2030 = vunpack.c.l.b16 %v1828
  %v2031 = vunpack.c.l.b16 %v1829
  %v2032 = vunpack.c.l.b16 %v1830
  %v2033 = vunpack.c.l.b16 %v1831
  %v2034 = vunpack.c.l.b16 %v1832
  %v2035 = vunpack.c.l.b16 %v1833
  %v2036 = vunpack.c.l.b16 %v1834
  %v2037 = vunpack.c.l.b16 %v1835
  %v2038 = vunpack.c.l.b16 %v1836
  %v2039 = vunpack.c.l.b16 %v1837
  %v2040 = vunpack.c.l.b16 %v1838
  %v2041 = vunpack.c.l.b16 %v1839
  %v2042 = vunpack.c.l.b16 %v1840
  %v2043 = vunpack.c.l.b16 %v1841
  %v2044 = vunpack.c.l.b16 %v1842
  %v2045 = vunpack.c.l.b16 %v1843
  %v2046 = vpack.c.b16 %v2028, %v2027
  %v2047 = vpack.c.b16 %v2030, %v2029
  %v2048 = vpack.c.b16 %v2032, %v2031
  %v2049 = vpack.c.b16 %v2034, %v2033
  %v2050 = vpack.c.b16 %v2036, %v2035
  %v2051 = vpack.c.b16 %v2038, %v2037
  %v2052 = vpack.c.b16 %v2040, %v2039
  %v2053 = vpack.c.b16 %v2042, %v2041
  %v2054 = vpack.c.b16 %v2044, %v2043
  %v2055 = vpack.c.b16 %v2045, %v2045
  %v2066 = vsel %vm1358, %v2055, 0
  %2068 = vmatprep.subr.bf16.mxu0 0
  %2069 = vmatpush1.bf16.msra.mxu0 %v2046
  %2070 = vmatprep.subr.bf16.mxu0 0
  %2071 = vmatpush1.bf16.msra.mxu0 %v2047
  %2072 = vmatprep.subr.bf16.mxu0 0
  %2073 = vmatpush1.bf16.msra.mxu0 %v2048
  %2074 = vmatprep.subr.bf16.mxu0 0
  %2075 = vmatpush1.bf16.msra.mxu0 %v2049
  %2076 = vmatprep.subr.bf16.mxu0 0
  %2077 = vmatpush1.bf16.msra.mxu0 %v2050
  %2078 = vmatprep.subr.bf16.mxu0 0
  %2079 = vmatpush1.bf16.msra.mxu0 %v2051
  %2080 = vmatprep.subr.bf16.mxu0 0
  %2081 = vmatpush1.bf16.msra.mxu0 %v2052
  %2082 = vmatprep.subr.bf16.mxu0 0
  %2083 = vmatpush1.bf16.msra.mxu0 %v2053
  %2084 = vmatprep.subr.bf16.mxu0 0
  %2085 = vmatpush1.bf16.msra.mxu0 %v2054
  %2086 = vmatprep.subr.bf16.mxu0 0
  %2087 = vmatpush1.bf16.msra.mxu0 %v2066
  %2088 = vmatprep.subr.bf16.mxu0 0
  %2089 = vmatpush1.bf16.msra.mxu0 0
  %2090 = vmatprep.subr.bf16.mxu0 0
  %2091 = vmatpush1.bf16.msra.mxu0 0
  %2092 = vmatprep.subr.bf16.mxu0 0
  %2093 = vmatpush1.bf16.msra.mxu0 0
  %2094 = vmatprep.subr.bf16.mxu0 0
  %2095 = vmatpush1.bf16.msra.mxu0 0
  %2096 = vmatprep.subr.bf16.mxu0 0
  %2097 = vmatpush1.bf16.msra.mxu0 0
  %2098 = vmatprep.subr.bf16.mxu0 0
  %2099 = vmatpush1.bf16.msra.mxu0 0
  %2100 = vmatprep.mubr.bf16.mxu0 %v1945
  %2101 = vmatmul.mubr.bf16.gmra.mrb[0].mxu0 %v1801
  %v2102 = vpop.f32.mrb[0].mxu0
  %v2103 = vadd.f32 %v2006, %v2102
  %v2104 = vpop.f32.mrb[0].mxu0
  %v2105 = vpop.f32.mrb[0].mxu0
  %v2106 = vadd.f32 %v2006, %v2105
  %v2107 = vpop.f32.mrb[0].mxu0
  %2108 = vmatprep.mubr.bf16.mxu0 %v1948
  %2109 = vmatmul.mubr.bf16.gmra.mrb[0].mxu0 %v1803
  %v2110 = vpop.f32.mrb[0].mxu0
  %v2111 = vadd.f32 %v2006, %v2110
  %v2112 = vpop.f32.mrb[0].mxu0
  %v2113 = vpop.f32.mrb[0].mxu0
  %v2114 = vadd.f32 %v2006, %v2113
  %v2115 = vpop.f32.mrb[0].mxu0
  %2116 = vdwg.mxu0
  %v2118 = vlaneseq
  %v2119 = vshrl.u32 %v2118, 7
  %v2120 = vsub.s32 0, %v2119
  %v2121 = vrot.slane %v1864, %v2120
  %v2142 = vunpack.c.l.b16 %v1845
  %v2143 = vunpack.c.l.b16 %v1846
  %v2144 = vunpack.c.l.b16 %v1847
  %v2145 = vunpack.c.l.b16 %v1848
  %v2146 = vunpack.c.l.b16 %v1849
  %v2147 = vunpack.c.l.b16 %v1850
  %v2148 = vunpack.c.l.b16 %v1851
  %v2149 = vunpack.c.l.b16 %v1852
  %v2150 = vunpack.c.l.b16 %v1853
  %v2151 = vunpack.c.l.b16 %v1854
  %v2152 = vunpack.c.l.b16 %v1855
  %v2153 = vunpack.c.l.b16 %v1856
  %v2154 = vunpack.c.l.b16 %v1857
  %v2155 = vunpack.c.l.b16 %v1858
  %v2156 = vunpack.c.l.b16 %v1859
  %v2157 = vunpack.c.l.b16 %v1860
  %v2158 = vunpack.c.l.b16 %v1861
  %v2159 = vunpack.c.l.b16 %v1862
  %v2160 = vunpack.c.l.b16 %v1863
  %v2161 = vpack.c.b16 %v2143, %v2142
  %v2162 = vpack.c.b16 %v2145, %v2144
  %v2163 = vpack.c.b16 %v2147, %v2146
  %v2164 = vpack.c.b16 %v2149, %v2148
  %v2165 = vpack.c.b16 %v2151, %v2150
  %v2166 = vpack.c.b16 %v2153, %v2152
  %v2167 = vpack.c.b16 %v2155, %v2154
  %v2168 = vpack.c.b16 %v2157, %v2156
  %v2169 = vpack.c.b16 %v2159, %v2158
  %v2170 = vpack.c.b16 %v2160, %v2160
  %v2181 = vsel %vm1358, %v2170, 0
  %2183 = vmatprep.subr.bf16.mxu0 0
  %2184 = vmatpush1.bf16.msra.mxu0 %v2161
  %2185 = vmatprep.subr.bf16.mxu0 0
  %2186 = vmatpush1.bf16.msra.mxu0 %v2162
  %2187 = vmatprep.subr.bf16.mxu0 0
  %2188 = vmatpush1.bf16.msra.mxu0 %v2163
  %2189 = vmatprep.subr.bf16.mxu0 0
  %2190 = vmatpush1.bf16.msra.mxu0 %v2164
  %2191 = vmatprep.subr.bf16.mxu0 0
  %2192 = vmatpush1.bf16.msra.mxu0 %v2165
  %2193 = vmatprep.subr.bf16.mxu0 0
  %2194 = vmatpush1.bf16.msra.mxu0 %v2166
  %2195 = vmatprep.subr.bf16.mxu0 0
  %2196 = vmatpush1.bf16.msra.mxu0 %v2167
  %2197 = vmatprep.subr.bf16.mxu0 0
  %2198 = vmatpush1.bf16.msra.mxu0 %v2168
  %2199 = vmatprep.subr.bf16.mxu0 0
  %2200 = vmatpush1.bf16.msra.mxu0 %v2169
  %2201 = vmatprep.subr.bf16.mxu0 0
  %2202 = vmatpush1.bf16.msra.mxu0 %v2181
  %2203 = vmatprep.subr.bf16.mxu0 0
  %2204 = vmatpush1.bf16.msra.mxu0 0
  %2205 = vmatprep.subr.bf16.mxu0 0
  %2206 = vmatpush1.bf16.msra.mxu0 0
  %2207 = vmatprep.subr.bf16.mxu0 0
  %2208 = vmatpush1.bf16.msra.mxu0 0
  %2209 = vmatprep.subr.bf16.mxu0 0
  %2210 = vmatpush1.bf16.msra.mxu0 0
  %2211 = vmatprep.subr.bf16.mxu0 0
  %2212 = vmatpush1.bf16.msra.mxu0 0
  %2213 = vmatprep.subr.bf16.mxu0 0
  %2214 = vmatpush1.bf16.msra.mxu0 0
  %2215 = vmatprep.mubr.bf16.mxu0 %v1945
  %2216 = vmatmul.mubr.bf16.gmra.mrb[0].mxu0 %v1801
  %v2217 = vpop.f32.mrb[0].mxu0
  %v2218 = vadd.f32 %v2121, %v2217
  %v2219 = vpop.f32.mrb[0].mxu0
  %v2220 = vpop.f32.mrb[0].mxu0
  %v2221 = vadd.f32 %v2121, %v2220
  %v2222 = vpop.f32.mrb[0].mxu0
  %2223 = vmatprep.mubr.bf16.mxu0 %v1948
  %2224 = vmatmul.mubr.bf16.gmra.mrb[0].mxu0 %v1803
  %v2225 = vpop.f32.mrb[0].mxu0
  %v2226 = vadd.f32 %v2121, %v2225
  %v2227 = vpop.f32.mrb[0].mxu0
  %v2228 = vpop.f32.mrb[0].mxu0
  %v2229 = vadd.f32 %v2121, %v2228
  %v2230 = vpop.f32.mrb[0].mxu0
  %2231 = vdwg.mxu0
  %v2232 = vsub.f32 %v2103, %v2111
  %v2233 = vsub.f32 %v2106, %v2114
  %v2234 = vsub.f32 %v2218, %v2226
  %v2235 = vsub.f32 %v2221, %v2229
  %v2236 = vmul.f32 %v1988, %v2232
  %v2237 = vmul.f32 %v1991, %v2233
  %v2238 = vpack.c.bf16 %v2237, %v2236
  %v2246 = vunpack.c.l.b16 %v1873
  %v2247 = vunpack.c.l.b16 %v1874
  %v2248 = vunpack.c.l.b16 %v1875
  %v2249 = vunpack.c.l.b16 %v1876
  %v2250 = vunpack.c.l.b16 %v1877
  %v2251 = vunpack.c.l.b16 %v1878
  %v2252 = vunpack.c.l.b16 %v1879
  %v2253 = vpack.c.b16 %v2247, %v2246
  %v2254 = vpack.c.b16 %v2249, %v2248
  %v2255 = vpack.c.b16 %v2251, %v2250
  %v2256 = vpack.c.b16 %v2252, %v2252
  %vm2260 = vcmask 408576
  %v2262 = vsel %vm2260, %v2238, 0
  %vm2264 = vcmask 1040384
  %v2266 = vsel %vm2264, %v2256, 0
  %2268 = vmatprep.subr.bf16.mxu0 0
  %2269 = vmatpush1.bf16.msra.mxu0 %v2253
  %2270 = vmatprep.subr.bf16.mxu0 0
  %2271 = vmatpush1.bf16.msra.mxu0 %v2254
  %2272 = vmatprep.subr.bf16.mxu0 0
  %2273 = vmatpush1.bf16.msra.mxu0 %v2255
  %2274 = vmatprep.subr.bf16.mxu0 0
  %2275 = vmatpush1.bf16.msra.mxu0 %v2266
  %2276 = vmatprep.subr.bf16.mxu0 0
  %2277 = vmatpush1.bf16.msra.mxu0 0
  %2278 = vmatprep.subr.bf16.mxu0 0
  %2279 = vmatpush1.bf16.msra.mxu0 0
  %2280 = vmatprep.subr.bf16.mxu0 0
  %2281 = vmatpush1.bf16.msra.mxu0 0
  %2282 = vmatprep.subr.bf16.mxu0 0
  %2283 = vmatpush1.bf16.msra.mxu0 0
  %2284 = vmatprep.subr.bf16.mxu0 0
  %2285 = vmatpush1.bf16.msra.mxu0 0
  %2286 = vmatprep.subr.bf16.mxu0 0
  %2287 = vmatpush1.bf16.msra.mxu0 0
  %2288 = vmatprep.subr.bf16.mxu0 0
  %2289 = vmatpush1.bf16.msra.mxu0 0
  %2290 = vmatprep.subr.bf16.mxu0 0
  %2291 = vmatpush1.bf16.msra.mxu0 0
  %2292 = vmatprep.subr.bf16.mxu0 0
  %2293 = vmatpush1.bf16.msra.mxu0 0
  %2294 = vmatprep.subr.bf16.mxu0 0
  %2295 = vmatpush1.bf16.msra.mxu0 0
  %2296 = vmatprep.subr.bf16.mxu0 0
  %2297 = vmatpush1.bf16.msra.mxu0 0
  %2298 = vmatprep.subr.bf16.mxu0 0
  %2299 = vmatpush1.bf16.msra.mxu0 0
  %2300 = vmatprep.mubr.bf16.mxu0 0
  %2301 = vmatmul.mubr.bf16.gmra.mrb[0].mxu0 %v2262
  %v2302 = vpop.f32.mrb[0].mxu0
  %v2303 = vadd.f32 0.0, %v2302
  %v2304 = vpop.f32.mrb[0].mxu0
  %v2305 = vpop.f32.mrb[0].mxu0
  %v2306 = vadd.f32 0.0, %v2305
  %v2307 = vpop.f32.mrb[0].mxu0
  %2308 = vdwg.mxu0
  %v2309 = vmul.f32 %v2303, 0.14142136
  %v2310 = vmul.f32 %v2306, 0.14142136
  %v2311 = vmul.f32 %v1996, %v2232
  %v2312 = vmul.f32 %v1999, %v2233
  %v2313 = vpack.c.bf16 %v2312, %v2311
  %v2315 = vsel %vm2260, %v2313, 0
  %2317 = vmatprep.subr.bf16.mxu0 0
  %2318 = vmatpush1.bf16.msra.mxu0 %v2253
  %2319 = vmatprep.subr.bf16.mxu0 0
  %2320 = vmatpush1.bf16.msra.mxu0 %v2254
  %2321 = vmatprep.subr.bf16.mxu0 0
  %2322 = vmatpush1.bf16.msra.mxu0 %v2255
  %2323 = vmatprep.subr.bf16.mxu0 0
  %2324 = vmatpush1.bf16.msra.mxu0 %v2266
  %2325 = vmatprep.subr.bf16.mxu0 0
  %2326 = vmatpush1.bf16.msra.mxu0 0
  %2327 = vmatprep.subr.bf16.mxu0 0
  %2328 = vmatpush1.bf16.msra.mxu0 0
  %2329 = vmatprep.subr.bf16.mxu0 0
  %2330 = vmatpush1.bf16.msra.mxu0 0
  %2331 = vmatprep.subr.bf16.mxu0 0
  %2332 = vmatpush1.bf16.msra.mxu0 0
  %2333 = vmatprep.subr.bf16.mxu0 0
  %2334 = vmatpush1.bf16.msra.mxu0 0
  %2335 = vmatprep.subr.bf16.mxu0 0
  %2336 = vmatpush1.bf16.msra.mxu0 0
  %2337 = vmatprep.subr.bf16.mxu0 0
  %2338 = vmatpush1.bf16.msra.mxu0 0
  %2339 = vmatprep.subr.bf16.mxu0 0
  %2340 = vmatpush1.bf16.msra.mxu0 0
  %2341 = vmatprep.subr.bf16.mxu0 0
  %2342 = vmatpush1.bf16.msra.mxu0 0
  %2343 = vmatprep.subr.bf16.mxu0 0
  %2344 = vmatpush1.bf16.msra.mxu0 0
  %2345 = vmatprep.subr.bf16.mxu0 0
  %2346 = vmatpush1.bf16.msra.mxu0 0
  %2347 = vmatprep.subr.bf16.mxu0 0
  %2348 = vmatpush1.bf16.msra.mxu0 0
  %2349 = vmatprep.mubr.bf16.mxu0 0
  %2350 = vmatmul.mubr.bf16.gmra.mrb[0].mxu0 %v2315
  %v2351 = vpop.f32.mrb[0].mxu0
  %v2352 = vadd.f32 0.0, %v2351
  %v2353 = vpop.f32.mrb[0].mxu0
  %v2354 = vpop.f32.mrb[0].mxu0
  %v2355 = vadd.f32 0.0, %v2354
  %v2356 = vpop.f32.mrb[0].mxu0
  %2357 = vdwg.mxu0
  %v2358 = vmul.f32 %v2352, 0.14142136
  %v2359 = vmul.f32 %v2355, 0.14142136
  %v2360 = vsub.f32 0.0, %v2309
  %v2361 = vsub.f32 0.0, %v2310
  %v2362 = vmul.f32 %v2360, 1.442695
  %v2363 = vpow.pop %v2362
  %v2364 = vmul.f32 %v2361, 1.442695
  %v2365 = vpow.pop %v2364
  %v2366 = vadd.f32 %v2363, 1.0
  %v2367 = vadd.f32 %v2365, 1.0
  %v2368 = vrcp.pop %v2366
  %v2369 = vrcp.pop %v2367
  %v2370 = vsub.f32 0.0, %v2358
  %v2371 = vsub.f32 0.0, %v2359
  %v2372 = vmul.f32 %v2370, 1.442695
  %v2373 = vpow.pop %v2372
  %v2374 = vmul.f32 %v2371, 1.442695
  %v2375 = vpow.pop %v2374
  %v2376 = vadd.f32 %v2373, 1.0
  %v2377 = vadd.f32 %v2375, 1.0
  %v2378 = vrcp.pop %v2376
  %v2379 = vrcp.pop %v2377
  %v2380 = vpack.c.bf16 %v2369, %v2368
  %v2382 = vsel %vm1483, %v2380, 0
  %v2385 = vand.u32 %v1880, %v1489
  %2387 = vmatprep.subr.bf16.mxu0 0
  %2388 = vmatpush1.bf16.msra.mxu0 %v2385
  %2389 = vmatprep.subr.bf16.mxu0 0
  %2390 = vmatpush1.bf16.msra.mxu0 0
  %2391 = vmatprep.subr.bf16.mxu0 0
  %2392 = vmatpush1.bf16.msra.mxu0 0
  %2393 = vmatprep.subr.bf16.mxu0 0
  %2394 = vmatpush1.bf16.msra.mxu0 0
  %2395 = vmatprep.subr.bf16.mxu0 0
  %2396 = vmatpush1.bf16.msra.mxu0 0
  %2397 = vmatprep.subr.bf16.mxu0 0
  %2398 = vmatpush1.bf16.msra.mxu0 0
  %2399 = vmatprep.subr.bf16.mxu0 0
  %2400 = vmatpush1.bf16.msra.mxu0 0
  %2401 = vmatprep.subr.bf16.mxu0 0
  %2402 = vmatpush1.bf16.msra.mxu0 0
  %2403 = vmatprep.subr.bf16.mxu0 0
  %2404 = vmatpush1.bf16.msra.mxu0 0
  %2405 = vmatprep.subr.bf16.mxu0 0
  %2406 = vmatpush1.bf16.msra.mxu0 0
  %2407 = vmatprep.subr.bf16.mxu0 0
  %2408 = vmatpush1.bf16.msra.mxu0 0
  %2409 = vmatprep.subr.bf16.mxu0 0
  %2410 = vmatpush1.bf16.msra.mxu0 0
  %2411 = vmatprep.subr.bf16.mxu0 0
  %2412 = vmatpush1.bf16.msra.mxu0 0
  %2413 = vmatprep.subr.bf16.mxu0 0
  %2414 = vmatpush1.bf16.msra.mxu0 0
  %2415 = vmatprep.subr.bf16.mxu0 0
  %2416 = vmatpush1.bf16.msra.mxu0 0
  %2417 = vmatprep.subr.bf16.mxu0 0
  %2418 = vmatpush1.bf16.msra.mxu0 0
  %2419 = vmatprep.mubr.bf16.mxu0 0
  %2420 = vmatmul.mubr.bf16.gmra.mrb[0].mxu0 %v2382
  %v2421 = vpop.f32.mrb[0].mxu0
  %v2422 = vadd.f32 0.0, %v2421
  %v2423 = vpop.f32.mrb[0].mxu0
  %v2424 = vpop.f32.mrb[0].mxu0
  %v2425 = vadd.f32 0.0, %v2424
  %v2426 = vpop.f32.mrb[0].mxu0
  %2427 = vdwg.mxu0
  %v2428 = vpack.c.bf16 %v2379, %v2378
  %v2430 = vsel %vm1483, %v2428, 0
  %2432 = vmatprep.subr.bf16.mxu0 0
  %2433 = vmatpush1.bf16.msra.mxu0 %v2385
  %2434 = vmatprep.subr.bf16.mxu0 0
  %2435 = vmatpush1.bf16.msra.mxu0 0
  %2436 = vmatprep.subr.bf16.mxu0 0
  %2437 = vmatpush1.bf16.msra.mxu0 0
  %2438 = vmatprep.subr.bf16.mxu0 0
  %2439 = vmatpush1.bf16.msra.mxu0 0
  %2440 = vmatprep.subr.bf16.mxu0 0
  %2441 = vmatpush1.bf16.msra.mxu0 0
  %2442 = vmatprep.subr.bf16.mxu0 0
  %2443 = vmatpush1.bf16.msra.mxu0 0
  %2444 = vmatprep.subr.bf16.mxu0 0
  %2445 = vmatpush1.bf16.msra.mxu0 0
  %2446 = vmatprep.subr.bf16.mxu0 0
  %2447 = vmatpush1.bf16.msra.mxu0 0
  %2448 = vmatprep.subr.bf16.mxu0 0
  %2449 = vmatpush1.bf16.msra.mxu0 0
  %2450 = vmatprep.subr.bf16.mxu0 0
  %2451 = vmatpush1.bf16.msra.mxu0 0
  %2452 = vmatprep.subr.bf16.mxu0 0
  %2453 = vmatpush1.bf16.msra.mxu0 0
  %2454 = vmatprep.subr.bf16.mxu0 0
  %2455 = vmatpush1.bf16.msra.mxu0 0
  %2456 = vmatprep.subr.bf16.mxu0 0
  %2457 = vmatpush1.bf16.msra.mxu0 0
  %2458 = vmatprep.subr.bf16.mxu0 0
  %2459 = vmatpush1.bf16.msra.mxu0 0
  %2460 = vmatprep.subr.bf16.mxu0 0
  %2461 = vmatpush1.bf16.msra.mxu0 0
  %2462 = vmatprep.subr.bf16.mxu0 0
  %2463 = vmatpush1.bf16.msra.mxu0 0
  %2464 = vmatprep.mubr.bf16.mxu0 0
  %2465 = vmatmul.mubr.bf16.gmra.mrb[0].mxu0 %v2430
  %v2466 = vpop.f32.mrb[0].mxu0
  %v2467 = vadd.f32 0.0, %v2466
  %v2468 = vpop.f32.mrb[0].mxu0
  %v2469 = vpop.f32.mrb[0].mxu0
  %v2470 = vadd.f32 0.0, %v2469
  %v2471 = vpop.f32.mrb[0].mxu0
  %2472 = vdwg.mxu0
  %v2473 = vadd.f32 %v1988, %v2226
  %v2474 = vadd.f32 %v1991, %v2229
  %v2475 = vmul.f32 %v2422, %v2234
  %v2476 = vmul.f32 %v2425, %v2235
  %v2477 = vadd.f32 %v2473, %v2475
  %v2478 = vadd.f32 %v2474, %v2476
  %v2479 = vadd.f32 %v1996, %v2226
  %v2480 = vadd.f32 %v1999, %v2229
  %v2481 = vmul.f32 %v2467, %v2234
  %v2482 = vmul.f32 %v2470, %v2235
  %v2483 = vadd.f32 %v2479, %v2481
  %v2484 = vadd.f32 %v2480, %v2482
  %v2485 = vpack.c.bf16 %v2478, %v2477
  %v2486 = vpack.c.bf16 %v2484, %v2483
  %v2488 = vlaneseq
  %v2489 = vshrl.u32 %v2488, 7
  %v2490 = vsub.s32 0, %v2489
  %v2491 = vrot.slane %v1872, %v2490
  %v2500 = vunpack.c.l.b16 %v1865
  %v2501 = vunpack.c.l.b16 %v1866
  %v2502 = vunpack.c.l.b16 %v1867
  %v2503 = vunpack.c.l.b16 %v1868
  %v2504 = vunpack.c.l.b16 %v1869
  %v2505 = vunpack.c.l.b16 %v1870
  %v2506 = vunpack.c.l.b16 %v1871
  %v2507 = vpack.c.b16 %v2501, %v2500
  %v2508 = vpack.c.b16 %v2503, %v2502
  %v2509 = vpack.c.b16 %v2505, %v2504
  %v2510 = vpack.c.b16 %v2506, %v2506
  %v2515 = vsel %vm2260, %v2485, 0
  %v2518 = vsel %vm2260, %v2486, 0
  %v2521 = vsel %vm2264, %v2510, 0
  %2523 = vmatprep.subr.bf16.mxu0 0
  %2524 = vmatpush1.bf16.msra.mxu0 %v2507
  %2525 = vmatprep.subr.bf16.mxu0 0
  %2526 = vmatpush1.bf16.msra.mxu0 %v2508
  %2527 = vmatprep.subr.bf16.mxu0 0
  %2528 = vmatpush1.bf16.msra.mxu0 %v2509
  %2529 = vmatprep.subr.bf16.mxu0 0
  %2530 = vmatpush1.bf16.msra.mxu0 %v2521
  %2531 = vmatprep.subr.bf16.mxu0 0
  %2532 = vmatpush1.bf16.msra.mxu0 0
  %2533 = vmatprep.subr.bf16.mxu0 0
  %2534 = vmatpush1.bf16.msra.mxu0 0
  %2535 = vmatprep.subr.bf16.mxu0 0
  %2536 = vmatpush1.bf16.msra.mxu0 0
  %2537 = vmatprep.subr.bf16.mxu0 0
  %2538 = vmatpush1.bf16.msra.mxu0 0
  %2539 = vmatprep.subr.bf16.mxu0 0
  %2540 = vmatpush1.bf16.msra.mxu0 0
  %2541 = vmatprep.subr.bf16.mxu0 0
  %2542 = vmatpush1.bf16.msra.mxu0 0
  %2543 = vmatprep.subr.bf16.mxu0 0
  %2544 = vmatpush1.bf16.msra.mxu0 0
  %2545 = vmatprep.subr.bf16.mxu0 0
  %2546 = vmatpush1.bf16.msra.mxu0 0
  %2547 = vmatprep.subr.bf16.mxu0 0
  %2548 = vmatpush1.bf16.msra.mxu0 0
  %2549 = vmatprep.subr.bf16.mxu0 0
  %2550 = vmatpush1.bf16.msra.mxu0 0
  %2551 = vmatprep.subr.bf16.mxu0 0
  %2552 = vmatpush1.bf16.msra.mxu0 0
  %2553 = vmatprep.subr.bf16.mxu0 0
  %2554 = vmatpush1.bf16.msra.mxu0 0
  %2555 = vmatprep.mubr.bf16.mxu0 0
  %2556 = vmatmul.mubr.bf16.gmra.mrb[0].mxu0 %v2515
  %v2557 = vpop.f32.mrb[0].mxu0
  %v2558 = vadd.f32 %v2491, %v2557
  %v2559 = vpop.f32.mrb[0].mxu0
  %v2560 = vpop.f32.mrb[0].mxu0
  %v2561 = vadd.f32 %v2491, %v2560
  %v2562 = vpop.f32.mrb[0].mxu0
  %2563 = vmatprep.mubr.bf16.mxu0 0
  %2564 = vmatmul.mubr.bf16.gmra.mrb[0].mxu0 %v2518
  %v2565 = vpop.f32.mrb[0].mxu0
  %v2566 = vadd.f32 %v2491, %v2565
  %v2567 = vpop.f32.mrb[0].mxu0
  %v2568 = vpop.f32.mrb[0].mxu0
  %v2569 = vadd.f32 %v2491, %v2568
  %v2570 = vpop.f32.mrb[0].mxu0
  %2571 = vdwg.mxu0
  %v2572 = vmax.f32 %v2558, 0.0
  %v2573 = vmax.f32 %v2561, 0.0
  %v2574 = vmax.f32 %v2566, 0.0
  %v2575 = vmax.f32 %v2569, 0.0
  %v2576 = vadd.f32 %v2477, %v2572
  %v2577 = vadd.f32 %v2478, %v2573
  %v2578 = vadd.f32 %v2483, %v2574
  %v2579 = vadd.f32 %v2484, %v2575
  %v2580 = vld [vmem:[%s45] sm:$0x1]
  %v2581 = vpack.c.bf16 %v2577, %v2576
  %v2582 = vpack.c.bf16 %v2579, %v2578
  %v2583 = vld [vmem:[%s47] sm:$0xf]
  %v2584 = vld [vmem:[%s47 + $0x4] sm:$0xf]
  %v2585 = vld [vmem:[%s47 + $0x8] sm:$0xf]
  %v2586 = vld [vmem:[%s47 + $0xc] sm:$0xf]
  %v2587 = vld [vmem:[%s47 + $0x10] sm:$0xf]
  %v2588 = vld [vmem:[%s47 + $0x14] sm:$0xf]
  %v2589 = vld [vmem:[%s47 + $0x18] sm:$0x1]
  %v2590 = vld [vmem:[%s49] sm:$0x1]
  %v2591 = vld [vmem:[%s51] sm:$0xf]
  %v2592 = vld [vmem:[%s51 + $0x4] sm:$0xf]
  %v2593 = vld [vmem:[%s51 + $0x8] sm:$0xf]
  %v2594 = vld [vmem:[%s51 + $0xc] sm:$0xf]
  %v2595 = vld [vmem:[%s51 + $0x10] sm:$0xf]
  %v2596 = vld [vmem:[%s51 + $0x14] sm:$0xf]
  %v2597 = vld [vmem:[%s51 + $0x18] sm:$0x1]
  %v2598 = vld [vmem:[%s53] sm:$0x1]
  %v2599 = vld [vmem:[%s55] sm:$0xf]
  %v2600 = vld [vmem:[%s55 + $0x4] sm:$0xf]
  %v2601 = vld [vmem:[%s55 + $0x8] sm:$0xf]
  %v2602 = vld [vmem:[%s55 + $0xc] sm:$0xf]
  %v2603 = vld [vmem:[%s55 + $0x10] sm:$0xf]
  %v2604 = vld [vmem:[%s55 + $0x14] sm:$0xf]
  %v2605 = vld [vmem:[%s55 + $0x18] sm:$0x1]
  %v2606 = vld [vmem:[%s57] sm:$0x1]
  %v2607 = vld [vmem:[%s59] sm:$0xf]
  %v2608 = vld [vmem:[%s59 + $0x4] sm:$0xf]
  %v2609 = vld [vmem:[%s59 + $0x8] sm:$0xf]
  %v2610 = vld [vmem:[%s59 + $0xc] sm:$0xf]
  %v2611 = vld [vmem:[%s59 + $0x10] sm:$0xf]
  %v2612 = vld [vmem:[%s59 + $0x14] sm:$0xf]
  %v2613 = vld [vmem:[%s59 + $0x18] sm:$0x1]
  %v2614 = vld [vmem:[%s61] sm:$0x1]
  %v2616 = vlaneseq
  %v2617 = vshrl.u32 %v2616, 7
  %v2618 = vsub.s32 0, %v2617
  %v2619 = vrot.slane %v2590, %v2618
  %v2628 = vunpack.c.l.b16 %v2583
  %v2629 = vunpack.c.l.b16 %v2584
  %v2630 = vunpack.c.l.b16 %v2585
  %v2631 = vunpack.c.l.b16 %v2586
  %v2632 = vunpack.c.l.b16 %v2587
  %v2633 = vunpack.c.l.b16 %v2588
  %v2634 = vunpack.c.l.b16 %v2589
  %v2635 = vpack.c.b16 %v2629, %v2628
  %v2636 = vpack.c.b16 %v2631, %v2630
  %v2637 = vpack.c.b16 %v2633, %v2632
  %v2638 = vpack.c.b16 %v2634, %v2634
  %v2643 = vsel %vm2260, %v2581, 0
  %v2646 = vsel %vm2260, %v2582, 0
  %v2649 = vsel %vm2264, %v2638, 0
  %2651 = vmatprep.subr.bf16.mxu0 0
  %2652 = vmatpush1.bf16.msra.mxu0 %v2635
  %2653 = vmatprep.subr.bf16.mxu0 0
  %2654 = vmatpush1.bf16.msra.mxu0 %v2636
  %2655 = vmatprep.subr.bf16.mxu0 0
  %2656 = vmatpush1.bf16.msra.mxu0 %v2637
  %2657 = vmatprep.subr.bf16.mxu0 0
  %2658 = vmatpush1.bf16.msra.mxu0 %v2649
  %2659 = vmatprep.subr.bf16.mxu0 0
  %2660 = vmatpush1.bf16.msra.mxu0 0
  %2661 = vmatprep.subr.bf16.mxu0 0
  %2662 = vmatpush1.bf16.msra.mxu0 0
  %2663 = vmatprep.subr.bf16.mxu0 0
  %2664 = vmatpush1.bf16.msra.mxu0 0
  %2665 = vmatprep.subr.bf16.mxu0 0
  %2666 = vmatpush1.bf16.msra.mxu0 0
  %2667 = vmatprep.subr.bf16.mxu0 0
  %2668 = vmatpush1.bf16.msra.mxu0 0
  %2669 = vmatprep.subr.bf16.mxu0 0
  %2670 = vmatpush1.bf16.msra.mxu0 0
  %2671 = vmatprep.subr.bf16.mxu0 0
  %2672 = vmatpush1.bf16.msra.mxu0 0
  %2673 = vmatprep.subr.bf16.mxu0 0
  %2674 = vmatpush1.bf16.msra.mxu0 0
  %2675 = vmatprep.subr.bf16.mxu0 0
  %2676 = vmatpush1.bf16.msra.mxu0 0
  %2677 = vmatprep.subr.bf16.mxu0 0
  %2678 = vmatpush1.bf16.msra.mxu0 0
  %2679 = vmatprep.subr.bf16.mxu0 0
  %2680 = vmatpush1.bf16.msra.mxu0 0
  %2681 = vmatprep.subr.bf16.mxu0 0
  %2682 = vmatpush1.bf16.msra.mxu0 0
  %2683 = vmatprep.mubr.bf16.mxu0 0
  %2684 = vmatmul.mubr.bf16.gmra.mrb[0].mxu0 %v2643
  %v2685 = vpop.f32.mrb[0].mxu0
  %v2686 = vadd.f32 %v2619, %v2685
  %v2687 = vpop.f32.mrb[0].mxu0
  %v2688 = vpop.f32.mrb[0].mxu0
  %v2689 = vadd.f32 %v2619, %v2688
  %v2690 = vpop.f32.mrb[0].mxu0
  %2691 = vmatprep.mubr.bf16.mxu0 0
  %2692 = vmatmul.mubr.bf16.gmra.mrb[0].mxu0 %v2646
  %v2693 = vpop.f32.mrb[0].mxu0
  %v2694 = vadd.f32 %v2619, %v2693
  %v2695 = vpop.f32.mrb[0].mxu0
  %v2696 = vpop.f32.mrb[0].mxu0
  %v2697 = vadd.f32 %v2619, %v2696
  %v2698 = vpop.f32.mrb[0].mxu0
  %2699 = vdwg.mxu0
  %v2701 = vlaneseq
  %v2702 = vshrl.u32 %v2701, 7
  %v2703 = vsub.s32 0, %v2702
  %v2704 = vrot.slane %v2598, %v2703
  %v2713 = vunpack.c.l.b16 %v2591
  %v2714 = vunpack.c.l.b16 %v2592
  %v2715 = vunpack.c.l.b16 %v2593
  %v2716 = vunpack.c.l.b16 %v2594
  %v2717 = vunpack.c.l.b16 %v2595
  %v2718 = vunpack.c.l.b16 %v2596
  %v2719 = vunpack.c.l.b16 %v2597
  %v2720 = vpack.c.b16 %v2714, %v2713
  %v2721 = vpack.c.b16 %v2716, %v2715
  %v2722 = vpack.c.b16 %v2718, %v2717
  %v2723 = vpack.c.b16 %v2719, %v2719
  %v2728 = vsel %vm2264, %v2723, 0
  %2730 = vmatprep.subr.bf16.mxu0 0
  %2731 = vmatpush1.bf16.msra.mxu0 %v2720
  %2732 = vmatprep.subr.bf16.mxu0 0
  %2733 = vmatpush1.bf16.msra.mxu0 %v2721
  %2734 = vmatprep.subr.bf16.mxu0 0
  %2735 = vmatpush1.bf16.msra.mxu0 %v2722
  %2736 = vmatprep.subr.bf16.mxu0 0
  %2737 = vmatpush1.bf16.msra.mxu0 %v2728
  %2738 = vmatprep.subr.bf16.mxu0 0
  %2739 = vmatpush1.bf16.msra.mxu0 0
  %2740 = vmatprep.subr.bf16.mxu0 0
  %2741 = vmatpush1.bf16.msra.mxu0 0
  %2742 = vmatprep.subr.bf16.mxu0 0
  %2743 = vmatpush1.bf16.msra.mxu0 0
  %2744 = vmatprep.subr.bf16.mxu0 0
  %2745 = vmatpush1.bf16.msra.mxu0 0
  %2746 = vmatprep.subr.bf16.mxu0 0
  %2747 = vmatpush1.bf16.msra.mxu0 0
  %2748 = vmatprep.subr.bf16.mxu0 0
  %2749 = vmatpush1.bf16.msra.mxu0 0
  %2750 = vmatprep.subr.bf16.mxu0 0
  %2751 = vmatpush1.bf16.msra.mxu0 0
  %2752 = vmatprep.subr.bf16.mxu0 0
  %2753 = vmatpush1.bf16.msra.mxu0 0
  %2754 = vmatprep.subr.bf16.mxu0 0
  %2755 = vmatpush1.bf16.msra.mxu0 0
  %2756 = vmatprep.subr.bf16.mxu0 0
  %2757 = vmatpush1.bf16.msra.mxu0 0
  %2758 = vmatprep.subr.bf16.mxu0 0
  %2759 = vmatpush1.bf16.msra.mxu0 0
  %2760 = vmatprep.subr.bf16.mxu0 0
  %2761 = vmatpush1.bf16.msra.mxu0 0
  %2762 = vmatprep.mubr.bf16.mxu0 0
  %2763 = vmatmul.mubr.bf16.gmra.mrb[0].mxu0 %v2643
  %v2764 = vpop.f32.mrb[0].mxu0
  %v2765 = vadd.f32 %v2704, %v2764
  %v2766 = vpop.f32.mrb[0].mxu0
  %v2767 = vpop.f32.mrb[0].mxu0
  %v2768 = vadd.f32 %v2704, %v2767
  %v2769 = vpop.f32.mrb[0].mxu0
  %2770 = vmatprep.mubr.bf16.mxu0 0
  %2771 = vmatmul.mubr.bf16.gmra.mrb[0].mxu0 %v2646
  %v2772 = vpop.f32.mrb[0].mxu0
  %v2773 = vadd.f32 %v2704, %v2772
  %v2774 = vpop.f32.mrb[0].mxu0
  %v2775 = vpop.f32.mrb[0].mxu0
  %v2776 = vadd.f32 %v2704, %v2775
  %v2777 = vpop.f32.mrb[0].mxu0
  %2778 = vdwg.mxu0
  %v2779 = vsub.f32 %v2686, %v2694
  %v2780 = vsub.f32 %v2689, %v2697
  %v2782 = vlaneseq
  %v2783 = vshrl.u32 %v2782, 7
  %v2784 = vsub.s32 0, %v2783
  %v2785 = vrot.slane %v2580, %v2784
  %v2787 = vmul.f32 %v2785, %v2779
  %v2788 = vmul.f32 %v2785, %v2780
  %v2789 = vpack.c.bf16 %v2788, %v2787
  %v2797 = vunpack.c.l.b16 %v2607
  %v2798 = vunpack.c.l.b16 %v2608
  %v2799 = vunpack.c.l.b16 %v2609
  %v2800 = vunpack.c.l.b16 %v2610
  %v2801 = vunpack.c.l.b16 %v2611
  %v2802 = vunpack.c.l.b16 %v2612
  %v2803 = vunpack.c.l.b16 %v2613
  %v2804 = vpack.c.b16 %v2798, %v2797
  %v2805 = vpack.c.b16 %v2800, %v2799
  %v2806 = vpack.c.b16 %v2802, %v2801
  %v2807 = vpack.c.b16 %v2803, %v2803
  %v2812 = vsel %vm2260, %v2789, 0
  %v2815 = vsel %vm2264, %v2807, 0
  %2817 = vmatprep.subr.bf16.mxu0 0
  %2818 = vmatpush1.bf16.msra.mxu0 %v2804
  %2819 = vmatprep.subr.bf16.mxu0 0
  %2820 = vmatpush1.bf16.msra.mxu0 %v2805
  %2821 = vmatprep.subr.bf16.mxu0 0
  %2822 = vmatpush1.bf16.msra.mxu0 %v2806
  %2823 = vmatprep.subr.bf16.mxu0 0
  %2824 = vmatpush1.bf16.msra.mxu0 %v2815
  %2825 = vmatprep.subr.bf16.mxu0 0
  %2826 = vmatpush1.bf16.msra.mxu0 0
  %2827 = vmatprep.subr.bf16.mxu0 0
  %2828 = vmatpush1.bf16.msra.mxu0 0
  %2829 = vmatprep.subr.bf16.mxu0 0
  %2830 = vmatpush1.bf16.msra.mxu0 0
  %2831 = vmatprep.subr.bf16.mxu0 0
  %2832 = vmatpush1.bf16.msra.mxu0 0
  %2833 = vmatprep.subr.bf16.mxu0 0
  %2834 = vmatpush1.bf16.msra.mxu0 0
  %2835 = vmatprep.subr.bf16.mxu0 0
  %2836 = vmatpush1.bf16.msra.mxu0 0
  %2837 = vmatprep.subr.bf16.mxu0 0
  %2838 = vmatpush1.bf16.msra.mxu0 0
  %2839 = vmatprep.subr.bf16.mxu0 0
  %2840 = vmatpush1.bf16.msra.mxu0 0
  %2841 = vmatprep.subr.bf16.mxu0 0
  %2842 = vmatpush1.bf16.msra.mxu0 0
  %2843 = vmatprep.subr.bf16.mxu0 0
  %2844 = vmatpush1.bf16.msra.mxu0 0
  %2845 = vmatprep.subr.bf16.mxu0 0
  %2846 = vmatpush1.bf16.msra.mxu0 0
  %2847 = vmatprep.subr.bf16.mxu0 0
  %2848 = vmatpush1.bf16.msra.mxu0 0
  %2849 = vmatprep.mubr.bf16.mxu0 0
  %2850 = vmatmul.mubr.bf16.gmra.mrb[0].mxu0 %v2812
  %v2851 = vpop.f32.mrb[0].mxu0
  %v2852 = vadd.f32 0.0, %v2851
  %v2853 = vpop.f32.mrb[0].mxu0
  %v2854 = vpop.f32.mrb[0].mxu0
  %v2855 = vadd.f32 0.0, %v2854
  %v2856 = vpop.f32.mrb[0].mxu0
  %2857 = vdwg.mxu0
  %v2858 = vmul.f32 %v2852, 0.14142136
  %v2859 = vmul.f32 %v2855, 0.14142136
  %v2860 = vsub.f32 0.0, %v2858
  %v2861 = vsub.f32 0.0, %v2859
  %v2862 = vmul.f32 %v2860, 1.442695
  %v2863 = vpow.pop %v2862
  %v2864 = vmul.f32 %v2861, 1.442695
  %v2865 = vpow.pop %v2864
  %v2866 = vadd.f32 %v2863, 1.0
  %v2867 = vadd.f32 %v2865, 1.0
  %v2868 = vrcp.pop %v2866
  %v2869 = vrcp.pop %v2867
  %v2870 = vpack.c.bf16 %v2869, %v2868
  %vm2871 = vcmask 15360
  %v2873 = vsel %vm2871, %v2870, 0
  %v2876 = vsel %vm2264, %v2614, 0
  %2878 = vmatprep.subr.bf16.mxu0 0
  %2879 = vmatpush1.bf16.msra.mxu0 %v2876
  %2880 = vmatprep.subr.bf16.mxu0 0
  %2881 = vmatpush1.bf16.msra.mxu0 0
  %2882 = vmatprep.subr.bf16.mxu0 0
  %2883 = vmatpush1.bf16.msra.mxu0 0
  %2884 = vmatprep.subr.bf16.mxu0 0
  %2885 = vmatpush1.bf16.msra.mxu0 0
  %2886 = vmatprep.subr.bf16.mxu0 0
  %2887 = vmatpush1.bf16.msra.mxu0 0
  %2888 = vmatprep.subr.bf16.mxu0 0
  %2889 = vmatpush1.bf16.msra.mxu0 0
  %2890 = vmatprep.subr.bf16.mxu0 0
  %2891 = vmatpush1.bf16.msra.mxu0 0
  %2892 = vmatprep.subr.bf16.mxu0 0
  %2893 = vmatpush1.bf16.msra.mxu0 0
  %2894 = vmatprep.subr.bf16.mxu0 0
  %2895 = vmatpush1.bf16.msra.mxu0 0
  %2896 = vmatprep.subr.bf16.mxu0 0
  %2897 = vmatpush1.bf16.msra.mxu0 0
  %2898 = vmatprep.subr.bf16.mxu0 0
  %2899 = vmatpush1.bf16.msra.mxu0 0
  %2900 = vmatprep.subr.bf16.mxu0 0
  %2901 = vmatpush1.bf16.msra.mxu0 0
  %2902 = vmatprep.subr.bf16.mxu0 0
  %2903 = vmatpush1.bf16.msra.mxu0 0
  %2904 = vmatprep.subr.bf16.mxu0 0
  %2905 = vmatpush1.bf16.msra.mxu0 0
  %2906 = vmatprep.subr.bf16.mxu0 0
  %2907 = vmatpush1.bf16.msra.mxu0 0
  %2908 = vmatprep.subr.bf16.mxu0 0
  %2909 = vmatpush1.bf16.msra.mxu0 0
  %2910 = vmatprep.mubr.bf16.mxu0 0
  %2911 = vmatmul.mubr.bf16.gmra.mrb[0].mxu0 %v2873
  %v2912 = vpop.f32.mrb[0].mxu0
  %v2913 = vadd.f32 0.0, %v2912
  %v2914 = vpop.f32.mrb[0].mxu0
  %v2915 = vpop.f32.mrb[0].mxu0
  %v2916 = vadd.f32 0.0, %v2915
  %v2917 = vpop.f32.mrb[0].mxu0
  %2918 = vdwg.mxu0
  %v2919 = vadd.f32 %v2785, %v2773
  %v2920 = vadd.f32 %v2785, %v2776
  %v2921 = vsub.f32 %v2765, %v2773
  %v2922 = vsub.f32 %v2768, %v2776
  %v2923 = vmul.f32 %v2913, %v2921
  %v2924 = vmul.f32 %v2916, %v2922
  %v2925 = vadd.f32 %v2919, %v2923
  %v2926 = vadd.f32 %v2920, %v2924
  %v2927 = vpack.c.bf16 %v2926, %v2925
  %v2929 = vlaneseq
  %v2930 = vshrl.u32 %v2929, 7
  %v2931 = vsub.s32 0, %v2930
  %v2932 = vrot.slane %v2606, %v2931
  %v2941 = vunpack.c.l.b16 %v2599
  %v2942 = vunpack.c.l.b16 %v2600
  %v2943 = vunpack.c.l.b16 %v2601
  %v2944 = vunpack.c.l.b16 %v2602
  %v2945 = vunpack.c.l.b16 %v2603
  %v2946 = vunpack.c.l.b16 %v2604
  %v2947 = vunpack.c.l.b16 %v2605
  %v2948 = vpack.c.b16 %v2942, %v2941
  %v2949 = vpack.c.b16 %v2944, %v2943
  %v2950 = vpack.c.b16 %v2946, %v2945
  %v2951 = vpack.c.b16 %v2947, %v2947
  %v2956 = vsel %vm2260, %v2927, 0
  %v2959 = vsel %vm2264, %v2951, 0
  %2961 = vmatprep.subr.bf16.mxu0 0
  %2962 = vmatpush1.bf16.msra.mxu0 %v2948
  %2963 = vmatprep.subr.bf16.mxu0 0
  %2964 = vmatpush1.bf16.msra.mxu0 %v2949
  %2965 = vmatprep.subr.bf16.mxu0 0
  %2966 = vmatpush1.bf16.msra.mxu0 %v2950
  %2967 = vmatprep.subr.bf16.mxu0 0
  %2968 = vmatpush1.bf16.msra.mxu0 %v2959
  %2969 = vmatprep.subr.bf16.mxu0 0
  %2970 = vmatpush1.bf16.msra.mxu0 0
  %2971 = vmatprep.subr.bf16.mxu0 0
  %2972 = vmatpush1.bf16.msra.mxu0 0
  %2973 = vmatprep.subr.bf16.mxu0 0
  %2974 = vmatpush1.bf16.msra.mxu0 0
  %2975 = vmatprep.subr.bf16.mxu0 0
  %2976 = vmatpush1.bf16.msra.mxu0 0
  %2977 = vmatprep.subr.bf16.mxu0 0
  %2978 = vmatpush1.bf16.msra.mxu0 0
  %2979 = vmatprep.subr.bf16.mxu0 0
  %2980 = vmatpush1.bf16.msra.mxu0 0
  %2981 = vmatprep.subr.bf16.mxu0 0
  %2982 = vmatpush1.bf16.msra.mxu0 0
  %2983 = vmatprep.subr.bf16.mxu0 0
  %2984 = vmatpush1.bf16.msra.mxu0 0
  %2985 = vmatprep.subr.bf16.mxu0 0
  %2986 = vmatpush1.bf16.msra.mxu0 0
  %2987 = vmatprep.subr.bf16.mxu0 0
  %2988 = vmatpush1.bf16.msra.mxu0 0
  %2989 = vmatprep.subr.bf16.mxu0 0
  %2990 = vmatpush1.bf16.msra.mxu0 0
  %2991 = vmatprep.subr.bf16.mxu0 0
  %2992 = vmatpush1.bf16.msra.mxu0 0
  %2993 = vmatprep.mubr.bf16.mxu0 0
  %2994 = vmatmul.mubr.bf16.gmra.mrb[0].mxu0 %v2956
  %v2995 = vpop.f32.mrb[0].mxu0
  %v2996 = vadd.f32 %v2932, %v2995
  %v2997 = vpop.f32.mrb[0].mxu0
  %v2998 = vpop.f32.mrb[0].mxu0
  %v2999 = vadd.f32 %v2932, %v2998
  %v3000 = vpop.f32.mrb[0].mxu0
  %3001 = vdwg.mxu0
  %v3002 = vmax.f32 %v2996, 0.0
  %v3003 = vmax.f32 %v2999, 0.0
  %v3004 = vadd.f32 %v2925, %v3002
  %v3005 = vadd.f32 %v2926, %v3003
  %v3006 = vpack.c.bf16 %v3005, %v3004
  %v3007 = vld [vmem:[%s63] sm:$0xff]
  %v3008 = vld [vmem:[%s63 + $0x8] sm:$0xf]
  %v3009 = vld [vmem:[%s63 + $0xc] sm:$0xff]
  %v3010 = vld [vmem:[%s63 + $0x14] sm:$0xf]
  %v3011 = vld [vmem:[%s63 + $0x18] sm:$0xff]
  %v3012 = vld [vmem:[%s63 + $0x20] sm:$0xf]
  %v3013 = vld [vmem:[%s63 + $0x24] sm:$0xff]
  %v3014 = vld [vmem:[%s63 + $0x2c] sm:$0xf]
  %v3015 = vld [vmem:[%s63 + $0x30] sm:$0xff]
  %v3016 = vld [vmem:[%s63 + $0x38] sm:$0xf]
  %v3017 = vld [vmem:[%s63 + $0x3c] sm:$0xff]
  %v3018 = vld [vmem:[%s63 + $0x44] sm:$0xf]
  %v3019 = vld [vmem:[%s63 + $0x48] sm:$0x11]
  %v3020 = vld [vmem:[%s63 + $0x50] sm:$0x1]
  %v3021 = vld [vmem:[%s65] sm:$0x7]
  %v3023 = vlaneseq
  %v3024 = vshrl.u32 %v3023, 7
  %v3025 = vsub.s32 0, %v3024
  %v3026 = vrot.slane %v3021, %v3025
  %v3027 = vlaneseq
  %v3028 = vshrl.u32 %v3027, 7
  %v3029 = vsub.s32 1, %v3028
  %v3030 = vrot.slane %v3021, %v3029
  %v3031 = vlaneseq
  %v3032 = vshrl.u32 %v3031, 7
  %v3033 = vsub.s32 2, %v3032
  %v3034 = vrot.slane %v3021, %v3033
  %v3052 = vunpack.c.l.b16 %v3007
  %v3053 = vunpack.c.h.b16 %v3007
  %v3054 = vunpack.c.l.b16 %v3008
  %v3055 = vunpack.c.l.b16 %v3009
  %v3056 = vunpack.c.h.b16 %v3009
  %v3057 = vunpack.c.l.b16 %v3010
  %v3058 = vunpack.c.l.b16 %v3011
  %v3059 = vunpack.c.h.b16 %v3011
  %v3060 = vunpack.c.l.b16 %v3012
  %v3061 = vunpack.c.l.b16 %v3013
  %v3062 = vunpack.c.h.b16 %v3013
  %v3063 = vunpack.c.l.b16 %v3014
  %v3064 = vunpack.c.l.b16 %v3015
  %v3065 = vunpack.c.h.b16 %v3015
  %v3066 = vunpack.c.l.b16 %v3016
  %v3067 = vunpack.c.l.b16 %v3017
  %v3068 = vunpack.c.h.b16 %v3017
  %v3069 = vunpack.c.l.b16 %v3018
  %v3070 = vunpack.c.l.b16 %v3019
  %v3071 = vunpack.c.h.b16 %v3019
  %v3072 = vunpack.c.l.b16 %v3020
  %v3073 = vpack.c.b16 %v3055, %v3052
  %v3074 = vpack.c.b16 %v3056, %v3053
  %v3075 = vpack.c.b16 %v3057, %v3054
  %v3076 = vpack.c.b16 %v3061, %v3058
  %v3077 = vpack.c.b16 %v3062, %v3059
  %v3078 = vpack.c.b16 %v3063, %v3060
  %v3079 = vpack.c.b16 %v3067, %v3064
  %v3080 = vpack.c.b16 %v3068, %v3065
  %v3081 = vpack.c.b16 %v3069, %v3066
  %v3082 = vpack.c.b16 %v3070, %v3070
  %v3083 = vpack.c.b16 %v3071, %v3071
  %v3084 = vpack.c.b16 %v3072, %v3072
  %v3095 = vsel %vm2260, %v3006, 0
  %v3098 = vsel %vm2264, %v3082, 0
  %v3101 = vsel %vm2264, %v3083, 0
  %v3104 = vsel %vm2264, %v3084, 0
  %3106 = vmatprep.subr.bf16.mxu0 %v3074
  %3107 = vmatpush1.bf16.msra.mxu0 %v3073
  %3108 = vmatprep.subr.bf16.mxu0 %v3077
  %3109 = vmatpush1.bf16.msra.mxu0 %v3076
  %3110 = vmatprep.subr.bf16.mxu0 %v3080
  %3111 = vmatpush1.bf16.msra.mxu0 %v3079
  %3112 = vmatprep.subr.bf16.mxu0 %v3101
  %3113 = vmatpush1.bf16.msra.mxu0 %v3098
  %3114 = vmatprep.subr.bf16.mxu0 0
  %3115 = vmatpush1.bf16.msra.mxu0 0
  %3116 = vmatprep.subr.bf16.mxu0 0
  %3117 = vmatpush1.bf16.msra.mxu0 0
  %3118 = vmatprep.subr.bf16.mxu0 0
  %3119 = vmatpush1.bf16.msra.mxu0 0
  %3120 = vmatprep.subr.bf16.mxu0 0
  %3121 = vmatpush1.bf16.msra.mxu0 0
  %3122 = vmatprep.subr.bf16.mxu0 0
  %3123 = vmatpush1.bf16.msra.mxu0 0
  %3124 = vmatprep.subr.bf16.mxu0 0
  %3125 = vmatpush1.bf16.msra.mxu0 0
  %3126 = vmatprep.subr.bf16.mxu0 0
  %3127 = vmatpush1.bf16.msra.mxu0 0
  %3128 = vmatprep.subr.bf16.mxu0 0
  %3129 = vmatpush1.bf16.msra.mxu0 0
  %3130 = vmatprep.subr.bf16.mxu0 0
  %3131 = vmatpush1.bf16.msra.mxu0 0
  %3132 = vmatprep.subr.bf16.mxu0 0
  %3133 = vmatpush1.bf16.msra.mxu0 0
  %3134 = vmatprep.subr.bf16.mxu0 0
  %3135 = vmatpush1.bf16.msra.mxu0 0
  %3136 = vmatprep.subr.bf16.mxu0 0
  %3137 = vmatpush1.bf16.msra.mxu0 0
  %3138 = vmatprep.mubr.bf16.mxu0 0
  %3139 = vmatmul.mubr.bf16.gmra.mrb[0].mxu0 %v3095
  %v3140 = vpop.f32.mrb[0].mxu0
  %v3141 = vadd.f32 %v3026, %v3140
  %v3142 = vpop.f32.mrb[0].mxu0
  %v3143 = vadd.f32 %v3030, %v3142
  %v3144 = vpop.f32.mrb[0].mxu0
  %v3145 = vadd.f32 %v3026, %v3144
  %v3146 = vpop.f32.mrb[0].mxu0
  %v3147 = vadd.f32 %v3030, %v3146
  %3148 = vdwg.mxu0
  %3149 = vmatprep.subr.bf16.mxu0 0
  %3150 = vmatpush1.bf16.msra.mxu0 %v3075
  %3151 = vmatprep.subr.bf16.mxu0 0
  %3152 = vmatpush1.bf16.msra.mxu0 %v3078
  %3153 = vmatprep.subr.bf16.mxu0 0
  %3154 = vmatpush1.bf16.msra.mxu0 %v3081
  %3155 = vmatprep.subr.bf16.mxu0 0
  %3156 = vmatpush1.bf16.msra.mxu0 %v3104
  %3157 = vmatprep.subr.bf16.mxu0 0
  %3158 = vmatpush1.bf16.msra.mxu0 0
  %3159 = vmatprep.subr.bf16.mxu0 0
  %3160 = vmatpush1.bf16.msra.mxu0 0
  %3161 = vmatprep.subr.bf16.mxu0 0
  %3162 = vmatpush1.bf16.msra.mxu0 0
  %3163 = vmatprep.subr.bf16.mxu0 0
  %3164 = vmatpush1.bf16.msra.mxu0 0
  %3165 = vmatprep.subr.bf16.mxu0 0
  %3166 = vmatpush1.bf16.msra.mxu0 0
  %3167 = vmatprep.subr.bf16.mxu0 0
  %3168 = vmatpush1.bf16.msra.mxu0 0
  %3169 = vmatprep.subr.bf16.mxu0 0
  %3170 = vmatpush1.bf16.msra.mxu0 0
  %3171 = vmatprep.subr.bf16.mxu0 0
  %3172 = vmatpush1.bf16.msra.mxu0 0
  %3173 = vmatprep.subr.bf16.mxu0 0
  %3174 = vmatpush1.bf16.msra.mxu0 0
  %3175 = vmatprep.subr.bf16.mxu0 0
  %3176 = vmatpush1.bf16.msra.mxu0 0
  %3177 = vmatprep.subr.bf16.mxu0 0
  %3178 = vmatpush1.bf16.msra.mxu0 0
  %3179 = vmatprep.subr.bf16.mxu0 0
  %3180 = vmatpush1.bf16.msra.mxu0 0
  %3181 = vmatprep.mubr.bf16.mxu0 0
  %3182 = vmatmul.mubr.bf16.gmra.mrb[0].mxu0 %v3095
  %v3183 = vpop.f32.mrb[0].mxu0
  %v3184 = vadd.f32 %v3034, %v3183
  %v3185 = vpop.f32.mrb[0].mxu0
  %v3186 = vpop.f32.mrb[0].mxu0
  %v3187 = vadd.f32 %v3034, %v3186
  %v3188 = vpop.f32.mrb[0].mxu0
  %3189 = vdwg.mxu0
  %v3190 = vmul.f32 %v3141, 0.01
  %v3191 = vmul.f32 %v3143, 0.01
  %v3192 = vmul.f32 %v3184, 0.01
  %v3193 = vmul.f32 %v3145, 0.01
  %v3194 = vmul.f32 %v3147, 0.01
  %v3195 = vmul.f32 %v3187, 0.01
  %v3196 = vmax.f32 %v3141, %v3190
  %v3197 = vmax.f32 %v3143, %v3191
  %v3198 = vmax.f32 %v3184, %v3192
  %v3199 = vmax.f32 %v3145, %v3193
  %v3200 = vmax.f32 %v3147, %v3194
  %v3201 = vmax.f32 %v3187, %v3195
  %v3202 = vpack.c.bf16 %v3199, %v3196
  %v3203 = vpack.c.bf16 %v3200, %v3197
  %v3204 = vpack.c.bf16 %v3201, %v3198
  %v3205 = vld [vmem:[%s67] sm:$0xff]
  %v3206 = vld [vmem:[%s67 + $0x8] sm:$0xff]
  %v3207 = vld [vmem:[%s67 + $0x10] sm:$0xf]
  %v3208 = vld [vmem:[%s67 + $0x14] sm:$0xff]
  %v3209 = vld [vmem:[%s67 + $0x1c] sm:$0xff]
  %v3210 = vld [vmem:[%s67 + $0x24] sm:$0xf]
  %v3211 = vld [vmem:[%s67 + $0x28] sm:$0xff]
  %v3212 = vld [vmem:[%s67 + $0x30] sm:$0xff]
  %v3213 = vld [vmem:[%s67 + $0x38] sm:$0xf]
  %v3214 = vld [vmem:[%s67 + $0x3c] sm:$0xff]
  %v3215 = vld [vmem:[%s67 + $0x44] sm:$0xff]
  %v3216 = vld [vmem:[%s67 + $0x4c] sm:$0xf]
  %v3217 = vld [vmem:[%s67 + $0x50] sm:$0xff]
  %v3218 = vld [vmem:[%s67 + $0x58] sm:$0xff]
  %v3219 = vld [vmem:[%s67 + $0x60] sm:$0xf]
  %v3220 = vld [vmem:[%s67 + $0x64] sm:$0xff]
  %v3221 = vld [vmem:[%s67 + $0x6c] sm:$0xff]
  %v3222 = vld [vmem:[%s67 + $0x74] sm:$0xf]
  %v3223 = vld [vmem:[%s67 + $0x78] sm:$0xff]
  %v3224 = vld [vmem:[%s67 + $0x80] sm:$0xff]
  %v3225 = vld [vmem:[%s67 + $0x88] sm:$0xf]
  %v3226 = vld [vmem:[%s67 + $0x8c] sm:$0xff]
  %v3227 = vld [vmem:[%s67 + $0x94] sm:$0xff]
  %v3228 = vld [vmem:[%s67 + $0x9c] sm:$0xf]
  %v3229 = vld [vmem:[%s67 + $0xa0] sm:$0xff]
  %v3230 = vld [vmem:[%s67 + $0xa8] sm:$0xff]
  %v3231 = vld [vmem:[%s67 + $0xb0] sm:$0xf]
  %v3232 = vld [vmem:[%s67 + $0xb4] sm:$0xff]
  %v3233 = vld [vmem:[%s67 + $0xbc] sm:$0xff]
  %v3234 = vld [vmem:[%s67 + $0xc4] sm:$0xf]
  %v3235 = vld [vmem:[%s67 + $0xc8] sm:$0xff]
  %v3236 = vld [vmem:[%s67 + $0xd0] sm:$0xff]
  %v3237 = vld [vmem:[%s67 + $0xd8] sm:$0xf]
  %v3238 = vld [vmem:[%s67 + $0xdc] sm:$0xff]
  %v3239 = vld [vmem:[%s67 + $0xe4] sm:$0xff]
  %v3240 = vld [vmem:[%s67 + $0xec] sm:$0xf]
  %v3241 = vld [vmem:[%s67 + $0xf0] sm:$0xff]
  %v3242 = vld [vmem:[%s67 + $0xf8] sm:$0xff]
  %v3243 = vld [vmem:[%s67 + $0x100] sm:$0xf]
  %v3244 = vld [vmem:[%s67 + $0x104] sm:$0xff]
  %v3245 = vld [vmem:[%s67 + $0x10c] sm:$0xff]
  %v3246 = vld [vmem:[%s67 + $0x114] sm:$0xf]
  %v3247 = vld [vmem:[%s67 + $0x118] sm:$0xff]
  %v3248 = vld [vmem:[%s67 + $0x120] sm:$0xff]
  %v3249 = vld [vmem:[%s67 + $0x128] sm:$0xf]
  %v3250 = vld [vmem:[%s67 + $0x12c] sm:$0xff]
  %v3251 = vld [vmem:[%s67 + $0x134] sm:$0xff]
  %v3252 = vld [vmem:[%s67 + $0x13c] sm:$0xf]
  %v3253 = vld [vmem:[%s67 + $0x140] sm:$0xff]
  %v3254 = vld [vmem:[%s67 + $0x148] sm:$0xff]
  %v3255 = vld [vmem:[%s67 + $0x150] sm:$0xf]
  %v3256 = vld [vmem:[%s67 + $0x154] sm:$0xff]
  %v3257 = vld [vmem:[%s67 + $0x15c] sm:$0xff]
  %v3258 = vld [vmem:[%s67 + $0x164] sm:$0xf]
  %v3259 = vld [vmem:[%s67 + $0x168] sm:$0xff]
  %v3260 = vld [vmem:[%s67 + $0x170] sm:$0xff]
  %v3261 = vld [vmem:[%s67 + $0x178] sm:$0xf]
  %v3262 = vld [vmem:[%s67 + $0x17c] sm:$0xff]
  %v3263 = vld [vmem:[%s67 + $0x184] sm:$0xff]
  %v3264 = vld [vmem:[%s67 + $0x18c] sm:$0xf]
  %v3265 = vld [vmem:[%s67 + $0x190] sm:$0xff]
  %v3266 = vld [vmem:[%s67 + $0x198] sm:$0xff]
  %v3267 = vld [vmem:[%s67 + $0x1a0] sm:$0xf]
  %v3268 = vld [vmem:[%s67 + $0x1a4] sm:$0xff]
  %v3269 = vld [vmem:[%s67 + $0x1ac] sm:$0xff]
  %v3270 = vld [vmem:[%s67 + $0x1b4] sm:$0xf]
  %v3271 = vld [vmem:[%s67 + $0x1b8] sm:$0xff]
  %v3272 = vld [vmem:[%s67 + $0x1c0] sm:$0xff]
  %v3273 = vld [vmem:[%s67 + $0x1c8] sm:$0xf]
  %v3274 = vld [vmem:[%s67 + $0x1cc] sm:$0xff]
  %v3275 = vld [vmem:[%s67 + $0x1d4] sm:$0xff]
  %v3276 = vld [vmem:[%s67 + $0x1dc] sm:$0xf]
  %v3277 = vld [vmem:[%s67 + $0x1e0] sm:$0xff]
  %v3278 = vld [vmem:[%s67 + $0x1e8] sm:$0xff]
  %v3279 = vld [vmem:[%s67 + $0x1f0] sm:$0xf]
  %v3280 = vld [vmem:[%s67 + $0x1f4] sm:$0xff]
  %v3281 = vld [vmem:[%s67 + $0x1fc] sm:$0xff]
  %v3282 = vld [vmem:[%s67 + $0x204] sm:$0xf]
  %v3283 = vld [vmem:[%s67 + $0x208] sm:$0xff]
  %v3284 = vld [vmem:[%s67 + $0x210] sm:$0xff]
  %v3285 = vld [vmem:[%s67 + $0x218] sm:$0xf]
  %v3286 = vld [vmem:[%s67 + $0x21c] sm:$0xff]
  %v3287 = vld [vmem:[%s67 + $0x224] sm:$0xff]
  %v3288 = vld [vmem:[%s67 + $0x22c] sm:$0xf]
  %v3289 = vld [vmem:[%s67 + $0x230] sm:$0xff]
  %v3290 = vld [vmem:[%s67 + $0x238] sm:$0xff]
  %v3291 = vld [vmem:[%s67 + $0x240] sm:$0xf]
  %v3292 = vld [vmem:[%s67 + $0x244] sm:$0xff]
  %v3293 = vld [vmem:[%s67 + $0x24c] sm:$0xff]
  %v3294 = vld [vmem:[%s67 + $0x254] sm:$0xf]
  %v3295 = vld [vmem:[%s67 + $0x258] sm:$0xff]
  %v3296 = vld [vmem:[%s67 + $0x260] sm:$0xff]
  %v3297 = vld [vmem:[%s67 + $0x268] sm:$0xf]
  %v3298 = vld [vmem:[%s67 + $0x26c] sm:$0xff]
  %v3299 = vld [vmem:[%s67 + $0x274] sm:$0xff]
  %v3300 = vld [vmem:[%s67 + $0x27c] sm:$0xf]
  %v3301 = vld [vmem:[%s67 + $0x280] sm:$0xff]
  %v3302 = vld [vmem:[%s67 + $0x288] sm:$0xff]
  %v3303 = vld [vmem:[%s67 + $0x290] sm:$0xf]
  %v3304 = vld [vmem:[%s67 + $0x294] sm:$0xff]
  %v3305 = vld [vmem:[%s67 + $0x29c] sm:$0xff]
  %v3306 = vld [vmem:[%s67 + $0x2a4] sm:$0xf]
  %v3307 = vld [vmem:[%s67 + $0x2a8] sm:$0xff]
  %v3308 = vld [vmem:[%s67 + $0x2b0] sm:$0xff]
  %v3309 = vld [vmem:[%s67 + $0x2b8] sm:$0xf]
  %v3310 = vld [vmem:[%s67 + $0x2bc] sm:$0xff]
  %v3311 = vld [vmem:[%s67 + $0x2c4] sm:$0xff]
  %v3312 = vld [vmem:[%s67 + $0x2cc] sm:$0xf]
  %v3313 = vld [vmem:[%s67 + $0x2d0] sm:$0xff]
  %v3314 = vld [vmem:[%s67 + $0x2d8] sm:$0xff]
  %v3315 = vld [vmem:[%s67 + $0x2e0] sm:$0xf]
  %v3316 = vld [vmem:[%s67 + $0x2e4] sm:$0x33]
  %v3317 = vld [vmem:[%s67 + $0x2ec] sm:$0x33]
  %v3318 = vld [vmem:[%s67 + $0x2f4] sm:$0x3]
  %v3319 = vld [vmem:[%s69] sm:$0x1f]
  %v3321 = vlaneseq
  %v3322 = vshrl.u32 %v3321, 7
  %v3323 = vsub.s32 0, %v3322
  %v3324 = vrot.slane %v3319, %v3323
  %v3325 = vlaneseq
  %v3326 = vshrl.u32 %v3325, 7
  %v3327 = vsub.s32 1, %v3326
  %v3328 = vrot.slane %v3319, %v3327
  %v3329 = vlaneseq
  %v3330 = vshrl.u32 %v3329, 7
  %v3331 = vsub.s32 2, %v3330
  %v3332 = vrot.slane %v3319, %v3331
  %v3333 = vlaneseq
  %v3334 = vshrl.u32 %v3333, 7
  %v3335 = vsub.s32 3, %v3334
  %v3336 = vrot.slane %v3319, %v3335
  %v3337 = vlaneseq
  %v3338 = vshrl.u32 %v3337, 7
  %v3339 = vsub.s32 4, %v3338
  %v3340 = vrot.slane %v3319, %v3339
  %v3460 = vunpack.c.l.b16 %v3205
  %v3461 = vunpack.c.h.b16 %v3205
  %v3462 = vunpack.c.l.b16 %v3206
  %v3463 = vunpack.c.h.b16 %v3206
  %v3464 = vunpack.c.l.b16 %v3207
  %v3465 = vunpack.c.l.b16 %v3208
  %v3466 = vunpack.c.h.b16 %v3208
  %v3467 = vunpack.c.l.b16 %v3209
  %v3468 = vunpack.c.h.b16 %v3209
  %v3469 = vunpack.c.l.b16 %v3210
  %v3470 = vunpack.c.l.b16 %v3211
  %v3471 = vunpack.c.h.b16 %v3211
  %v3472 = vunpack.c.l.b16 %v3212
  %v3473 = vunpack.c.h.b16 %v3212
  %v3474 = vunpack.c.l.b16 %v3213
  %v3475 = vunpack.c.l.b16 %v3214
  %v3476 = vunpack.c.h.b16 %v3214
  %v3477 = vunpack.c.l.b16 %v3215
  %v3478 = vunpack.c.h.b16 %v3215
  %v3479 = vunpack.c.l.b16 %v3216
  %v3480 = vunpack.c.l.b16 %v3217
  %v3481 = vunpack.c.h.b16 %v3217
  %v3482 = vunpack.c.l.b16 %v3218
  %v3483 = vunpack.c.h.b16 %v3218
  %v3484 = vunpack.c.l.b16 %v3219
  %v3485 = vunpack.c.l.b16 %v3220
  %v3486 = vunpack.c.h.b16 %v3220
  %v3487 = vunpack.c.l.b16 %v3221
  %v3488 = vunpack.c.h.b16 %v3221
  %v3489 = vunpack.c.l.b16 %v3222
  %v3490 = vunpack.c.l.b16 %v3223
  %v3491 = vunpack.c.h.b16 %v3223
  %v3492 = vunpack.c.l.b16 %v3224
  %v3493 = vunpack.c.h.b16 %v3224
  %v3494 = vunpack.c.l.b16 %v3225
  %v3495 = vunpack.c.l.b16 %v3226
  %v3496 = vunpack.c.h.b16 %v3226
  %v3497 = vunpack.c.l.b16 %v3227
  %v3498 = vunpack.c.h.b16 %v3227
  %v3499 = vunpack.c.l.b16 %v3228
  %v3500 = vunpack.c.l.b16 %v3229
  %v3501 = vunpack.c.h.b16 %v3229
  %v3502 = vunpack.c.l.b16 %v3230
  %v3503 = vunpack.c.h.b16 %v3230
  %v3504 = vunpack.c.l.b16 %v3231
  %v3505 = vunpack.c.l.b16 %v3232
  %v3506 = vunpack.c.h.b16 %v3232
  %v3507 = vunpack.c.l.b16 %v3233
  %v3508 = vunpack.c.h.b16 %v3233
  %v3509 = vunpack.c.l.b16 %v3234
  %v3510 = vunpack.c.l.b16 %v3235
  %v3511 = vunpack.c.h.b16 %v3235
  %v3512 = vunpack.c.l.b16 %v3236
  %v3513 = vunpack.c.h.b16 %v3236
  %v3514 = vunpack.c.l.b16 %v3237
  %v3515 = vunpack.c.l.b16 %v3238
  %v3516 = vunpack.c.h.b16 %v3238
  %v3517 = vunpack.c.l.b16 %v3239
  %v3518 = vunpack.c.h.b16 %v3239
  %v3519 = vunpack.c.l.b16 %v3240
  %v3520 = vunpack.c.l.b16 %v3241
  %v3521 = vunpack.c.h.b16 %v3241
  %v3522 = vunpack.c.l.b16 %v3242
  %v3523 = vunpack.c.h.b16 %v3242
  %v3524 = vunpack.c.l.b16 %v3243
  %v3525 = vunpack.c.l.b16 %v3244
  %v3526 = vunpack.c.h.b16 %v3244
  %v3527 = vunpack.c.l.b16 %v3245
  %v3528 = vunpack.c.h.b16 %v3245
  %v3529 = vunpack.c.l.b16 %v3246
  %v3530 = vunpack.c.l.b16 %v3247
  %v3531 = vunpack.c.h.b16 %v3247
  %v3532 = vunpack.c.l.b16 %v3248
  %v3533 = vunpack.c.h.b16 %v3248
  %v3534 = vunpack.c.l.b16 %v3249
  %v3535 = vunpack.c.l.b16 %v3250
  %v3536 = vunpack.c.h.b16 %v3250
  %v3537 = vunpack.c.l.b16 %v3251
  %v3538 = vunpack.c.h.b16 %v3251
  %v3539 = vunpack.c.l.b16 %v3252
  %v3540 = vunpack.c.l.b16 %v3253
  %v3541 = vunpack.c.h.b16 %v3253
  %v3542 = vunpack.c.l.b16 %v3254
  %v3543 = vunpack.c.h.b16 %v3254
  %v3544 = vunpack.c.l.b16 %v3255
  %v3545 = vunpack.c.l.b16 %v3256
  %v3546 = vunpack.c.h.b16 %v3256
  %v3547 = vunpack.c.l.b16 %v3257
  %v3548 = vunpack.c.h.b16 %v3257
  %v3549 = vunpack.c.l.b16 %v3258
  %v3550 = vunpack.c.l.b16 %v3259
  %v3551 = vunpack.c.h.b16 %v3259
  %v3552 = vunpack.c.l.b16 %v3260
  %v3553 = vunpack.c.h.b16 %v3260
  %v3554 = vunpack.c.l.b16 %v3261
  %v3555 = vunpack.c.l.b16 %v3262
  %v3556 = vunpack.c.h.b16 %v3262
  %v3557 = vunpack.c.l.b16 %v3263
  %v3558 = vunpack.c.h.b16 %v3263
  %v3559 = vunpack.c.l.b16 %v3264
  %v3560 = vunpack.c.l.b16 %v3265
  %v3561 = vunpack.c.h.b16 %v3265
  %v3562 = vunpack.c.l.b16 %v3266
  %v3563 = vunpack.c.h.b16 %v3266
  %v3564 = vunpack.c.l.b16 %v3267
  %v3565 = vunpack.c.l.b16 %v3268
  %v3566 = vunpack.c.h.b16 %v3268
  %v3567 = vunpack.c.l.b16 %v3269
  %v3568 = vunpack.c.h.b16 %v3269
  %v3569 = vunpack.c.l.b16 %v3270
  %v3570 = vunpack.c.l.b16 %v3271
  %v3571 = vunpack.c.h.b16 %v3271
  %v3572 = vunpack.c.l.b16 %v3272
  %v3573 = vunpack.c.h.b16 %v3272
  %v3574 = vunpack.c.l.b16 %v3273
  %v3575 = vunpack.c.l.b16 %v3274
  %v3576 = vunpack.c.h.b16 %v3274
  %v3577 = vunpack.c.l.b16 %v3275
  %v3578 = vunpack.c.h.b16 %v3275
  %v3579 = vunpack.c.l.b16 %v3276
  %v3580 = vunpack.c.l.b16 %v3277
  %v3581 = vunpack.c.h.b16 %v3277
  %v3582 = vunpack.c.l.b16 %v3278
  %v3583 = vunpack.c.h.b16 %v3278
  %v3584 = vunpack.c.l.b16 %v3279
  %v3585 = vunpack.c.l.b16 %v3280
  %v3586 = vunpack.c.h.b16 %v3280
  %v3587 = vunpack.c.l.b16 %v3281
  %v3588 = vunpack.c.h.b16 %v3281
  %v3589 = vunpack.c.l.b16 %v3282
  %v3590 = vunpack.c.l.b16 %v3283
  %v3591 = vunpack.c.h.b16 %v3283
  %v3592 = vunpack.c.l.b16 %v3284
  %v3593 = vunpack.c.h.b16 %v3284
  %v3594 = vunpack.c.l.b16 %v3285
  %v3595 = vunpack.c.l.b16 %v3286
  %v3596 = vunpack.c.h.b16 %v3286
  %v3597 = vunpack.c.l.b16 %v3287
  %v3598 = vunpack.c.h.b16 %v3287
  %v3599 = vunpack.c.l.b16 %v3288
  %v3600 = vunpack.c.l.b16 %v3289
  %v3601 = vunpack.c.h.b16 %v3289
  %v3602 = vunpack.c.l.b16 %v3290
  %v3603 = vunpack.c.h.b16 %v3290
  %v3604 = vunpack.c.l.b16 %v3291
  %v3605 = vunpack.c.l.b16 %v3292
  %v3606 = vunpack.c.h.b16 %v3292
  %v3607 = vunpack.c.l.b16 %v3293
  %v3608 = vunpack.c.h.b16 %v3293
  %v3609 = vunpack.c.l.b16 %v3294
  %v3610 = vunpack.c.l.b16 %v3295
  %v3611 = vunpack.c.h.b16 %v3295
  %v3612 = vunpack.c.l.b16 %v3296
  %v3613 = vunpack.c.h.b16 %v3296
  %v3614 = vunpack.c.l.b16 %v3297
  %v3615 = vunpack.c.l.b16 %v3298
  %v3616 = vunpack.c.h.b16 %v3298
  %v3617 = vunpack.c.l.b16 %v3299
  %v3618 = vunpack.c.h.b16 %v3299
  %v3619 = vunpack.c.l.b16 %v3300
  %v3620 = vunpack.c.l.b16 %v3301
  %v3621 = vunpack.c.h.b16 %v3301
  %v3622 = vunpack.c.l.b16 %v3302
  %v3623 = vunpack.c.h.b16 %v3302
  %v3624 = vunpack.c.l.b16 %v3303
  %v3625 = vunpack.c.l.b16 %v3304
  %v3626 = vunpack.c.h.b16 %v3304
  %v3627 = vunpack.c.l.b16 %v3305
  %v3628 = vunpack.c.h.b16 %v3305
  %v3629 = vunpack.c.l.b16 %v3306
  %v3630 = vunpack.c.l.b16 %v3307
  %v3631 = vunpack.c.h.b16 %v3307
  %v3632 = vunpack.c.l.b16 %v3308
  %v3633 = vunpack.c.h.b16 %v3308
  %v3634 = vunpack.c.l.b16 %v3309
  %v3635 = vunpack.c.l.b16 %v3310
  %v3636 = vunpack.c.h.b16 %v3310
  %v3637 = vunpack.c.l.b16 %v3311
  %v3638 = vunpack.c.h.b16 %v3311
  %v3639 = vunpack.c.l.b16 %v3312
  %v3640 = vunpack.c.l.b16 %v3313
  %v3641 = vunpack.c.h.b16 %v3313
  %v3642 = vunpack.c.l.b16 %v3314
  %v3643 = vunpack.c.h.b16 %v3314
  %v3644 = vunpack.c.l.b16 %v3315
  %v3645 = vunpack.c.l.b16 %v3316
  %v3646 = vunpack.c.h.b16 %v3316
  %v3647 = vunpack.c.l.b16 %v3317
  %v3648 = vunpack.c.h.b16 %v3317
  %v3649 = vunpack.c.l.b16 %v3318
  %v3650 = vpack.c.b16 %v3465, %v3460
  %v3651 = vpack.c.b16 %v3466, %v3461
  %v3652 = vpack.c.b16 %v3467, %v3462
  %v3653 = vpack.c.b16 %v3468, %v3463
  %v3654 = vpack.c.b16 %v3469, %v3464
  %v3655 = vpack.c.b16 %v3475, %v3470
  %v3656 = vpack.c.b16 %v3476, %v3471
  %v3657 = vpack.c.b16 %v3477, %v3472
  %v3658 = vpack.c.b16 %v3478, %v3473
  %v3659 = vpack.c.b16 %v3479, %v3474
  %v3660 = vpack.c.b16 %v3485, %v3480
  %v3661 = vpack.c.b16 %v3486, %v3481
  %v3662 = vpack.c.b16 %v3487, %v3482
  %v3663 = vpack.c.b16 %v3488, %v3483
  %v3664 = vpack.c.b16 %v3489, %v3484
  %v3665 = vpack.c.b16 %v3495, %v3490
  %v3666 = vpack.c.b16 %v3496, %v3491
  %v3667 = vpack.c.b16 %v3497, %v3492
  %v3668 = vpack.c.b16 %v3498, %v3493
  %v3669 = vpack.c.b16 %v3499, %v3494
  %v3670 = vpack.c.b16 %v3505, %v3500
  %v3671 = vpack.c.b16 %v3506, %v3501
  %v3672 = vpack.c.b16 %v3507, %v3502
  %v3673 = vpack.c.b16 %v3508, %v3503
  %v3674 = vpack.c.b16 %v3509, %v3504
  %v3675 = vpack.c.b16 %v3515, %v3510
  %v3676 = vpack.c.b16 %v3516, %v3511
  %v3677 = vpack.c.b16 %v3517, %v3512
  %v3678 = vpack.c.b16 %v3518, %v3513
  %v3679 = vpack.c.b16 %v3519, %v3514
  %v3680 = vpack.c.b16 %v3525, %v3520
  %v3681 = vpack.c.b16 %v3526, %v3521
  %v3682 = vpack.c.b16 %v3527, %v3522
  %v3683 = vpack.c.b16 %v3528, %v3523
  %v3684 = vpack.c.b16 %v3529, %v3524
  %v3685 = vpack.c.b16 %v3535, %v3530
  %v3686 = vpack.c.b16 %v3536, %v3531
  %v3687 = vpack.c.b16 %v3537, %v3532
  %v3688 = vpack.c.b16 %v3538, %v3533
  %v3689 = vpack.c.b16 %v3539, %v3534
  %v3690 = vpack.c.b16 %v3545, %v3540
  %v3691 = vpack.c.b16 %v3546, %v3541
  %v3692 = vpack.c.b16 %v3547, %v3542
  %v3693 = vpack.c.b16 %v3548, %v3543
  %v3694 = vpack.c.b16 %v3549, %v3544
  %v3695 = vpack.c.b16 %v3555, %v3550
  %v3696 = vpack.c.b16 %v3556, %v3551
  %v3697 = vpack.c.b16 %v3557, %v3552
  %v3698 = vpack.c.b16 %v3558, %v3553
  %v3699 = vpack.c.b16 %v3559, %v3554
  %v3700 = vpack.c.b16 %v3565, %v3560
  %v3701 = vpack.c.b16 %v3566, %v3561
  %v3702 = vpack.c.b16 %v3567, %v3562
  %v3703 = vpack.c.b16 %v3568, %v3563
  %v3704 = vpack.c.b16 %v3569, %v3564
  %v3705 = vpack.c.b16 %v3575, %v3570
  %v3706 = vpack.c.b16 %v3576, %v3571
  %v3707 = vpack.c.b16 %v3577, %v3572
  %v3708 = vpack.c.b16 %v3578, %v3573
  %v3709 = vpack.c.b16 %v3579, %v3574
  %v3710 = vpack.c.b16 %v3585, %v3580
  %v3711 = vpack.c.b16 %v3586, %v3581
  %v3712 = vpack.c.b16 %v3587, %v3582
  %v3713 = vpack.c.b16 %v3588, %v3583
  %v3714 = vpack.c.b16 %v3589, %v3584
  %v3715 = vpack.c.b16 %v3595, %v3590
  %v3716 = vpack.c.b16 %v3596, %v3591
  %v3717 = vpack.c.b16 %v3597, %v3592
  %v3718 = vpack.c.b16 %v3598, %v3593
  %v3719 = vpack.c.b16 %v3599, %v3594
  %v3720 = vpack.c.b16 %v3605, %v3600
  %v3721 = vpack.c.b16 %v3606, %v3601
  %v3722 = vpack.c.b16 %v3607, %v3602
  %v3723 = vpack.c.b16 %v3608, %v3603
  %v3724 = vpack.c.b16 %v3609, %v3604
  %v3725 = vpack.c.b16 %v3615, %v3610
  %v3726 = vpack.c.b16 %v3616, %v3611
  %v3727 = vpack.c.b16 %v3617, %v3612
  %v3728 = vpack.c.b16 %v3618, %v3613
  %v3729 = vpack.c.b16 %v3619, %v3614
  %v3730 = vpack.c.b16 %v3625, %v3620
  %v3731 = vpack.c.b16 %v3626, %v3621
  %v3732 = vpack.c.b16 %v3627, %v3622
  %v3733 = vpack.c.b16 %v3628, %v3623
  %v3734 = vpack.c.b16 %v3629, %v3624
  %v3735 = vpack.c.b16 %v3635, %v3630
  %v3736 = vpack.c.b16 %v3636, %v3631
  %v3737 = vpack.c.b16 %v3637, %v3632
  %v3738 = vpack.c.b16 %v3638, %v3633
  %v3739 = vpack.c.b16 %v3639, %v3634
  %v3740 = vpack.c.b16 %v3645, %v3640
  %v3741 = vpack.c.b16 %v3646, %v3641
  %v3742 = vpack.c.b16 %v3647, %v3642
  %v3743 = vpack.c.b16 %v3648, %v3643
  %v3744 = vpack.c.b16 %v3649, %v3644
  %v3836 = vsel %vm541, %v3204, 0
  %v3839 = vsel %vm548, %v3740, 0
  %v3842 = vsel %vm548, %v3741, 0
  %v3845 = vsel %vm548, %v3742, 0
  %v3848 = vsel %vm548, %v3743, 0
  %v3851 = vsel %vm548, %v3744, 0
  %3853 = vmatprep.subr.bf16.mxu0 %v3651
  %3854 = vmatpush1.bf16.msra.mxu0 %v3650
  %3855 = vmatprep.subr.bf16.mxu0 %v3656
  %3856 = vmatpush1.bf16.msra.mxu0 %v3655
  %3857 = vmatprep.subr.bf16.mxu0 %v3661
  %3858 = vmatpush1.bf16.msra.mxu0 %v3660
  %3859 = vmatprep.subr.bf16.mxu0 %v3666
  %3860 = vmatpush1.bf16.msra.mxu0 %v3665
  %3861 = vmatprep.subr.bf16.mxu0 %v3671
  %3862 = vmatpush1.bf16.msra.mxu0 %v3670
  %3863 = vmatprep.subr.bf16.mxu0 %v3676
  %3864 = vmatpush1.bf16.msra.mxu0 %v3675
  %3865 = vmatprep.subr.bf16.mxu0 %v3681
  %3866 = vmatpush1.bf16.msra.mxu0 %v3680
  %3867 = vmatprep.subr.bf16.mxu0 %v3686
  %3868 = vmatpush1.bf16.msra.mxu0 %v3685
  %3869 = vmatprep.subr.bf16.mxu0 %v3691
  %3870 = vmatpush1.bf16.msra.mxu0 %v3690
  %3871 = vmatprep.subr.bf16.mxu0 %v3696
  %3872 = vmatpush1.bf16.msra.mxu0 %v3695
  %3873 = vmatprep.subr.bf16.mxu0 %v3701
  %3874 = vmatpush1.bf16.msra.mxu0 %v3700
  %3875 = vmatprep.subr.bf16.mxu0 %v3706
  %3876 = vmatpush1.bf16.msra.mxu0 %v3705
  %3877 = vmatprep.subr.bf16.mxu0 %v3711
  %3878 = vmatpush1.bf16.msra.mxu0 %v3710
  %3879 = vmatprep.subr.bf16.mxu0 %v3716
  %3880 = vmatpush1.bf16.msra.mxu0 %v3715
  %3881 = vmatprep.subr.bf16.mxu0 %v3721
  %3882 = vmatpush1.bf16.msra.mxu0 %v3720
  %3883 = vmatprep.subr.bf16.mxu0 %v3726
  %3884 = vmatpush1.bf16.msra.mxu0 %v3725
  %3885 = vmatprep.mubr.bf16.mxu0 %v3203
  %3886 = vmatmul.mubr.bf16.gmra.mrb[0].mxu0 %v3202
  %v3887 = vpop.f32.mrb[0].mxu0
  %v3888 = vadd.f32 %v3324, %v3887
  %v3889 = vpop.f32.mrb[0].mxu0
  %v3890 = vadd.f32 %v3328, %v3889
  %v3891 = vpop.f32.mrb[0].mxu0
  %v3892 = vadd.f32 %v3324, %v3891
  %v3893 = vpop.f32.mrb[0].mxu0
  %v3894 = vadd.f32 %v3328, %v3893
  %3895 = vdwg.mxu0
  %3896 = vmatprep.subr.bf16.mxu0 %v3731
  %3897 = vmatpush1.bf16.msra.mxu0 %v3730
  %3898 = vmatprep.subr.bf16.mxu0 %v3736
  %3899 = vmatpush1.bf16.msra.mxu0 %v3735
  %3900 = vmatprep.subr.bf16.mxu0 %v3842
  %3901 = vmatpush1.bf16.msra.mxu0 %v3839
  %3902 = vmatprep.subr.bf16.mxu0 0
  %3903 = vmatpush1.bf16.msra.mxu0 0
  %3904 = vmatprep.subr.bf16.mxu0 0
  %3905 = vmatpush1.bf16.msra.mxu0 0
  %3906 = vmatprep.subr.bf16.mxu0 0
  %3907 = vmatpush1.bf16.msra.mxu0 0
  %3908 = vmatprep.subr.bf16.mxu0 0
  %3909 = vmatpush1.bf16.msra.mxu0 0
  %3910 = vmatprep.subr.bf16.mxu0 0
  %3911 = vmatpush1.bf16.msra.mxu0 0
  %3912 = vmatprep.subr.bf16.mxu0 0
  %3913 = vmatpush1.bf16.msra.mxu0 0
  %3914 = vmatprep.subr.bf16.mxu0 0
  %3915 = vmatpush1.bf16.msra.mxu0 0
  %3916 = vmatprep.subr.bf16.mxu0 0
  %3917 = vmatpush1.bf16.msra.mxu0 0
  %3918 = vmatprep.subr.bf16.mxu0 0
  %3919 = vmatpush1.bf16.msra.mxu0 0
  %3920 = vmatprep.subr.bf16.mxu0 0
  %3921 = vmatpush1.bf16.msra.mxu0 0
  %3922 = vmatprep.subr.bf16.mxu0 0
  %3923 = vmatpush1.bf16.msra.mxu0 0
  %3924 = vmatprep.subr.bf16.mxu0 0
  %3925 = vmatpush1.bf16.msra.mxu0 0
  %3926 = vmatprep.subr.bf16.mxu0 0
  %3927 = vmatpush1.bf16.msra.mxu0 0
  %3928 = vmatprep.mubr.bf16.mxu0 0
  %3929 = vmatmul.mubr.bf16.gmra.mrb[0].mxu0 %v3836
  %v3930 = vpop.f32.mrb[0].mxu0
  %v3931 = vadd.f32 %v3888, %v3930
  %v3932 = vpop.f32.mrb[0].mxu0
  %v3933 = vadd.f32 %v3890, %v3932
  %v3934 = vpop.f32.mrb[0].mxu0
  %v3935 = vadd.f32 %v3892, %v3934
  %v3936 = vpop.f32.mrb[0].mxu0
  %v3937 = vadd.f32 %v3894, %v3936
  %3938 = vdwg.mxu0
  %3939 = vmatprep.subr.bf16.mxu0 %v3653
  %3940 = vmatpush1.bf16.msra.mxu0 %v3652
  %3941 = vmatprep.subr.bf16.mxu0 %v3658
  %3942 = vmatpush1.bf16.msra.mxu0 %v3657
  %3943 = vmatprep.subr.bf16.mxu0 %v3663
  %3944 = vmatpush1.bf16.msra.mxu0 %v3662
  %3945 = vmatprep.subr.bf16.mxu0 %v3668
  %3946 = vmatpush1.bf16.msra.mxu0 %v3667
  %3947 = vmatprep.subr.bf16.mxu0 %v3673
  %3948 = vmatpush1.bf16.msra.mxu0 %v3672
  %3949 = vmatprep.subr.bf16.mxu0 %v3678
  %3950 = vmatpush1.bf16.msra.mxu0 %v3677
  %3951 = vmatprep.subr.bf16.mxu0 %v3683
  %3952 = vmatpush1.bf16.msra.mxu0 %v3682
  %3953 = vmatprep.subr.bf16.mxu0 %v3688
  %3954 = vmatpush1.bf16.msra.mxu0 %v3687
  %3955 = vmatprep.subr.bf16.mxu0 %v3693
  %3956 = vmatpush1.bf16.msra.mxu0 %v3692
  %3957 = vmatprep.subr.bf16.mxu0 %v3698
  %3958 = vmatpush1.bf16.msra.mxu0 %v3697
  %3959 = vmatprep.subr.bf16.mxu0 %v3703
  %3960 = vmatpush1.bf16.msra.mxu0 %v3702
  %3961 = vmatprep.subr.bf16.mxu0 %v3708
  %3962 = vmatpush1.bf16.msra.mxu0 %v3707
  %3963 = vmatprep.subr.bf16.mxu0 %v3713
  %3964 = vmatpush1.bf16.msra.mxu0 %v3712
  %3965 = vmatprep.subr.bf16.mxu0 %v3718
  %3966 = vmatpush1.bf16.msra.mxu0 %v3717
  %3967 = vmatprep.subr.bf16.mxu0 %v3723
  %3968 = vmatpush1.bf16.msra.mxu0 %v3722
  %3969 = vmatprep.subr.bf16.mxu0 %v3728
  %3970 = vmatpush1.bf16.msra.mxu0 %v3727
  %3971 = vmatprep.mubr.bf16.mxu0 %v3203
  %3972 = vmatmul.mubr.bf16.gmra.mrb[0].mxu0 %v3202
  %v3973 = vpop.f32.mrb[0].mxu0
  %v3974 = vadd.f32 %v3332, %v3973
  %v3975 = vpop.f32.mrb[0].mxu0
  %v3976 = vadd.f32 %v3336, %v3975
  %v3977 = vpop.f32.mrb[0].mxu0
  %v3978 = vadd.f32 %v3332, %v3977
  %v3979 = vpop.f32.mrb[0].mxu0
  %v3980 = vadd.f32 %v3336, %v3979
  %3981 = vdwg.mxu0
  %3982 = vmatprep.subr.bf16.mxu0 %v3733
  %3983 = vmatpush1.bf16.msra.mxu0 %v3732
  %3984 = vmatprep.subr.bf16.mxu0 %v3738
  %3985 = vmatpush1.bf16.msra.mxu0 %v3737
  %3986 = vmatprep.subr.bf16.mxu0 %v3848
  %3987 = vmatpush1.bf16.msra.mxu0 %v3845
  %3988 = vmatprep.subr.bf16.mxu0 0
  %3989 = vmatpush1.bf16.msra.mxu0 0
  %3990 = vmatprep.subr.bf16.mxu0 0
  %3991 = vmatpush1.bf16.msra.mxu0 0
  %3992 = vmatprep.subr.bf16.mxu0 0
  %3993 = vmatpush1.bf16.msra.mxu0 0
  %3994 = vmatprep.subr.bf16.mxu0 0
  %3995 = vmatpush1.bf16.msra.mxu0 0
  %3996 = vmatprep.subr.bf16.mxu0 0
  %3997 = vmatpush1.bf16.msra.mxu0 0
  %3998 = vmatprep.subr.bf16.mxu0 0
  %3999 = vmatpush1.bf16.msra.mxu0 0
  %4000 = vmatprep.subr.bf16.mxu0 0
  %4001 = vmatpush1.bf16.msra.mxu0 0
  %4002 = vmatprep.subr.bf16.mxu0 0
  %4003 = vmatpush1.bf16.msra.mxu0 0
  %4004 = vmatprep.subr.bf16.mxu0 0
  %4005 = vmatpush1.bf16.msra.mxu0 0
  %4006 = vmatprep.subr.bf16.mxu0 0
  %4007 = vmatpush1.bf16.msra.mxu0 0
  %4008 = vmatprep.subr.bf16.mxu0 0
  %4009 = vmatpush1.bf16.msra.mxu0 0
  %4010 = vmatprep.subr.bf16.mxu0 0
  %4011 = vmatpush1.bf16.msra.mxu0 0
  %4012 = vmatprep.subr.bf16.mxu0 0
  %4013 = vmatpush1.bf16.msra.mxu0 0
  %4014 = vmatprep.mubr.bf16.mxu0 0
  %4015 = vmatmul.mubr.bf16.gmra.mrb[0].mxu0 %v3836
  %v4016 = vpop.f32.mrb[0].mxu0
  %v4017 = vadd.f32 %v3974, %v4016
  %v4018 = vpop.f32.mrb[0].mxu0
  %v4019 = vadd.f32 %v3976, %v4018
  %v4020 = vpop.f32.mrb[0].mxu0
  %v4021 = vadd.f32 %v3978, %v4020
  %v4022 = vpop.f32.mrb[0].mxu0
  %v4023 = vadd.f32 %v3980, %v4022
  %4024 = vdwg.mxu0
  %4025 = vmatprep.subr.bf16.mxu0 0
  %4026 = vmatpush1.bf16.msra.mxu0 %v3654
  %4027 = vmatprep.subr.bf16.mxu0 0
  %4028 = vmatpush1.bf16.msra.mxu0 %v3659
  %4029 = vmatprep.subr.bf16.mxu0 0
  %4030 = vmatpush1.bf16.msra.mxu0 %v3664
  %4031 = vmatprep.subr.bf16.mxu0 0
  %4032 = vmatpush1.bf16.msra.mxu0 %v3669
  %4033 = vmatprep.subr.bf16.mxu0 0
  %4034 = vmatpush1.bf16.msra.mxu0 %v3674
  %4035 = vmatprep.subr.bf16.mxu0 0
  %4036 = vmatpush1.bf16.msra.mxu0 %v3679
  %4037 = vmatprep.subr.bf16.mxu0 0
  %4038 = vmatpush1.bf16.msra.mxu0 %v3684
  %4039 = vmatprep.subr.bf16.mxu0 0
  %4040 = vmatpush1.bf16.msra.mxu0 %v3689
  %4041 = vmatprep.subr.bf16.mxu0 0
  %4042 = vmatpush1.bf16.msra.mxu0 %v3694
  %4043 = vmatprep.subr.bf16.mxu0 0
  %4044 = vmatpush1.bf16.msra.mxu0 %v3699
  %4045 = vmatprep.subr.bf16.mxu0 0
  %4046 = vmatpush1.bf16.msra.mxu0 %v3704
  %4047 = vmatprep.subr.bf16.mxu0 0
  %4048 = vmatpush1.bf16.msra.mxu0 %v3709
  %4049 = vmatprep.subr.bf16.mxu0 0
  %4050 = vmatpush1.bf16.msra.mxu0 %v3714
  %4051 = vmatprep.subr.bf16.mxu0 0
  %4052 = vmatpush1.bf16.msra.mxu0 %v3719
  %4053 = vmatprep.subr.bf16.mxu0 0
  %4054 = vmatpush1.bf16.msra.mxu0 %v3724
  %4055 = vmatprep.subr.bf16.mxu0 0
  %4056 = vmatpush1.bf16.msra.mxu0 %v3729
  %4057 = vmatprep.mubr.bf16.mxu0 %v3203
  %4058 = vmatmul.mubr.bf16.gmra.mrb[0].mxu0 %v3202
  %v4059 = vpop.f32.mrb[0].mxu0
  %v4060 = vadd.f32 %v3340, %v4059
  %v4061 = vpop.f32.mrb[0].mxu0
  %v4062 = vpop.f32.mrb[0].mxu0
  %v4063 = vadd.f32 %v3340, %v4062
  %v4064 = vpop.f32.mrb[0].mxu0
  %4065 = vdwg.mxu0
  %4066 = vmatprep.subr.bf16.mxu0 0
  %4067 = vmatpush1.bf16.msra.mxu0 %v3734
  %4068 = vmatprep.subr.bf16.mxu0 0
  %4069 = vmatpush1.bf16.msra.mxu0 %v3739
  %4070 = vmatprep.subr.bf16.mxu0 0
  %4071 = vmatpush1.bf16.msra.mxu0 %v3851
  %4072 = vmatprep.subr.bf16.mxu0 0
  %4073 = vmatpush1.bf16.msra.mxu0 0
  %4074 = vmatprep.subr.bf16.mxu0 0
  %4075 = vmatpush1.bf16.msra.mxu0 0
  %4076 = vmatprep.subr.bf16.mxu0 0
  %4077 = vmatpush1.bf16.msra.mxu0 0
  %4078 = vmatprep.subr.bf16.mxu0 0
  %4079 = vmatpush1.bf16.msra.mxu0 0
  %4080 = vmatprep.subr.bf16.mxu0 0
  %4081 = vmatpush1.bf16.msra.mxu0 0
  %4082 = vmatprep.subr.bf16.mxu0 0
  %4083 = vmatpush1.bf16.msra.mxu0 0
  %4084 = vmatprep.subr.bf16.mxu0 0
  %4085 = vmatpush1.bf16.msra.mxu0 0
  %4086 = vmatprep.subr.bf16.mxu0 0
  %4087 = vmatpush1.bf16.msra.mxu0 0
  %4088 = vmatprep.subr.bf16.mxu0 0
  %4089 = vmatpush1.bf16.msra.mxu0 0
  %4090 = vmatprep.subr.bf16.mxu0 0
  %4091 = vmatpush1.bf16.msra.mxu0 0
  %4092 = vmatprep.subr.bf16.mxu0 0
  %4093 = vmatpush1.bf16.msra.mxu0 0
  %4094 = vmatprep.subr.bf16.mxu0 0
  %4095 = vmatpush1.bf16.msra.mxu0 0
  %4096 = vmatprep.subr.bf16.mxu0 0
  %4097 = vmatpush1.bf16.msra.mxu0 0
  %4098 = vmatprep.mubr.bf16.mxu0 0
  %4099 = vmatmul.mubr.bf16.gmra.mrb[0].mxu0 %v3836
  %v4100 = vpop.f32.mrb[0].mxu0
  %v4101 = vadd.f32 %v4060, %v4100
  %v4102 = vpop.f32.mrb[0].mxu0
  %v4103 = vpop.f32.mrb[0].mxu0
  %v4104 = vadd.f32 %v4063, %v4103
  %v4105 = vpop.f32.mrb[0].mxu0
  %4106 = vdwg.mxu0
  %4107 = vst [vmem:[%s71] sm:$0xff] %v3931
  %4108 = vst [vmem:[%s71 + $0x8] sm:$0xff] %v3933
  %4109 = vst [vmem:[%s71 + $0x10] sm:$0xff] %v4017
  %4110 = vst [vmem:[%s71 + $0x18] sm:$0xff] %v4019
  %vm4111 = vcmask 719872
  %4112 = vst.msk [vmem:[%s71 + $0x20] sm:$0xff] %vm4111, %v4101
  %4113 = vst [vmem:[%s71 + $0x28] sm:$0xff] %v3935
  %4114 = vst [vmem:[%s71 + $0x30] sm:$0xff] %v3937
  %4115 = vst [vmem:[%s71 + $0x38] sm:$0xff] %v4021
  %4116 = vst [vmem:[%s71 + $0x40] sm:$0xff] %v4023
  %4117 = vst.msk [vmem:[%s71 + $0x48] sm:$0xff] %vm4111, %v4104
  // Predicated region
  $region142: #{pairs_autoencoder_forward.1} parent=0 // pred_check
    _
  $region143: #{pairs_autoencoder_forward.1} parent=0 // pred_check_branch
    %4119 = sbr.rel (0) target = $region145
  $region144: #{pairs_autoencoder_forward.1} parent=0 // pred_region
    _
  $region145: #{pairs_autoencoder_forward.1} parent=0 // pred_fallthru
    _
  // Predicated region
  $region146: #{pairs_autoencoder_forward.1} parent=0 // pred_check
    _
  $region147: #{pairs_autoencoder_forward.1} parent=0 // pred_check_branch
    %4121 = sbr.rel (0) target = $region149
  $region148: #{pairs_autoencoder_forward.1} parent=0 // pred_region
    _
  $region149: #{pairs_autoencoder_forward.1} parent=0 // pred_fallthru
    _

</llo_original>
